<compile_context>
chip_gen: v6e
topology: v6e:2x2x1
jax: 0.10.0
libtpu: 0.0.40
codegen_flags: <defaults>
</compile_context>

<pallas_src>
import functools

import jax
import jax.numpy as jnp
from jax import lax
from jax.experimental import pallas as pl
from jax.experimental.pallas import tpu as pltpu

MATMUL_DTYPE = jnp.bfloat16   # MXU operand dtype; accumulation stays float32


# ----------------------------------------------------------------------------
# In-kernel helpers (traced inside the Pallas kernel)
# ----------------------------------------------------------------------------
def _layernorm(x, g, b, eps):
    mu = jnp.mean(x, axis=-1, keepdims=True)
    var = jnp.mean((x - mu) ** 2, axis=-1, keepdims=True)
    return (x - mu) * lax.rsqrt(var + eps) * g + b


def _gelu(x):
    # TODO(synk): torch.nn.GELU defaults to the exact erf form; the tanh
    # approximation is used for robust TPU lowering (difference ~1e-3).
    return 0.5 * x * (1.0 + jnp.tanh(0.7978845608028654 * (x + 0.044715 * x * x * x)))


def _mm(a, b):
    # bf16 operands -> MXU, f32 accumulation.
    return jnp.dot(a.astype(MATMUL_DTYPE), b.astype(MATMUL_DTYPE),
                   preferred_element_type=jnp.float32)


# ----------------------------------------------------------------------------
# Fused per-image kernel: patch-embed + all encoder layers + class head.
# One grid step == one image (grid=(B,), "parallel").
# ----------------------------------------------------------------------------
def _vit_kernel(patches_ref, tok_add_ref, kbias_ref, patch_w_ref,
                ln1g_ref, ln1b_ref, wqkv_ref, bqkv_ref, wo_ref, bo_ref,
                ln2g_ref, ln2b_ref, w1_ref, b1_ref, w2_ref, b2_ref,
                hg_ref, hb_ref, hw_ref, hbias_ref,
                o_ref, *, num_layers, num_heads, S_pad, D, eps):
    H = num_heads
    dh = D // H
    scale = 1.0 / (dh ** 0.5)          # static Python scalar

    # Patch embedding.  CLS-slot and padding rows of `patches` are zero, so the
    # matmul contributes 0 there; tok_add supplies (cls + pos0) for the CLS
    # row, (pos + conv-bias) for patch rows and 0 for padding rows.
    x = _mm(patches_ref[...], patch_w_ref[...]) + tok_add_ref[...]   # [S, D] f32

    # Additive key mask: 0 for real tokens, -1e30 for padded key columns.
    kbias = kbias_ref[...].reshape(1, 1, S_pad)                      # [1,1,S]

    # Static unroll over layers: constant-offset reads of stacked weights and
    # full scheduler visibility across both iterations.
    for l in range(num_layers):
        # ---------------- pre-LN multi-head self-attention -----------------
        h1 = _layernorm(x, ln1g_ref[l], ln1b_ref[l], eps)
        # Fused QKV matmul, single bf16 cast per layer.
        qkv = (_mm(h1, wqkv_ref[l]) + bqkv_ref[l]).astype(MATMUL_DTYPE)  # [S,3D]
        q = qkv[:, 0 * D:1 * D].reshape(S_pad, H, dh)
        k = qkv[:, 1 * D:2 * D].reshape(S_pad, H, dh)
        v = qkv[:, 2 * D:3 * D].reshape(S_pad, H, dh)

        # Head-batched attention (no per-head lane slicing / concat).
        s = jnp.einsum('qhd,khd->hqk', q, k,
                       preferred_element_type=jnp.float32) * scale + kbias
        s = s - jnp.max(s, axis=-1, keepdims=True)
        p = jnp.exp(s)
        p = p * pl.reciprocal(jnp.sum(p, axis=-1, keepdims=True), approx=True)
        attn = jnp.einsum('hqk,khd->qhd', p.astype(MATMUL_DTYPE), v,
                          preferred_element_type=jnp.float32)        # [S,H,dh]
        attn = attn.reshape(S_pad, D)
        x = x + _mm(attn, wo_ref[l]) + bo_ref[l]                     # residual

        # ----------------------------- pre-LN MLP ---------------------------
        h2 = _layernorm(x, ln2g_ref[l], ln2b_ref[l], eps)
        m = _gelu(_mm(h2, w1_ref[l]) + b1_ref[l])
        x = x + _mm(m, w2_ref[l]) + b2_ref[l]                        # residual

    # class_head = LayerNorm + Linear on the CLS feature (row 0 of the image).
    cls = _layernorm(x[0:1, :], hg_ref[...], hb_ref[...], eps)       # [1, D]
    logits = _mm(cls, hw_ref[...]) + hbias_ref[...]                  # [1, 128]
    # Tile-exact (8, 128) lane-dense store; wrapper keeps row 0.
    o_ref[...] = jnp.broadcast_to(logits, o_ref.shape)


# ----------------------------------------------------------------------------
# BlockSpec helpers for the batch grid
# ----------------------------------------------------------------------------
def _batch_spec(shape):
    nd = len(shape)
    return pl.BlockSpec((None,) + tuple(shape[1:]),
                        lambda b, _nd=nd: (b,) + (0,) * (_nd - 1))


def _rep_spec(shape):
    nd = len(shape)
    return pl.BlockSpec(tuple(shape), lambda b, _nd=nd: (0,) * _nd)


# ----------------------------------------------------------------------------
# Wrapper: layout glue + single pallas_call with a parallel batch grid
# ----------------------------------------------------------------------------
def vit_forward(images, kp, *, patch, num_heads, eps, num_classes):
    # images: [B, C, H, W]  (NCHW, like the PyTorch module)
    B, C, H, W = images.shape
    P = patch
    N = (H // P) * (W // P)
    D = kp["patch_w"].shape[1]
    S_pad = kp["tok_add"].shape[0]
    L = kp["wqkv"].shape[0]
    Dm = kp["w1"].shape[2]
    ncls_pad = kp["head_w"].shape[1]
    patch_dim = C * P * P

    # TODO(synk): the NCHW->patch reorder stays as tiny XLA glue; an in-kernel
    # 6-D transpose does not lower cleanly in Mosaic.
    patches = images.reshape(B, C, H // P, P, W // P, P)
    patches = patches.transpose(0, 2, 4, 1, 3, 5).reshape(B, N, patch_dim)
    # Row 0 = CLS slot, trailing rows = sublane padding; both zero (no scatter).
    patches_pad = jnp.pad(patches.astype(MATMUL_DTYPE),
                          ((0, 0), (1, S_pad - 1 - N), (0, 0)))

    inputs = [patches_pad, kp["tok_add"], kp["kbias"], kp["patch_w"],
              kp["ln1_g"], kp["ln1_b"], kp["wqkv"], kp["bqkv"],
              kp["wo"], kp["bo"], kp["ln2_g"], kp["ln2_b"],
              kp["w1"], kp["b1"], kp["w2"], kp["b2"],
              kp["head_ln_g"], kp["head_ln_b"], kp["head_w"], kp["head_b"]]

    # Only the patches / output are indexed by the batch grid axis; every weight
    # block index is constant so it is DMA'd into VMEM once and not re-fetched.
    # TODO(synk): for real ViT sizes (e.g. D=768, L=12), switch the stacked
    # [L, ...] weights to a layer grid axis with per-layer BlockSpec streaming
    # so VMEM stays bounded (v7x has 64 MiB); fine at this toy size (<1 MiB).
    in_specs = [_batch_spec(patches_pad.shape)] + [_rep_spec(a.shape) for a in inputs[1:]]
    out_specs = pl.BlockSpec((None, 8, ncls_pad), lambda b: (b, 0, 0))

    # Advisory cost estimate for the whole call.
    per_img_flops = (2 * S_pad * patch_dim * D
                     + L * (2 * S_pad * D * 3 * D      # fused QKV
                            + 4 * S_pad * S_pad * D    # QK^T + PV
                            + 2 * S_pad * D * D        # out proj
                            + 4 * S_pad * D * Dm)      # MLP
                     + 2 * D * ncls_pad)
    cost = pl.CostEstimate(
        flops=B * per_img_flops,
        transcendentals=B * L * (num_heads * S_pad * S_pad + S_pad * Dm),
        bytes_accessed=sum(int(a.size) * a.dtype.itemsize for a in inputs)
                       + B * 8 * ncls_pad * 4)

    logits_pad = pl.pallas_call(
        functools.partial(_vit_kernel, num_layers=L, num_heads=num_heads,
                          S_pad=S_pad, D=D, eps=eps),
        grid=(B,),
        in_specs=in_specs,
        out_specs=out_specs,
        out_shape=jax.ShapeDtypeStruct((B, 8, ncls_pad), jnp.float32),
        compiler_params=pltpu.CompilerParams(
            dimension_semantics=("parallel",)),   # both TCs on v7x; serial on v5e/v6e
        cost_estimate=cost,
    )(*inputs)
    return logits_pad[:, 0, :num_classes]


# ----------------------------------------------------------------------------
# Parameter packing: stack layers, fuse QKV, pad head lanes, fold cls/pos/bias
# ----------------------------------------------------------------------------
def pack_params(p, *, num_patches, num_classes, lane=128):
    f32 = jnp.float32
    md = MATMUL_DTYPE
    D = p["patch_w"].shape[1]
    S = num_patches + 1
    S_pad = ((S + 15) // 16) * 16       # bf16 sublane granule (17 -> 32)

    # Additive token term: row0 = cls + pos0 ; rows 1..S-1 = pos + conv bias ; pad = 0.
    tok_add = jnp.zeros((S_pad, D), f32)
    tok_add = tok_add.at[0, :].set(p["cls"][0, 0] + p["pos"][0, 0])
    tok_add = tok_add.at[1:S, :].set(p["pos"][0, 1:S] + p["patch_b"][0])

    # Key-mask bias for padded tokens.
    kbias = jnp.where(jnp.arange(S_pad) < S, 0.0, -1e30).astype(f32).reshape(1, S_pad)

    # Lane-dense classification head (pad num_classes -> multiple of 128).
    ncls_pad = ((num_classes + lane - 1) // lane) * lane
    head_w = jnp.zeros((D, ncls_pad), f32).at[:, :num_classes].set(p["head_w"])
    head_b = jnp.zeros((1, ncls_pad), f32).at[:, :num_classes].set(p["head_b"])

    stk = lambda name: jnp.stack([lp[name] for lp in p["layers"]], axis=0)
    wqkv = jnp.stack([jnp.concatenate([lp["wq"], lp["wk"], lp["wv"]], axis=1)
                      for lp in p["layers"]], axis=0)
    bqkv = jnp.stack([jnp.concatenate([lp["bq"], lp["bk"], lp["bv"]], axis=1)
                      for lp in p["layers"]], axis=0)

    return {
        "patch_w": p["patch_w"].astype(md),
        "tok_add": tok_add,
        "kbias": kbias,
        "ln1_g": stk("ln1_g"), "ln1_b": stk("ln1_b"),
        "wqkv": wqkv.astype(md), "bqkv": bqkv,
        "wo": stk("wo").astype(md), "bo": stk("bo"),
        "ln2_g": stk("ln2_g"), "ln2_b": stk("ln2_b"),
        "w1": stk("w1").astype(md), "b1": stk("b1"),
        "w2": stk("w2").astype(md), "b2": stk("b2"),
        "head_ln_g": p["head_ln_g"], "head_ln_b": p["head_ln_b"],
        "head_w": head_w.astype(md), "head_b": head_b,
    }


# ----------------------------------------------------------------------------
# Deterministic synthetic parameter init (PyTorch-layout weights)
# ----------------------------------------------------------------------------
def init_params(key, *, C, P, D, num_layers, Dm, num_classes, num_patches):
    def nrm(k, shape, scale=0.02):
        return scale * jax.random.normal(k, shape, jnp.float32)

    keys = jax.random.split(key, 4 + num_layers)
    patch_dim = C * P * P
    params = {
        "patch_w": nrm(keys[0], (patch_dim, D)),
        "patch_b": jnp.zeros((1, D), jnp.float32),
        "cls": nrm(keys[1], (1, 1, D)),
        "pos": nrm(keys[2], (1, num_patches + 1, D)),
        "head_ln_g": jnp.ones((1, D), jnp.float32),
        "head_ln_b": jnp.zeros((1, D), jnp.float32),
        "head_w": nrm(keys[3], (D, num_classes)),
        "head_b": jnp.zeros((1, num_classes), jnp.float32),
        "layers": [],
    }
    for li in range(num_layers):
        lk = jax.random.split(keys[4 + li], 6)
        params["layers"].append({
            "ln1_g": jnp.ones((1, D), jnp.float32),
            "ln1_b": jnp.zeros((1, D), jnp.float32),
            "wq": nrm(lk[0], (D, D)), "bq": jnp.zeros((1, D), jnp.float32),
            "wk": nrm(lk[1], (D, D)), "bk": jnp.zeros((1, D), jnp.float32),
            "wv": nrm(lk[2], (D, D)), "bv": jnp.zeros((1, D), jnp.float32),
            "wo": nrm(lk[3], (D, D)), "bo": jnp.zeros((1, D), jnp.float32),
            "ln2_g": jnp.ones((1, D), jnp.float32),
            "ln2_b": jnp.zeros((1, D), jnp.float32),
            "w1": nrm(lk[4], (D, Dm)), "b1": jnp.zeros((1, Dm), jnp.float32),
            "w2": nrm(lk[5], (Dm, D)), "b2": jnp.zeros((1, D), jnp.float32),
        })
    return params


if __name__ == "__main__":
    # Small ViT config consistent with the module's forward:
    # image 16x16, patch 4 -> 16 patches (+CLS = 17 tokens, padded to 32),
    # hidden 32, 4 heads, 2 layers, MLP 64, 10 classes (padded to 128 lanes).
    # Note (v6e/v7x): all matmuls here are tiny vs. the 256-wide MXU; the cheap
    # way to raise utilization is growing B (more rows / grid steps), not
    # compute-side tricks.
    B, C, IMG, P = 2, 3, 16, 4
    D, HEADS, LAYERS, DM, NCLS = 32, 4, 2, 64, 10
    EPS = 1e-6
    N_PATCHES = (IMG // P) * (IMG // P)

    root = jax.random.PRNGKey(0)
    k_param, k_img = jax.random.split(root)
    params = init_params(k_param, C=C, P=P, D=D, num_layers=LAYERS, Dm=DM,
                         num_classes=NCLS, num_patches=N_PATCHES)
    packed = pack_params(params, num_patches=N_PATCHES, num_classes=NCLS)
    images = jax.random.normal(k_img, (B, C, IMG, IMG), jnp.float32)

    fwd = jax.jit(functools.partial(vit_forward, patch=P, num_heads=HEADS,
                                    eps=EPS, num_classes=NCLS))
    logits = jax.block_until_ready(fwd(images, packed))
    assert logits.shape == (B, NCLS), logits.shape
    assert bool(jnp.all(jnp.isfinite(logits)))
    # TODO(synk): optional branches (interm_features_fc head, text decoder /
    # mlm head, exclusion loss) are config-gated in the PyTorch module and are
    # not active in the class_head configuration implemented here.
    print("KERNEL_OK")
</pallas_src>

<mosaic_0001>
module attributes {stable_mosaic.version = 11 : i64} {
  func.func @_vit_kernel(%arg0: i32, %arg1: memref<1x32x48xbf16, #tpu.memory_space<vmem>>, %arg2: memref<32x32xf32, #tpu.memory_space<vmem>>, %arg3: memref<1x32xf32, #tpu.memory_space<vmem>>, %arg4: memref<48x32xbf16, #tpu.memory_space<vmem>>, %arg5: memref<2x1x32xf32, #tpu.memory_space<vmem>>, %arg6: memref<2x1x32xf32, #tpu.memory_space<vmem>>, %arg7: memref<2x32x96xbf16, #tpu.memory_space<vmem>>, %arg8: memref<2x1x96xf32, #tpu.memory_space<vmem>>, %arg9: memref<2x32x32xbf16, #tpu.memory_space<vmem>>, %arg10: memref<2x1x32xf32, #tpu.memory_space<vmem>>, %arg11: memref<2x1x32xf32, #tpu.memory_space<vmem>>, %arg12: memref<2x1x32xf32, #tpu.memory_space<vmem>>, %arg13: memref<2x32x64xbf16, #tpu.memory_space<vmem>>, %arg14: memref<2x1x64xf32, #tpu.memory_space<vmem>>, %arg15: memref<2x64x32xbf16, #tpu.memory_space<vmem>>, %arg16: memref<2x1x32xf32, #tpu.memory_space<vmem>>, %arg17: memref<1x32xf32, #tpu.memory_space<vmem>>, %arg18: memref<1x32xf32, #tpu.memory_space<vmem>>, %arg19: memref<32x128xbf16, #tpu.memory_space<vmem>>, %arg20: memref<1x128xf32, #tpu.memory_space<vmem>>, %arg21: memref<1x8x128xf32, #tpu.memory_space<vmem>>) attributes {dimension_semantics = [#tpu.dimension_semantics<parallel>], iteration_bounds = array<i64: 2>, scalar_prefetch = 0 : i64, scratch_operands = 0 : i64, tpu.core_type = #tpu.core_type<tc>, window_params = [{transform_indices = @transform_0, window_bounds = array<i64: 1, 32, 48>}, {pipeline_mode = #tpu.pipeline_mode<synchronous>, transform_indices = @transform_1, window_bounds = array<i64: 32, 32>}, {pipeline_mode = #tpu.pipeline_mode<synchronous>, transform_indices = @transform_2, window_bounds = array<i64: 1, 32>}, {pipeline_mode = #tpu.pipeline_mode<synchronous>, transform_indices = @transform_3, window_bounds = array<i64: 48, 32>}, {pipeline_mode = #tpu.pipeline_mode<synchronous>, transform_indices = @transform_4, window_bounds = array<i64: 2, 1, 32>}, {pipeline_mode = #tpu.pipeline_mode<synchronous>, transform_indices = @transform_5, window_bounds = array<i64: 2, 1, 32>}, {pipeline_mode = #tpu.pipeline_mode<synchronous>, transform_indices = @transform_6, window_bounds = array<i64: 2, 32, 96>}, {pipeline_mode = #tpu.pipeline_mode<synchronous>, transform_indices = @transform_7, window_bounds = array<i64: 2, 1, 96>}, {pipeline_mode = #tpu.pipeline_mode<synchronous>, transform_indices = @transform_8, window_bounds = array<i64: 2, 32, 32>}, {pipeline_mode = #tpu.pipeline_mode<synchronous>, transform_indices = @transform_9, window_bounds = array<i64: 2, 1, 32>}, {pipeline_mode = #tpu.pipeline_mode<synchronous>, transform_indices = @transform_10, window_bounds = array<i64: 2, 1, 32>}, {pipeline_mode = #tpu.pipeline_mode<synchronous>, transform_indices = @transform_11, window_bounds = array<i64: 2, 1, 32>}, {pipeline_mode = #tpu.pipeline_mode<synchronous>, transform_indices = @transform_12, window_bounds = array<i64: 2, 32, 64>}, {pipeline_mode = #tpu.pipeline_mode<synchronous>, transform_indices = @transform_13, window_bounds = array<i64: 2, 1, 64>}, {pipeline_mode = #tpu.pipeline_mode<synchronous>, transform_indices = @transform_14, window_bounds = array<i64: 2, 64, 32>}, {pipeline_mode = #tpu.pipeline_mode<synchronous>, transform_indices = @transform_15, window_bounds = array<i64: 2, 1, 32>}, {pipeline_mode = #tpu.pipeline_mode<synchronous>, transform_indices = @transform_16, window_bounds = array<i64: 1, 32>}, {pipeline_mode = #tpu.pipeline_mode<synchronous>, transform_indices = @transform_17, window_bounds = array<i64: 1, 32>}, {pipeline_mode = #tpu.pipeline_mode<synchronous>, transform_indices = @transform_18, window_bounds = array<i64: 32, 128>}, {pipeline_mode = #tpu.pipeline_mode<synchronous>, transform_indices = @transform_19, window_bounds = array<i64: 1, 128>}, {transform_indices = @transform_20, window_bounds = array<i64: 1, 8, 128>}]} {
    %c0 = arith.constant 0 : index
    %c0_0 = arith.constant 0 : index
    %c0_1 = arith.constant 0 : index
    %0 = vector.load %arg1[%c0, %c0_0, %c0_1] : memref<1x32x48xbf16, #tpu.memory_space<vmem>>, vector<1x32x48xbf16>
    %1 = vector.shape_cast %0 : vector<1x32x48xbf16> to vector<32x48xbf16>
    %c0_2 = arith.constant 0 : index
    %c0_3 = arith.constant 0 : index
    %2 = vector.load %arg4[%c0_2, %c0_3] : memref<48x32xbf16, #tpu.memory_space<vmem>>, vector<48x32xbf16>
    %cst = arith.constant dense<0.000000e+00> : vector<32x32xf32>
    %3 = tpu.matmul %1, %2, %cst {dimension_numbers = #tpu.dot_dimension_numbers<[1], [0], [0], [1], [0, 0, 1, 1], [], []>} : vector<32x48xbf16>, vector<48x32xbf16>, vector<32x32xf32> -> vector<32x32xf32>
    %c0_4 = arith.constant 0 : index
    %c0_5 = arith.constant 0 : index
    %4 = vector.load %arg2[%c0_4, %c0_5] : memref<32x32xf32, #tpu.memory_space<vmem>>, vector<32x32xf32>
    %5 = arith.addf %3, %4 : vector<32x32xf32>
    %c0_6 = arith.constant 0 : index
    %c0_7 = arith.constant 0 : index
    %6 = vector.load %arg3[%c0_6, %c0_7] : memref<1x32xf32, #tpu.memory_space<vmem>>, vector<1x32xf32>
    %7 = vector.shape_cast %6 : vector<1x32xf32> to vector<1x1x32xf32>
    %c0_8 = arith.constant 0 : index
    %c0_9 = arith.constant 0 : index
    %c0_10 = arith.constant 0 : index
    %8 = vector.load %arg5[%c0_8, %c0_9, %c0_10] : memref<2x1x32xf32, #tpu.memory_space<vmem>>, vector<1x1x32xf32>
    %9 = vector.shape_cast %8 : vector<1x1x32xf32> to vector<1x32xf32>
    %c0_11 = arith.constant 0 : index
    %c0_12 = arith.constant 0 : index
    %c0_13 = arith.constant 0 : index
    %10 = vector.load %arg6[%c0_11, %c0_12, %c0_13] : memref<2x1x32xf32, #tpu.memory_space<vmem>>, vector<1x1x32xf32>
    %11 = vector.shape_cast %10 : vector<1x1x32xf32> to vector<1x32xf32>
    %cst_14 = arith.constant dense<0.000000e+00> : vector<32xf32>
    %12 = vector.multi_reduction <add>, %5, %cst_14 [1] : vector<32x32xf32> to vector<32xf32>
    %13 = vector.shape_cast %12 : vector<32xf32> to vector<32x1xf32>
    %cst_15 = arith.constant 3.200000e+01 : f32
    %14 = vector.broadcast %cst_15 : f32 to vector<32x1xf32>
    %15 = arith.divf %13, %14 : vector<32x1xf32>
    %16 = vector.broadcast %15 : vector<32x1xf32> to vector<32x32xf32>
    %17 = arith.subf %5, %16 : vector<32x32xf32>
    %18 = arith.mulf %17, %17 : vector<32x32xf32>
    %cst_16 = arith.constant dense<0.000000e+00> : vector<32xf32>
    %19 = vector.multi_reduction <add>, %18, %cst_16 [1] : vector<32x32xf32> to vector<32xf32>
    %20 = vector.shape_cast %19 : vector<32xf32> to vector<32x1xf32>
    %cst_17 = arith.constant 3.200000e+01 : f32
    %21 = vector.broadcast %cst_17 : f32 to vector<32x1xf32>
    %22 = arith.divf %20, %21 : vector<32x1xf32>
    %23 = vector.broadcast %15 : vector<32x1xf32> to vector<32x32xf32>
    %24 = arith.subf %5, %23 : vector<32x32xf32>
    %cst_18 = arith.constant 9.99999997E-7 : f32
    %25 = vector.broadcast %cst_18 : f32 to vector<32x1xf32>
    %26 = arith.addf %22, %25 : vector<32x1xf32>
    %27 = math.rsqrt %26 : vector<32x1xf32>
    %28 = vector.broadcast %27 : vector<32x1xf32> to vector<32x32xf32>
    %29 = arith.mulf %24, %28 : vector<32x32xf32>
    %30 = vector.broadcast %9 : vector<1x32xf32> to vector<32x32xf32>
    %31 = arith.mulf %29, %30 : vector<32x32xf32>
    %32 = vector.broadcast %11 : vector<1x32xf32> to vector<32x32xf32>
    %33 = arith.addf %31, %32 : vector<32x32xf32>
    %c0_19 = arith.constant 0 : index
    %c0_20 = arith.constant 0 : index
    %c0_21 = arith.constant 0 : index
    %34 = vector.load %arg7[%c0_19, %c0_20, %c0_21] : memref<2x32x96xbf16, #tpu.memory_space<vmem>>, vector<1x32x96xbf16>
    %35 = vector.shape_cast %34 : vector<1x32x96xbf16> to vector<32x96xbf16>
    %36 = arith.truncf %33 : vector<32x32xf32> to vector<32x32xbf16>
    %cst_22 = arith.constant dense<0.000000e+00> : vector<32x96xf32>
    %37 = tpu.matmul %36, %35, %cst_22 {dimension_numbers = #tpu.dot_dimension_numbers<[1], [0], [0], [1], [0, 0, 1, 1], [], []>} : vector<32x32xbf16>, vector<32x96xbf16>, vector<32x96xf32> -> vector<32x96xf32>
    %c0_23 = arith.constant 0 : index
    %c0_24 = arith.constant 0 : index
    %c0_25 = arith.constant 0 : index
    %38 = vector.load %arg8[%c0_23, %c0_24, %c0_25] : memref<2x1x96xf32, #tpu.memory_space<vmem>>, vector<1x1x96xf32>
    %39 = vector.shape_cast %38 : vector<1x1x96xf32> to vector<1x96xf32>
    %40 = vector.broadcast %39 : vector<1x96xf32> to vector<32x96xf32>
    %41 = arith.addf %37, %40 : vector<32x96xf32>
    %42 = arith.truncf %41 : vector<32x96xf32> to vector<32x96xbf16>
    %43 = vector.extract_strided_slice %42 {offsets = [0, 0], sizes = [32, 32], strides = [1, 1]} : vector<32x96xbf16> to vector<32x32xbf16>
    %44 = vector.shape_cast %43 : vector<32x32xbf16> to vector<32x4x8xbf16>
    %45 = vector.extract_strided_slice %42 {offsets = [0, 32], sizes = [32, 32], strides = [1, 1]} : vector<32x96xbf16> to vector<32x32xbf16>
    %46 = vector.shape_cast %45 : vector<32x32xbf16> to vector<32x4x8xbf16>
    %47 = vector.extract_strided_slice %42 {offsets = [0, 64], sizes = [32, 32], strides = [1, 1]} : vector<32x96xbf16> to vector<32x32xbf16>
    %48 = vector.shape_cast %47 : vector<32x32xbf16> to vector<32x4x8xbf16>
    "tpu.trace_start"() <{level = 10 : i32, message = "qhd,khd->hqk"}> : () -> ()
    %cst_26 = arith.constant dense<0.000000e+00> : vector<4x32x32xf32>
    %49 = tpu.matmul %44, %46, %cst_26 {dimension_numbers = #tpu.dot_dimension_numbers<[2], [2], [0], [0], [0, 1, 0, 0, 1, 0], [1], [1]>} : vector<32x4x8xbf16>, vector<32x4x8xbf16>, vector<4x32x32xf32> -> vector<4x32x32xf32>
    "tpu.trace_stop"() : () -> ()
    %cst_27 = arith.constant 0.353553385 : f32
    %50 = vector.broadcast %cst_27 : f32 to vector<4x32x32xf32>
    %51 = arith.mulf %49, %50 : vector<4x32x32xf32>
    %52 = vector.broadcast %7 : vector<1x1x32xf32> to vector<4x32x32xf32>
    %53 = arith.addf %51, %52 : vector<4x32x32xf32>
    %cst_28 = arith.constant dense<0xFF800000> : vector<4x32xf32>
    %54 = vector.multi_reduction <maximumf>, %53, %cst_28 [2] : vector<4x32x32xf32> to vector<4x32xf32>
    %55 = vector.shape_cast %54 : vector<4x32xf32> to vector<4x32x1xf32>
    %56 = vector.broadcast %55 : vector<4x32x1xf32> to vector<4x32x32xf32>
    %57 = arith.subf %53, %56 : vector<4x32x32xf32>
    %58 = math.exp %57 : vector<4x32x32xf32>
    %cst_29 = arith.constant dense<0.000000e+00> : vector<4x32xf32>
    %59 = vector.multi_reduction <add>, %58, %cst_29 [2] : vector<4x32x32xf32> to vector<4x32xf32>
    %60 = vector.shape_cast %59 : vector<4x32xf32> to vector<4x32x1xf32>
    %61 = tpu.reciprocal %60 {approx = true} : vector<4x32x1xf32> -> vector<4x32x1xf32>
    %62 = vector.broadcast %61 : vector<4x32x1xf32> to vector<4x32x32xf32>
    %63 = arith.mulf %58, %62 : vector<4x32x32xf32>
    %64 = arith.truncf %63 : vector<4x32x32xf32> to vector<4x32x32xbf16>
    "tpu.trace_start"() <{level = 10 : i32, message = "hqk,khd->qhd"}> : () -> ()
    %cst_30 = arith.constant dense<0.000000e+00> : vector<4x8x32xf32>
    %65 = tpu.matmul %48, %64, %cst_30 {dimension_numbers = #tpu.dot_dimension_numbers<[0], [2], [2], [1], [0, 1, 0, 2, 1, 1], [1], [0]>} : vector<32x4x8xbf16>, vector<4x32x32xbf16>, vector<4x8x32xf32> -> vector<4x8x32xf32>
    %66 = tpu.transpose %65, [2, 0, 1] : vector<4x8x32xf32> -> vector<32x4x8xf32>
    "tpu.trace_stop"() : () -> ()
    %67 = vector.shape_cast %66 : vector<32x4x8xf32> to vector<32x32xf32>
    %c0_31 = arith.constant 0 : index
    %c0_32 = arith.constant 0 : index
    %c0_33 = arith.constant 0 : index
    %68 = vector.load %arg9[%c0_31, %c0_32, %c0_33] : memref<2x32x32xbf16, #tpu.memory_space<vmem>>, vector<1x32x32xbf16>
    %69 = vector.shape_cast %68 : vector<1x32x32xbf16> to vector<32x32xbf16>
    %70 = arith.truncf %67 : vector<32x32xf32> to vector<32x32xbf16>
    %cst_34 = arith.constant dense<0.000000e+00> : vector<32x32xf32>
    %71 = tpu.matmul %70, %69, %cst_34 {dimension_numbers = #tpu.dot_dimension_numbers<[1], [0], [0], [1], [0, 0, 1, 1], [], []>} : vector<32x32xbf16>, vector<32x32xbf16>, vector<32x32xf32> -> vector<32x32xf32>
    %72 = arith.addf %5, %71 : vector<32x32xf32>
    %c0_35 = arith.constant 0 : index
    %c0_36 = arith.constant 0 : index
    %c0_37 = arith.constant 0 : index
    %73 = vector.load %arg10[%c0_35, %c0_36, %c0_37] : memref<2x1x32xf32, #tpu.memory_space<vmem>>, vector<1x1x32xf32>
    %74 = vector.shape_cast %73 : vector<1x1x32xf32> to vector<1x32xf32>
    %75 = vector.broadcast %74 : vector<1x32xf32> to vector<32x32xf32>
    %76 = arith.addf %72, %75 : vector<32x32xf32>
    %c0_38 = arith.constant 0 : index
    %c0_39 = arith.constant 0 : index
    %c0_40 = arith.constant 0 : index
    %77 = vector.load %arg11[%c0_38, %c0_39, %c0_40] : memref<2x1x32xf32, #tpu.memory_space<vmem>>, vector<1x1x32xf32>
    %78 = vector.shape_cast %77 : vector<1x1x32xf32> to vector<1x32xf32>
    %c0_41 = arith.constant 0 : index
    %c0_42 = arith.constant 0 : index
    %c0_43 = arith.constant 0 : index
    %79 = vector.load %arg12[%c0_41, %c0_42, %c0_43] : memref<2x1x32xf32, #tpu.memory_space<vmem>>, vector<1x1x32xf32>
    %80 = vector.shape_cast %79 : vector<1x1x32xf32> to vector<1x32xf32>
    %cst_44 = arith.constant dense<0.000000e+00> : vector<32xf32>
    %81 = vector.multi_reduction <add>, %76, %cst_44 [1] : vector<32x32xf32> to vector<32xf32>
    %82 = vector.shape_cast %81 : vector<32xf32> to vector<32x1xf32>
    %cst_45 = arith.constant 3.200000e+01 : f32
    %83 = vector.broadcast %cst_45 : f32 to vector<32x1xf32>
    %84 = arith.divf %82, %83 : vector<32x1xf32>
    %85 = vector.broadcast %84 : vector<32x1xf32> to vector<32x32xf32>
    %86 = arith.subf %76, %85 : vector<32x32xf32>
    %87 = arith.mulf %86, %86 : vector<32x32xf32>
    %cst_46 = arith.constant dense<0.000000e+00> : vector<32xf32>
    %88 = vector.multi_reduction <add>, %87, %cst_46 [1] : vector<32x32xf32> to vector<32xf32>
    %89 = vector.shape_cast %88 : vector<32xf32> to vector<32x1xf32>
    %cst_47 = arith.constant 3.200000e+01 : f32
    %90 = vector.broadcast %cst_47 : f32 to vector<32x1xf32>
    %91 = arith.divf %89, %90 : vector<32x1xf32>
    %92 = vector.broadcast %84 : vector<32x1xf32> to vector<32x32xf32>
    %93 = arith.subf %76, %92 : vector<32x32xf32>
    %cst_48 = arith.constant 9.99999997E-7 : f32
    %94 = vector.broadcast %cst_48 : f32 to vector<32x1xf32>
    %95 = arith.addf %91, %94 : vector<32x1xf32>
    %96 = math.rsqrt %95 : vector<32x1xf32>
    %97 = vector.broadcast %96 : vector<32x1xf32> to vector<32x32xf32>
    %98 = arith.mulf %93, %97 : vector<32x32xf32>
    %99 = vector.broadcast %78 : vector<1x32xf32> to vector<32x32xf32>
    %100 = arith.mulf %98, %99 : vector<32x32xf32>
    %101 = vector.broadcast %80 : vector<1x32xf32> to vector<32x32xf32>
    %102 = arith.addf %100, %101 : vector<32x32xf32>
    %c0_49 = arith.constant 0 : index
    %c0_50 = arith.constant 0 : index
    %c0_51 = arith.constant 0 : index
    %103 = vector.load %arg13[%c0_49, %c0_50, %c0_51] : memref<2x32x64xbf16, #tpu.memory_space<vmem>>, vector<1x32x64xbf16>
    %104 = vector.shape_cast %103 : vector<1x32x64xbf16> to vector<32x64xbf16>
    %105 = arith.truncf %102 : vector<32x32xf32> to vector<32x32xbf16>
    %cst_52 = arith.constant dense<0.000000e+00> : vector<32x64xf32>
    %106 = tpu.matmul %105, %104, %cst_52 {dimension_numbers = #tpu.dot_dimension_numbers<[1], [0], [0], [1], [0, 0, 1, 1], [], []>} : vector<32x32xbf16>, vector<32x64xbf16>, vector<32x64xf32> -> vector<32x64xf32>
    %c0_53 = arith.constant 0 : index
    %c0_54 = arith.constant 0 : index
    %c0_55 = arith.constant 0 : index
    %107 = vector.load %arg14[%c0_53, %c0_54, %c0_55] : memref<2x1x64xf32, #tpu.memory_space<vmem>>, vector<1x1x64xf32>
    %108 = vector.shape_cast %107 : vector<1x1x64xf32> to vector<1x64xf32>
    %109 = vector.broadcast %108 : vector<1x64xf32> to vector<32x64xf32>
    %110 = arith.addf %106, %109 : vector<32x64xf32>
    %cst_56 = arith.constant 5.000000e-01 : f32
    %111 = vector.broadcast %cst_56 : f32 to vector<32x64xf32>
    %112 = arith.mulf %111, %110 : vector<32x64xf32>
    %cst_57 = arith.constant 4.471500e-02 : f32
    %113 = vector.broadcast %cst_57 : f32 to vector<32x64xf32>
    %114 = arith.mulf %113, %110 : vector<32x64xf32>
    %115 = arith.mulf %114, %110 : vector<32x64xf32>
    %116 = arith.mulf %115, %110 : vector<32x64xf32>
    %117 = arith.addf %110, %116 : vector<32x64xf32>
    %cst_58 = arith.constant 0.797884583 : f32
    %118 = vector.broadcast %cst_58 : f32 to vector<32x64xf32>
    %119 = arith.mulf %118, %117 : vector<32x64xf32>
    %120 = math.tanh %119 : vector<32x64xf32>
    %cst_59 = arith.constant 1.000000e+00 : f32
    %121 = vector.broadcast %cst_59 : f32 to vector<32x64xf32>
    %122 = arith.addf %121, %120 : vector<32x64xf32>
    %123 = arith.mulf %112, %122 : vector<32x64xf32>
    %c0_60 = arith.constant 0 : index
    %c0_61 = arith.constant 0 : index
    %c0_62 = arith.constant 0 : index
    %124 = vector.load %arg15[%c0_60, %c0_61, %c0_62] : memref<2x64x32xbf16, #tpu.memory_space<vmem>>, vector<1x64x32xbf16>
    %125 = vector.shape_cast %124 : vector<1x64x32xbf16> to vector<64x32xbf16>
    %126 = arith.truncf %123 : vector<32x64xf32> to vector<32x64xbf16>
    %cst_63 = arith.constant dense<0.000000e+00> : vector<32x32xf32>
    %127 = tpu.matmul %126, %125, %cst_63 {dimension_numbers = #tpu.dot_dimension_numbers<[1], [0], [0], [1], [0, 0, 1, 1], [], []>} : vector<32x64xbf16>, vector<64x32xbf16>, vector<32x32xf32> -> vector<32x32xf32>
    %128 = arith.addf %76, %127 : vector<32x32xf32>
    %c0_64 = arith.constant 0 : index
    %c0_65 = arith.constant 0 : index
    %c0_66 = arith.constant 0 : index
    %129 = vector.load %arg16[%c0_64, %c0_65, %c0_66] : memref<2x1x32xf32, #tpu.memory_space<vmem>>, vector<1x1x32xf32>
    %130 = vector.shape_cast %129 : vector<1x1x32xf32> to vector<1x32xf32>
    %131 = vector.broadcast %130 : vector<1x32xf32> to vector<32x32xf32>
    %132 = arith.addf %128, %131 : vector<32x32xf32>
    %c1 = arith.constant 1 : index
    %c0_67 = arith.constant 0 : index
    %c0_68 = arith.constant 0 : index
    %133 = vector.load %arg5[%c1, %c0_67, %c0_68] : memref<2x1x32xf32, #tpu.memory_space<vmem>>, vector<1x1x32xf32>
    %134 = vector.shape_cast %133 : vector<1x1x32xf32> to vector<1x32xf32>
    %c1_69 = arith.constant 1 : index
    %c0_70 = arith.constant 0 : index
    %c0_71 = arith.constant 0 : index
    %135 = vector.load %arg6[%c1_69, %c0_70, %c0_71] : memref<2x1x32xf32, #tpu.memory_space<vmem>>, vector<1x1x32xf32>
    %136 = vector.shape_cast %135 : vector<1x1x32xf32> to vector<1x32xf32>
    %cst_72 = arith.constant dense<0.000000e+00> : vector<32xf32>
    %137 = vector.multi_reduction <add>, %132, %cst_72 [1] : vector<32x32xf32> to vector<32xf32>
    %138 = vector.shape_cast %137 : vector<32xf32> to vector<32x1xf32>
    %cst_73 = arith.constant 3.200000e+01 : f32
    %139 = vector.broadcast %cst_73 : f32 to vector<32x1xf32>
    %140 = arith.divf %138, %139 : vector<32x1xf32>
    %141 = vector.broadcast %140 : vector<32x1xf32> to vector<32x32xf32>
    %142 = arith.subf %132, %141 : vector<32x32xf32>
    %143 = arith.mulf %142, %142 : vector<32x32xf32>
    %cst_74 = arith.constant dense<0.000000e+00> : vector<32xf32>
    %144 = vector.multi_reduction <add>, %143, %cst_74 [1] : vector<32x32xf32> to vector<32xf32>
    %145 = vector.shape_cast %144 : vector<32xf32> to vector<32x1xf32>
    %cst_75 = arith.constant 3.200000e+01 : f32
    %146 = vector.broadcast %cst_75 : f32 to vector<32x1xf32>
    %147 = arith.divf %145, %146 : vector<32x1xf32>
    %148 = vector.broadcast %140 : vector<32x1xf32> to vector<32x32xf32>
    %149 = arith.subf %132, %148 : vector<32x32xf32>
    %cst_76 = arith.constant 9.99999997E-7 : f32
    %150 = vector.broadcast %cst_76 : f32 to vector<32x1xf32>
    %151 = arith.addf %147, %150 : vector<32x1xf32>
    %152 = math.rsqrt %151 : vector<32x1xf32>
    %153 = vector.broadcast %152 : vector<32x1xf32> to vector<32x32xf32>
    %154 = arith.mulf %149, %153 : vector<32x32xf32>
    %155 = vector.broadcast %134 : vector<1x32xf32> to vector<32x32xf32>
    %156 = arith.mulf %154, %155 : vector<32x32xf32>
    %157 = vector.broadcast %136 : vector<1x32xf32> to vector<32x32xf32>
    %158 = arith.addf %156, %157 : vector<32x32xf32>
    %c1_77 = arith.constant 1 : index
    %c0_78 = arith.constant 0 : index
    %c0_79 = arith.constant 0 : index
    %159 = vector.load %arg7[%c1_77, %c0_78, %c0_79] : memref<2x32x96xbf16, #tpu.memory_space<vmem>>, vector<1x32x96xbf16>
    %160 = vector.shape_cast %159 : vector<1x32x96xbf16> to vector<32x96xbf16>
    %161 = arith.truncf %158 : vector<32x32xf32> to vector<32x32xbf16>
    %cst_80 = arith.constant dense<0.000000e+00> : vector<32x96xf32>
    %162 = tpu.matmul %161, %160, %cst_80 {dimension_numbers = #tpu.dot_dimension_numbers<[1], [0], [0], [1], [0, 0, 1, 1], [], []>} : vector<32x32xbf16>, vector<32x96xbf16>, vector<32x96xf32> -> vector<32x96xf32>
    %c1_81 = arith.constant 1 : index
    %c0_82 = arith.constant 0 : index
    %c0_83 = arith.constant 0 : index
    %163 = vector.load %arg8[%c1_81, %c0_82, %c0_83] : memref<2x1x96xf32, #tpu.memory_space<vmem>>, vector<1x1x96xf32>
    %164 = vector.shape_cast %163 : vector<1x1x96xf32> to vector<1x96xf32>
    %165 = vector.broadcast %164 : vector<1x96xf32> to vector<32x96xf32>
    %166 = arith.addf %162, %165 : vector<32x96xf32>
    %167 = arith.truncf %166 : vector<32x96xf32> to vector<32x96xbf16>
    %168 = vector.extract_strided_slice %167 {offsets = [0, 0], sizes = [32, 32], strides = [1, 1]} : vector<32x96xbf16> to vector<32x32xbf16>
    %169 = vector.shape_cast %168 : vector<32x32xbf16> to vector<32x4x8xbf16>
    %170 = vector.extract_strided_slice %167 {offsets = [0, 32], sizes = [32, 32], strides = [1, 1]} : vector<32x96xbf16> to vector<32x32xbf16>
    %171 = vector.shape_cast %170 : vector<32x32xbf16> to vector<32x4x8xbf16>
    %172 = vector.extract_strided_slice %167 {offsets = [0, 64], sizes = [32, 32], strides = [1, 1]} : vector<32x96xbf16> to vector<32x32xbf16>
    %173 = vector.shape_cast %172 : vector<32x32xbf16> to vector<32x4x8xbf16>
    "tpu.trace_start"() <{level = 10 : i32, message = "qhd,khd->hqk"}> : () -> ()
    %cst_84 = arith.constant dense<0.000000e+00> : vector<4x32x32xf32>
    %174 = tpu.matmul %169, %171, %cst_84 {dimension_numbers = #tpu.dot_dimension_numbers<[2], [2], [0], [0], [0, 1, 0, 0, 1, 0], [1], [1]>} : vector<32x4x8xbf16>, vector<32x4x8xbf16>, vector<4x32x32xf32> -> vector<4x32x32xf32>
    "tpu.trace_stop"() : () -> ()
    %cst_85 = arith.constant 0.353553385 : f32
    %175 = vector.broadcast %cst_85 : f32 to vector<4x32x32xf32>
    %176 = arith.mulf %174, %175 : vector<4x32x32xf32>
    %177 = vector.broadcast %7 : vector<1x1x32xf32> to vector<4x32x32xf32>
    %178 = arith.addf %176, %177 : vector<4x32x32xf32>
    %cst_86 = arith.constant dense<0xFF800000> : vector<4x32xf32>
    %179 = vector.multi_reduction <maximumf>, %178, %cst_86 [2] : vector<4x32x32xf32> to vector<4x32xf32>
    %180 = vector.shape_cast %179 : vector<4x32xf32> to vector<4x32x1xf32>
    %181 = vector.broadcast %180 : vector<4x32x1xf32> to vector<4x32x32xf32>
    %182 = arith.subf %178, %181 : vector<4x32x32xf32>
    %183 = math.exp %182 : vector<4x32x32xf32>
    %cst_87 = arith.constant dense<0.000000e+00> : vector<4x32xf32>
    %184 = vector.multi_reduction <add>, %183, %cst_87 [2] : vector<4x32x32xf32> to vector<4x32xf32>
    %185 = vector.shape_cast %184 : vector<4x32xf32> to vector<4x32x1xf32>
    %186 = tpu.reciprocal %185 {approx = true} : vector<4x32x1xf32> -> vector<4x32x1xf32>
    %187 = vector.broadcast %186 : vector<4x32x1xf32> to vector<4x32x32xf32>
    %188 = arith.mulf %183, %187 : vector<4x32x32xf32>
    %189 = arith.truncf %188 : vector<4x32x32xf32> to vector<4x32x32xbf16>
    "tpu.trace_start"() <{level = 10 : i32, message = "hqk,khd->qhd"}> : () -> ()
    %cst_88 = arith.constant dense<0.000000e+00> : vector<4x8x32xf32>
    %190 = tpu.matmul %173, %189, %cst_88 {dimension_numbers = #tpu.dot_dimension_numbers<[0], [2], [2], [1], [0, 1, 0, 2, 1, 1], [1], [0]>} : vector<32x4x8xbf16>, vector<4x32x32xbf16>, vector<4x8x32xf32> -> vector<4x8x32xf32>
    %191 = tpu.transpose %190, [2, 0, 1] : vector<4x8x32xf32> -> vector<32x4x8xf32>
    "tpu.trace_stop"() : () -> ()
    %192 = vector.shape_cast %191 : vector<32x4x8xf32> to vector<32x32xf32>
    %c1_89 = arith.constant 1 : index
    %c0_90 = arith.constant 0 : index
    %c0_91 = arith.constant 0 : index
    %193 = vector.load %arg9[%c1_89, %c0_90, %c0_91] : memref<2x32x32xbf16, #tpu.memory_space<vmem>>, vector<1x32x32xbf16>
    %194 = vector.shape_cast %193 : vector<1x32x32xbf16> to vector<32x32xbf16>
    %195 = arith.truncf %192 : vector<32x32xf32> to vector<32x32xbf16>
    %cst_92 = arith.constant dense<0.000000e+00> : vector<32x32xf32>
    %196 = tpu.matmul %195, %194, %cst_92 {dimension_numbers = #tpu.dot_dimension_numbers<[1], [0], [0], [1], [0, 0, 1, 1], [], []>} : vector<32x32xbf16>, vector<32x32xbf16>, vector<32x32xf32> -> vector<32x32xf32>
    %197 = arith.addf %132, %196 : vector<32x32xf32>
    %c1_93 = arith.constant 1 : index
    %c0_94 = arith.constant 0 : index
    %c0_95 = arith.constant 0 : index
    %198 = vector.load %arg10[%c1_93, %c0_94, %c0_95] : memref<2x1x32xf32, #tpu.memory_space<vmem>>, vector<1x1x32xf32>
    %199 = vector.shape_cast %198 : vector<1x1x32xf32> to vector<1x32xf32>
    %200 = vector.broadcast %199 : vector<1x32xf32> to vector<32x32xf32>
    %201 = arith.addf %197, %200 : vector<32x32xf32>
    %c1_96 = arith.constant 1 : index
    %c0_97 = arith.constant 0 : index
    %c0_98 = arith.constant 0 : index
    %202 = vector.load %arg11[%c1_96, %c0_97, %c0_98] : memref<2x1x32xf32, #tpu.memory_space<vmem>>, vector<1x1x32xf32>
    %203 = vector.shape_cast %202 : vector<1x1x32xf32> to vector<1x32xf32>
    %c1_99 = arith.constant 1 : index
    %c0_100 = arith.constant 0 : index
    %c0_101 = arith.constant 0 : index
    %204 = vector.load %arg12[%c1_99, %c0_100, %c0_101] : memref<2x1x32xf32, #tpu.memory_space<vmem>>, vector<1x1x32xf32>
    %205 = vector.shape_cast %204 : vector<1x1x32xf32> to vector<1x32xf32>
    %cst_102 = arith.constant dense<0.000000e+00> : vector<32xf32>
    %206 = vector.multi_reduction <add>, %201, %cst_102 [1] : vector<32x32xf32> to vector<32xf32>
    %207 = vector.shape_cast %206 : vector<32xf32> to vector<32x1xf32>
    %cst_103 = arith.constant 3.200000e+01 : f32
    %208 = vector.broadcast %cst_103 : f32 to vector<32x1xf32>
    %209 = arith.divf %207, %208 : vector<32x1xf32>
    %210 = vector.broadcast %209 : vector<32x1xf32> to vector<32x32xf32>
    %211 = arith.subf %201, %210 : vector<32x32xf32>
    %212 = arith.mulf %211, %211 : vector<32x32xf32>
    %cst_104 = arith.constant dense<0.000000e+00> : vector<32xf32>
    %213 = vector.multi_reduction <add>, %212, %cst_104 [1] : vector<32x32xf32> to vector<32xf32>
    %214 = vector.shape_cast %213 : vector<32xf32> to vector<32x1xf32>
    %cst_105 = arith.constant 3.200000e+01 : f32
    %215 = vector.broadcast %cst_105 : f32 to vector<32x1xf32>
    %216 = arith.divf %214, %215 : vector<32x1xf32>
    %217 = vector.broadcast %209 : vector<32x1xf32> to vector<32x32xf32>
    %218 = arith.subf %201, %217 : vector<32x32xf32>
    %cst_106 = arith.constant 9.99999997E-7 : f32
    %219 = vector.broadcast %cst_106 : f32 to vector<32x1xf32>
    %220 = arith.addf %216, %219 : vector<32x1xf32>
    %221 = math.rsqrt %220 : vector<32x1xf32>
    %222 = vector.broadcast %221 : vector<32x1xf32> to vector<32x32xf32>
    %223 = arith.mulf %218, %222 : vector<32x32xf32>
    %224 = vector.broadcast %203 : vector<1x32xf32> to vector<32x32xf32>
    %225 = arith.mulf %223, %224 : vector<32x32xf32>
    %226 = vector.broadcast %205 : vector<1x32xf32> to vector<32x32xf32>
    %227 = arith.addf %225, %226 : vector<32x32xf32>
    %c1_107 = arith.constant 1 : index
    %c0_108 = arith.constant 0 : index
    %c0_109 = arith.constant 0 : index
    %228 = vector.load %arg13[%c1_107, %c0_108, %c0_109] : memref<2x32x64xbf16, #tpu.memory_space<vmem>>, vector<1x32x64xbf16>
    %229 = vector.shape_cast %228 : vector<1x32x64xbf16> to vector<32x64xbf16>
    %230 = arith.truncf %227 : vector<32x32xf32> to vector<32x32xbf16>
    %cst_110 = arith.constant dense<0.000000e+00> : vector<32x64xf32>
    %231 = tpu.matmul %230, %229, %cst_110 {dimension_numbers = #tpu.dot_dimension_numbers<[1], [0], [0], [1], [0, 0, 1, 1], [], []>} : vector<32x32xbf16>, vector<32x64xbf16>, vector<32x64xf32> -> vector<32x64xf32>
    %c1_111 = arith.constant 1 : index
    %c0_112 = arith.constant 0 : index
    %c0_113 = arith.constant 0 : index
    %232 = vector.load %arg14[%c1_111, %c0_112, %c0_113] : memref<2x1x64xf32, #tpu.memory_space<vmem>>, vector<1x1x64xf32>
    %233 = vector.shape_cast %232 : vector<1x1x64xf32> to vector<1x64xf32>
    %234 = vector.broadcast %233 : vector<1x64xf32> to vector<32x64xf32>
    %235 = arith.addf %231, %234 : vector<32x64xf32>
    %cst_114 = arith.constant 5.000000e-01 : f32
    %236 = vector.broadcast %cst_114 : f32 to vector<32x64xf32>
    %237 = arith.mulf %236, %235 : vector<32x64xf32>
    %cst_115 = arith.constant 4.471500e-02 : f32
    %238 = vector.broadcast %cst_115 : f32 to vector<32x64xf32>
    %239 = arith.mulf %238, %235 : vector<32x64xf32>
    %240 = arith.mulf %239, %235 : vector<32x64xf32>
    %241 = arith.mulf %240, %235 : vector<32x64xf32>
    %242 = arith.addf %235, %241 : vector<32x64xf32>
    %cst_116 = arith.constant 0.797884583 : f32
    %243 = vector.broadcast %cst_116 : f32 to vector<32x64xf32>
    %244 = arith.mulf %243, %242 : vector<32x64xf32>
    %245 = math.tanh %244 : vector<32x64xf32>
    %cst_117 = arith.constant 1.000000e+00 : f32
    %246 = vector.broadcast %cst_117 : f32 to vector<32x64xf32>
    %247 = arith.addf %246, %245 : vector<32x64xf32>
    %248 = arith.mulf %237, %247 : vector<32x64xf32>
    %c1_118 = arith.constant 1 : index
    %c0_119 = arith.constant 0 : index
    %c0_120 = arith.constant 0 : index
    %249 = vector.load %arg15[%c1_118, %c0_119, %c0_120] : memref<2x64x32xbf16, #tpu.memory_space<vmem>>, vector<1x64x32xbf16>
    %250 = vector.shape_cast %249 : vector<1x64x32xbf16> to vector<64x32xbf16>
    %251 = arith.truncf %248 : vector<32x64xf32> to vector<32x64xbf16>
    %cst_121 = arith.constant dense<0.000000e+00> : vector<32x32xf32>
    %252 = tpu.matmul %251, %250, %cst_121 {dimension_numbers = #tpu.dot_dimension_numbers<[1], [0], [0], [1], [0, 0, 1, 1], [], []>} : vector<32x64xbf16>, vector<64x32xbf16>, vector<32x32xf32> -> vector<32x32xf32>
    %253 = arith.addf %201, %252 : vector<32x32xf32>
    %c1_122 = arith.constant 1 : index
    %c0_123 = arith.constant 0 : index
    %c0_124 = arith.constant 0 : index
    %254 = vector.load %arg16[%c1_122, %c0_123, %c0_124] : memref<2x1x32xf32, #tpu.memory_space<vmem>>, vector<1x1x32xf32>
    %255 = vector.shape_cast %254 : vector<1x1x32xf32> to vector<1x32xf32>
    %256 = vector.broadcast %255 : vector<1x32xf32> to vector<32x32xf32>
    %257 = arith.addf %253, %256 : vector<32x32xf32>
    %258 = vector.extract_strided_slice %257 {offsets = [0, 0], sizes = [1, 32], strides = [1, 1]} : vector<32x32xf32> to vector<1x32xf32>
    %c0_125 = arith.constant 0 : index
    %c0_126 = arith.constant 0 : index
    %259 = vector.load %arg17[%c0_125, %c0_126] : memref<1x32xf32, #tpu.memory_space<vmem>>, vector<1x32xf32>
    %c0_127 = arith.constant 0 : index
    %c0_128 = arith.constant 0 : index
    %260 = vector.load %arg18[%c0_127, %c0_128] : memref<1x32xf32, #tpu.memory_space<vmem>>, vector<1x32xf32>
    %cst_129 = arith.constant dense<0.000000e+00> : vector<1xf32>
    %261 = vector.multi_reduction <add>, %258, %cst_129 [1] : vector<1x32xf32> to vector<1xf32>
    %262 = vector.shape_cast %261 : vector<1xf32> to vector<1x1xf32>
    %cst_130 = arith.constant 3.200000e+01 : f32
    %263 = vector.broadcast %cst_130 : f32 to vector<1x1xf32>
    %264 = arith.divf %262, %263 : vector<1x1xf32>
    %265 = vector.broadcast %264 : vector<1x1xf32> to vector<1x32xf32>
    %266 = arith.subf %258, %265 : vector<1x32xf32>
    %267 = arith.mulf %266, %266 : vector<1x32xf32>
    %cst_131 = arith.constant dense<0.000000e+00> : vector<1xf32>
    %268 = vector.multi_reduction <add>, %267, %cst_131 [1] : vector<1x32xf32> to vector<1xf32>
    %269 = vector.shape_cast %268 : vector<1xf32> to vector<1x1xf32>
    %cst_132 = arith.constant 3.200000e+01 : f32
    %270 = vector.broadcast %cst_132 : f32 to vector<1x1xf32>
    %271 = arith.divf %269, %270 : vector<1x1xf32>
    %272 = vector.broadcast %264 : vector<1x1xf32> to vector<1x32xf32>
    %273 = arith.subf %258, %272 : vector<1x32xf32>
    %cst_133 = arith.constant 9.99999997E-7 : f32
    %274 = vector.broadcast %cst_133 : f32 to vector<1x1xf32>
    %275 = arith.addf %271, %274 : vector<1x1xf32>
    %276 = math.rsqrt %275 : vector<1x1xf32>
    %277 = vector.broadcast %276 : vector<1x1xf32> to vector<1x32xf32>
    %278 = arith.mulf %273, %277 : vector<1x32xf32>
    %279 = arith.mulf %278, %259 : vector<1x32xf32>
    %280 = arith.addf %279, %260 : vector<1x32xf32>
    %c0_134 = arith.constant 0 : index
    %c0_135 = arith.constant 0 : index
    %281 = vector.load %arg19[%c0_134, %c0_135] : memref<32x128xbf16, #tpu.memory_space<vmem>>, vector<32x128xbf16>
    %282 = arith.truncf %280 : vector<1x32xf32> to vector<1x32xbf16>
    %cst_136 = arith.constant dense<0.000000e+00> : vector<1x128xf32>
    %283 = tpu.matmul %282, %281, %cst_136 {dimension_numbers = #tpu.dot_dimension_numbers<[1], [0], [0], [1], [0, 0, 1, 1], [], []>} : vector<1x32xbf16>, vector<32x128xbf16>, vector<1x128xf32> -> vector<1x128xf32>
    %c0_137 = arith.constant 0 : index
    %c0_138 = arith.constant 0 : index
    %284 = vector.load %arg20[%c0_137, %c0_138] : memref<1x128xf32, #tpu.memory_space<vmem>>, vector<1x128xf32>
    %285 = arith.addf %283, %284 : vector<1x128xf32>
    %286 = vector.shape_cast %285 : vector<1x128xf32> to vector<1x128xf32>
    %287 = vector.broadcast %286 : vector<1x128xf32> to vector<8x128xf32>
    %c0_139 = arith.constant 0 : index
    %c0_140 = arith.constant 0 : index
    %c0_141 = arith.constant 0 : index
    %288 = vector.load %arg21[%c0_139, %c0_140, %c0_141] : memref<1x8x128xf32, #tpu.memory_space<vmem>>, vector<1x8x128xf32>
    %289 = vector.shape_cast %288 : vector<1x8x128xf32> to vector<8x128xf32>
    %290 = vector.shape_cast %287 : vector<8x128xf32> to vector<1x8x128xf32>
    tpu.vector_store %arg21[%c0_139, %c0_140, %c0_141], %290 {strides = array<i32>} : memref<1x8x128xf32, #tpu.memory_space<vmem>>, vector<1x8x128xf32>,
    return
  }
  func.func @transform_0(%arg0: i32) -> (i32, i32, i32) {
    %c0_i32 = arith.constant 0 : i32
    %c0_i32_0 = arith.constant 0 : i32
    %c0_i32_1 = arith.constant 0 : i32
    return %arg0, %c0_i32, %c0_i32_0 : i32, i32, i32
  }
  func.func @transform_1(%arg0: i32) -> (i32, i32) {
    %c0_i32 = arith.constant 0 : i32
    %c0_i32_0 = arith.constant 0 : i32
    %c0_i32_1 = arith.constant 0 : i32
    return %c0_i32, %c0_i32_0 : i32, i32
  }
  func.func @transform_2(%arg0: i32) -> (i32, i32) {
    %c0_i32 = arith.constant 0 : i32
    %c0_i32_0 = arith.constant 0 : i32
    %c0_i32_1 = arith.constant 0 : i32
    return %c0_i32, %c0_i32_0 : i32, i32
  }
  func.func @transform_3(%arg0: i32) -> (i32, i32) {
    %c0_i32 = arith.constant 0 : i32
    %c0_i32_0 = arith.constant 0 : i32
    %c0_i32_1 = arith.constant 0 : i32
    return %c0_i32, %c0_i32_0 : i32, i32
  }
  func.func @transform_4(%arg0: i32) -> (i32, i32, i32) {
    %c0_i32 = arith.constant 0 : i32
    %c0_i32_0 = arith.constant 0 : i32
    %c0_i32_1 = arith.constant 0 : i32
    %c0_i32_2 = arith.constant 0 : i32
    return %c0_i32, %c0_i32_0, %c0_i32_1 : i32, i32, i32
  }
  func.func @transform_5(%arg0: i32) -> (i32, i32, i32) {
    %c0_i32 = arith.constant 0 : i32
    %c0_i32_0 = arith.constant 0 : i32
    %c0_i32_1 = arith.constant 0 : i32
    %c0_i32_2 = arith.constant 0 : i32
    return %c0_i32, %c0_i32_0, %c0_i32_1 : i32, i32, i32
  }
  func.func @transform_6(%arg0: i32) -> (i32, i32, i32) {
    %c0_i32 = arith.constant 0 : i32
    %c0_i32_0 = arith.constant 0 : i32
    %c0_i32_1 = arith.constant 0 : i32
    %c0_i32_2 = arith.constant 0 : i32
    return %c0_i32, %c0_i32_0, %c0_i32_1 : i32, i32, i32
  }
  func.func @transform_7(%arg0: i32) -> (i32, i32, i32) {
    %c0_i32 = arith.constant 0 : i32
    %c0_i32_0 = arith.constant 0 : i32
    %c0_i32_1 = arith.constant 0 : i32
    %c0_i32_2 = arith.constant 0 : i32
    return %c0_i32, %c0_i32_0, %c0_i32_1 : i32, i32, i32
  }
  func.func @transform_8(%arg0: i32) -> (i32, i32, i32) {
    %c0_i32 = arith.constant 0 : i32
    %c0_i32_0 = arith.constant 0 : i32
    %c0_i32_1 = arith.constant 0 : i32
    %c0_i32_2 = arith.constant 0 : i32
    return %c0_i32, %c0_i32_0, %c0_i32_1 : i32, i32, i32
  }
  func.func @transform_9(%arg0: i32) -> (i32, i32, i32) {
    %c0_i32 = arith.constant 0 : i32
    %c0_i32_0 = arith.constant 0 : i32
    %c0_i32_1 = arith.constant 0 : i32
    %c0_i32_2 = arith.constant 0 : i32
    return %c0_i32, %c0_i32_0, %c0_i32_1 : i32, i32, i32
  }
  func.func @transform_10(%arg0: i32) -> (i32, i32, i32) {
    %c0_i32 = arith.constant 0 : i32
    %c0_i32_0 = arith.constant 0 : i32
    %c0_i32_1 = arith.constant 0 : i32
    %c0_i32_2 = arith.constant 0 : i32
    return %c0_i32, %c0_i32_0, %c0_i32_1 : i32, i32, i32
  }
  func.func @transform_11(%arg0: i32) -> (i32, i32, i32) {
    %c0_i32 = arith.constant 0 : i32
    %c0_i32_0 = arith.constant 0 : i32
    %c0_i32_1 = arith.constant 0 : i32
    %c0_i32_2 = arith.constant 0 : i32
    return %c0_i32, %c0_i32_0, %c0_i32_1 : i32, i32, i32
  }
  func.func @transform_12(%arg0: i32) -> (i32, i32, i32) {
    %c0_i32 = arith.constant 0 : i32
    %c0_i32_0 = arith.constant 0 : i32
    %c0_i32_1 = arith.constant 0 : i32
    %c0_i32_2 = arith.constant 0 : i32
    return %c0_i32, %c0_i32_0, %c0_i32_1 : i32, i32, i32
  }
  func.func @transform_13(%arg0: i32) -> (i32, i32, i32) {
    %c0_i32 = arith.constant 0 : i32
    %c0_i32_0 = arith.constant 0 : i32
    %c0_i32_1 = arith.constant 0 : i32
    %c0_i32_2 = arith.constant 0 : i32
    return %c0_i32, %c0_i32_0, %c0_i32_1 : i32, i32, i32
  }
  func.func @transform_14(%arg0: i32) -> (i32, i32, i32) {
    %c0_i32 = arith.constant 0 : i32
    %c0_i32_0 = arith.constant 0 : i32
    %c0_i32_1 = arith.constant 0 : i32
    %c0_i32_2 = arith.constant 0 : i32
    return %c0_i32, %c0_i32_0, %c0_i32_1 : i32, i32, i32
  }
  func.func @transform_15(%arg0: i32) -> (i32, i32, i32) {
    %c0_i32 = arith.constant 0 : i32
    %c0_i32_0 = arith.constant 0 : i32
    %c0_i32_1 = arith.constant 0 : i32
    %c0_i32_2 = arith.constant 0 : i32
    return %c0_i32, %c0_i32_0, %c0_i32_1 : i32, i32, i32
  }
  func.func @transform_16(%arg0: i32) -> (i32, i32) {
    %c0_i32 = arith.constant 0 : i32
    %c0_i32_0 = arith.constant 0 : i32
    %c0_i32_1 = arith.constant 0 : i32
    return %c0_i32, %c0_i32_0 : i32, i32
  }
  func.func @transform_17(%arg0: i32) -> (i32, i32) {
    %c0_i32 = arith.constant 0 : i32
    %c0_i32_0 = arith.constant 0 : i32
    %c0_i32_1 = arith.constant 0 : i32
    return %c0_i32, %c0_i32_0 : i32, i32
  }
  func.func @transform_18(%arg0: i32) -> (i32, i32) {
    %c0_i32 = arith.constant 0 : i32
    %c0_i32_0 = arith.constant 0 : i32
    %c0_i32_1 = arith.constant 0 : i32
    return %c0_i32, %c0_i32_0 : i32, i32
  }
  func.func @transform_19(%arg0: i32) -> (i32, i32) {
    %c0_i32 = arith.constant 0 : i32
    %c0_i32_0 = arith.constant 0 : i32
    %c0_i32_1 = arith.constant 0 : i32
    return %c0_i32, %c0_i32_0 : i32, i32
  }
  func.func @transform_20(%arg0: i32) -> (i32, i32, i32) {
    %c0_i32 = arith.constant 0 : i32
    %c0_i32_0 = arith.constant 0 : i32
    %c0_i32_1 = arith.constant 0 : i32
    return %arg0, %c0_i32, %c0_i32_0 : i32, i32, i32
  }
}

</mosaic_0001>

<llo_original>
// kernel: vit_forward.1
$region0: #{vit_forward.1}
  #allocation0 [shape = 'u32[]', space=smem, size = 0x4, offset = 0x4, fixed_abs, tag = 'smem constant byte address 0x4 - core index']
  #allocation1 [shape = 'u32[144,128]{1,0:T(1,128)}', space=vmem, size = 0x12000, scoped, tag = 'internal scratch']
  %s0 = inlined_call_operand.vmem [shape: bf16[2,32,48], index: 0, kind: input, shape index: {}]
  %s1 = inlined_call_operand.vmem [shape: f32[32,32], index: 1, kind: input, shape index: {}]
  %s2 = inlined_call_operand.vmem [shape: f32[1,32], index: 2, kind: input, shape index: {}]
  %s3 = inlined_call_operand.vmem [shape: bf16[48,32], index: 3, kind: input, shape index: {}]
  %s4 = inlined_call_operand.vmem [shape: f32[2,1,32], index: 4, kind: input, shape index: {}]
  %s5 = inlined_call_operand.vmem [shape: f32[2,1,32], index: 5, kind: input, shape index: {}]
  %s6 = inlined_call_operand.vmem [shape: bf16[2,32,96], index: 6, kind: input, shape index: {}]
  %s7 = inlined_call_operand.vmem [shape: f32[2,1,96], index: 7, kind: input, shape index: {}]
  %s8 = inlined_call_operand.vmem [shape: bf16[2,32,32], index: 8, kind: input, shape index: {}]
  %s9 = inlined_call_operand.vmem [shape: f32[2,1,32], index: 9, kind: input, shape index: {}]
  %s10 = inlined_call_operand.vmem [shape: f32[2,1,32], index: 10, kind: input, shape index: {}]
  %s11 = inlined_call_operand.vmem [shape: f32[2,1,32], index: 11, kind: input, shape index: {}]
  %s12 = inlined_call_operand.vmem [shape: bf16[2,32,64], index: 12, kind: input, shape index: {}]
  %s13 = inlined_call_operand.vmem [shape: f32[2,1,64], index: 13, kind: input, shape index: {}]
  %s14 = inlined_call_operand.vmem [shape: bf16[2,64,32], index: 14, kind: input, shape index: {}]
  %s15 = inlined_call_operand.vmem [shape: f32[2,1,32], index: 15, kind: input, shape index: {}]
  %s16 = inlined_call_operand.vmem [shape: f32[1,32], index: 16, kind: input, shape index: {}]
  %s17 = inlined_call_operand.vmem [shape: f32[1,32], index: 17, kind: input, shape index: {}]
  %s18 = inlined_call_operand.vmem [shape: bf16[32,128], index: 18, kind: input, shape index: {}]
  %s19 = inlined_call_operand.vmem [shape: f32[1,128], index: 19, kind: input, shape index: {}]
  %s20 = inlined_call_operand.vmem [shape: f32[2,8,128], index: 20, kind: output, shape index: {}]
  %s21 = sld [smem:[#allocation0]]
  $region113: #{vit_forward.1} parent=0
    _
  %s23 = ssub.s32 1, %s21
  %s24 = scalar_select 0, %s23, %s21
  loop: start=0, step=1, limit=4
  $region2: #{vit_forward.1} parent=0 // loop_pre_header
    _
  $region3: #{vit_forward.1} parent=0 // loop_header
    %s26 = sphi 0, %s30
    %p27 = scmp.ge.s32.totalorder %s26, 4
    %s36 = sphi 0, %s38
    %s39 = sphi 0, %s36
    %s40 = sphi 0, %s39
    %s56 = sphi 0, %s40
    %s60 = sphi 0, %s60
    %s62 = sphi 0, %s60
    %s63 = sphi 0, %s62
    %s77 = sphi 0, %s63
    %s81 = sphi 0, %s81
    %s83 = sphi 0, %s81
    %s84 = sphi 0, %s83
    %s98 = sphi 0, %s84
    %s102 = sphi 0, %s102
    %s104 = sphi 0, %s102
    %s105 = sphi 0, %s104
    %s119 = sphi 0, %s105
    %s123 = sphi 0, %s123
    %s125 = sphi 0, %s123
    %s126 = sphi 0, %s125
    %s140 = sphi 0, %s126
    %s144 = sphi 0, %s144
    %s146 = sphi 0, %s144
    %s147 = sphi 0, %s146
    %s161 = sphi 0, %s147
    %s165 = sphi 0, %s165
    %s167 = sphi 0, %s165
    %s168 = sphi 0, %s167
    %s182 = sphi 0, %s168
    %s186 = sphi 0, %s186
    %s188 = sphi 0, %s186
    %s189 = sphi 0, %s188
    %s203 = sphi 0, %s189
    %s207 = sphi 0, %s207
    %s209 = sphi 0, %s207
    %s210 = sphi 0, %s209
    %s224 = sphi 0, %s210
    %s228 = sphi 0, %s228
    %s230 = sphi 0, %s228
    %s231 = sphi 0, %s230
    %s245 = sphi 0, %s231
    %s249 = sphi 0, %s249
    %s251 = sphi 0, %s249
    %s252 = sphi 0, %s251
    %s266 = sphi 0, %s252
    %s270 = sphi 0, %s270
    %s272 = sphi 0, %s270
    %s273 = sphi 0, %s272
    %s287 = sphi 0, %s273
    %s291 = sphi 0, %s291
    %s293 = sphi 0, %s291
    %s294 = sphi 0, %s293
    %s308 = sphi 0, %s294
    %s312 = sphi 0, %s312
    %s314 = sphi 0, %s312
    %s315 = sphi 0, %s314
    %s329 = sphi 0, %s315
    %s333 = sphi 0, %s333
    %s335 = sphi 0, %s333
    %s336 = sphi 0, %s335
    %s350 = sphi 0, %s336
    %s354 = sphi 0, %s354
    %s356 = sphi 0, %s354
    %s357 = sphi 0, %s356
    %s371 = sphi 0, %s357
    %s375 = sphi 0, %s375
    %s377 = sphi 0, %s375
    %s378 = sphi 0, %s377
    %s392 = sphi 0, %s378
    %s396 = sphi 0, %s396
    %s398 = sphi 0, %s396
    %s399 = sphi 0, %s398
    %s413 = sphi 0, %s399
    %s417 = sphi 0, %s417
    %s419 = sphi 0, %s417
    %s420 = sphi 0, %s419
    %s434 = sphi 0, %s420
    %s438 = sphi 0, %s438
    %s440 = sphi 0, %s438
    %s441 = sphi 0, %s440
    %s455 = sphi 0, %s441
    %s461 = sphi 0, %s463
    %s464 = sphi 0, %s461
    %s465 = sphi 0, %s464
    %s481 = sphi 0, %s465
  $region4: #{vit_forward.1} parent=0 // loop_header_branch
    %29 = sbr.rel (%p27) target = $region8
  $region5: #{vit_forward.1} parent=0 // loop_body
    %s31 = ssub.s32 %s26, 1
    %s32 = ssub.s32 %s26, 2
    %s33 = sadd.s32 %s26, 1
    %s34 = ssub.s32 %s26, %s33
    %p35 = scmp.eq.s32.totalorder %s34, 0
    %s37 = sadd.s32 %s36, 1
    %s38 = scalar_select %p35, %s36, %s37
    %p41 = pneg %p35
    %p42 = scmp.eq.s32.totalorder %s26, 1
    %p43 = por %p41, %p42
    %p44 = scmp.ne.s32.totalorder %s36, %s39
    %p45 = scmp.eq.s32.totalorder %s26, 0
    %p46 = por %p44, %p45
    %p47 = scmp.ne.s32.totalorder %s36, %s39
    %p48 = scmp.eq.s32.totalorder %s31, 1
    %p49 = por %p47, %p48
    %p50 = scmp.ne.s32.totalorder %s39, %s40
    %p51 = scmp.eq.s32.totalorder %s31, 0
    %p52 = por %p50, %p51
    %p53 = scmp.ne.s32.totalorder %s39, %s40
    %p54 = scmp.eq.s32.totalorder %s32, 1
    %p55 = por %p53, %p54
    %p57 = scmp.ne.s32.totalorder %s40, %s56
    %p58 = scmp.eq.s32.totalorder %s32, 0
    %p59 = por %p57, %p58
    %s61 = sadd.s32 %s60, 1
    %p64 = scmp.eq.s32.totalorder %s26, 1
    %p65 = scmp.ne.s32.totalorder %s60, %s62
    %p66 = scmp.eq.s32.totalorder %s26, 0
    %p67 = por %p65, %p66
    %p68 = scmp.ne.s32.totalorder %s60, %s62
    %p69 = scmp.eq.s32.totalorder %s31, 1
    %p70 = por %p68, %p69
    %p71 = scmp.ne.s32.totalorder %s62, %s63
    %p72 = scmp.eq.s32.totalorder %s31, 0
    %p73 = por %p71, %p72
    %p74 = scmp.ne.s32.totalorder %s62, %s63
    %p75 = scmp.eq.s32.totalorder %s32, 1
    %p76 = por %p74, %p75
    %p78 = scmp.ne.s32.totalorder %s63, %s77
    %p79 = scmp.eq.s32.totalorder %s32, 0
    %p80 = por %p78, %p79
    %s82 = sadd.s32 %s81, 1
    %p85 = scmp.eq.s32.totalorder %s26, 1
    %p86 = scmp.ne.s32.totalorder %s81, %s83
    %p87 = scmp.eq.s32.totalorder %s26, 0
    %p88 = por %p86, %p87
    %p89 = scmp.ne.s32.totalorder %s81, %s83
    %p90 = scmp.eq.s32.totalorder %s31, 1
    %p91 = por %p89, %p90
    %p92 = scmp.ne.s32.totalorder %s83, %s84
    %p93 = scmp.eq.s32.totalorder %s31, 0
    %p94 = por %p92, %p93
    %p95 = scmp.ne.s32.totalorder %s83, %s84
    %p96 = scmp.eq.s32.totalorder %s32, 1
    %p97 = por %p95, %p96
    %p99 = scmp.ne.s32.totalorder %s84, %s98
    %p100 = scmp.eq.s32.totalorder %s32, 0
    %p101 = por %p99, %p100
    %s103 = sadd.s32 %s102, 1
    %p106 = scmp.eq.s32.totalorder %s26, 1
    %p107 = scmp.ne.s32.totalorder %s102, %s104
    %p108 = scmp.eq.s32.totalorder %s26, 0
    %p109 = por %p107, %p108
    %p110 = scmp.ne.s32.totalorder %s102, %s104
    %p111 = scmp.eq.s32.totalorder %s31, 1
    %p112 = por %p110, %p111
    %p113 = scmp.ne.s32.totalorder %s104, %s105
    %p114 = scmp.eq.s32.totalorder %s31, 0
    %p115 = por %p113, %p114
    %p116 = scmp.ne.s32.totalorder %s104, %s105
    %p117 = scmp.eq.s32.totalorder %s32, 1
    %p118 = por %p116, %p117
    %p120 = scmp.ne.s32.totalorder %s105, %s119
    %p121 = scmp.eq.s32.totalorder %s32, 0
    %p122 = por %p120, %p121
    %s124 = sadd.s32 %s123, 1
    %p127 = scmp.eq.s32.totalorder %s26, 1
    %p128 = scmp.ne.s32.totalorder %s123, %s125
    %p129 = scmp.eq.s32.totalorder %s26, 0
    %p130 = por %p128, %p129
    %p131 = scmp.ne.s32.totalorder %s123, %s125
    %p132 = scmp.eq.s32.totalorder %s31, 1
    %p133 = por %p131, %p132
    %p134 = scmp.ne.s32.totalorder %s125, %s126
    %p135 = scmp.eq.s32.totalorder %s31, 0
    %p136 = por %p134, %p135
    %p137 = scmp.ne.s32.totalorder %s125, %s126
    %p138 = scmp.eq.s32.totalorder %s32, 1
    %p139 = por %p137, %p138
    %p141 = scmp.ne.s32.totalorder %s126, %s140
    %p142 = scmp.eq.s32.totalorder %s32, 0
    %p143 = por %p141, %p142
    %s145 = sadd.s32 %s144, 1
    %p148 = scmp.eq.s32.totalorder %s26, 1
    %p149 = scmp.ne.s32.totalorder %s144, %s146
    %p150 = scmp.eq.s32.totalorder %s26, 0
    %p151 = por %p149, %p150
    %p152 = scmp.ne.s32.totalorder %s144, %s146
    %p153 = scmp.eq.s32.totalorder %s31, 1
    %p154 = por %p152, %p153
    %p155 = scmp.ne.s32.totalorder %s146, %s147
    %p156 = scmp.eq.s32.totalorder %s31, 0
    %p157 = por %p155, %p156
    %p158 = scmp.ne.s32.totalorder %s146, %s147
    %p159 = scmp.eq.s32.totalorder %s32, 1
    %p160 = por %p158, %p159
    %p162 = scmp.ne.s32.totalorder %s147, %s161
    %p163 = scmp.eq.s32.totalorder %s32, 0
    %p164 = por %p162, %p163
    %s166 = sadd.s32 %s165, 1
    %p169 = scmp.eq.s32.totalorder %s26, 1
    %p170 = scmp.ne.s32.totalorder %s165, %s167
    %p171 = scmp.eq.s32.totalorder %s26, 0
    %p172 = por %p170, %p171
    %p173 = scmp.ne.s32.totalorder %s165, %s167
    %p174 = scmp.eq.s32.totalorder %s31, 1
    %p175 = por %p173, %p174
    %p176 = scmp.ne.s32.totalorder %s167, %s168
    %p177 = scmp.eq.s32.totalorder %s31, 0
    %p178 = por %p176, %p177
    %p179 = scmp.ne.s32.totalorder %s167, %s168
    %p180 = scmp.eq.s32.totalorder %s32, 1
    %p181 = por %p179, %p180
    %p183 = scmp.ne.s32.totalorder %s168, %s182
    %p184 = scmp.eq.s32.totalorder %s32, 0
    %p185 = por %p183, %p184
    %s187 = sadd.s32 %s186, 1
    %p190 = scmp.eq.s32.totalorder %s26, 1
    %p191 = scmp.ne.s32.totalorder %s186, %s188
    %p192 = scmp.eq.s32.totalorder %s26, 0
    %p193 = por %p191, %p192
    %p194 = scmp.ne.s32.totalorder %s186, %s188
    %p195 = scmp.eq.s32.totalorder %s31, 1
    %p196 = por %p194, %p195
    %p197 = scmp.ne.s32.totalorder %s188, %s189
    %p198 = scmp.eq.s32.totalorder %s31, 0
    %p199 = por %p197, %p198
    %p200 = scmp.ne.s32.totalorder %s188, %s189
    %p201 = scmp.eq.s32.totalorder %s32, 1
    %p202 = por %p200, %p201
    %p204 = scmp.ne.s32.totalorder %s189, %s203
    %p205 = scmp.eq.s32.totalorder %s32, 0
    %p206 = por %p204, %p205
    %s208 = sadd.s32 %s207, 1
    %p211 = scmp.eq.s32.totalorder %s26, 1
    %p212 = scmp.ne.s32.totalorder %s207, %s209
    %p213 = scmp.eq.s32.totalorder %s26, 0
    %p214 = por %p212, %p213
    %p215 = scmp.ne.s32.totalorder %s207, %s209
    %p216 = scmp.eq.s32.totalorder %s31, 1
    %p217 = por %p215, %p216
    %p218 = scmp.ne.s32.totalorder %s209, %s210
    %p219 = scmp.eq.s32.totalorder %s31, 0
    %p220 = por %p218, %p219
    %p221 = scmp.ne.s32.totalorder %s209, %s210
    %p222 = scmp.eq.s32.totalorder %s32, 1
    %p223 = por %p221, %p222
    %p225 = scmp.ne.s32.totalorder %s210, %s224
    %p226 = scmp.eq.s32.totalorder %s32, 0
    %p227 = por %p225, %p226
    %s229 = sadd.s32 %s228, 1
    %p232 = scmp.eq.s32.totalorder %s26, 1
    %p233 = scmp.ne.s32.totalorder %s228, %s230
    %p234 = scmp.eq.s32.totalorder %s26, 0
    %p235 = por %p233, %p234
    %p236 = scmp.ne.s32.totalorder %s228, %s230
    %p237 = scmp.eq.s32.totalorder %s31, 1
    %p238 = por %p236, %p237
    %p239 = scmp.ne.s32.totalorder %s230, %s231
    %p240 = scmp.eq.s32.totalorder %s31, 0
    %p241 = por %p239, %p240
    %p242 = scmp.ne.s32.totalorder %s230, %s231
    %p243 = scmp.eq.s32.totalorder %s32, 1
    %p244 = por %p242, %p243
    %p246 = scmp.ne.s32.totalorder %s231, %s245
    %p247 = scmp.eq.s32.totalorder %s32, 0
    %p248 = por %p246, %p247
    %s250 = sadd.s32 %s249, 1
    %p253 = scmp.eq.s32.totalorder %s26, 1
    %p254 = scmp.ne.s32.totalorder %s249, %s251
    %p255 = scmp.eq.s32.totalorder %s26, 0
    %p256 = por %p254, %p255
    %p257 = scmp.ne.s32.totalorder %s249, %s251
    %p258 = scmp.eq.s32.totalorder %s31, 1
    %p259 = por %p257, %p258
    %p260 = scmp.ne.s32.totalorder %s251, %s252
    %p261 = scmp.eq.s32.totalorder %s31, 0
    %p262 = por %p260, %p261
    %p263 = scmp.ne.s32.totalorder %s251, %s252
    %p264 = scmp.eq.s32.totalorder %s32, 1
    %p265 = por %p263, %p264
    %p267 = scmp.ne.s32.totalorder %s252, %s266
    %p268 = scmp.eq.s32.totalorder %s32, 0
    %p269 = por %p267, %p268
    %s271 = sadd.s32 %s270, 1
    %p274 = scmp.eq.s32.totalorder %s26, 1
    %p275 = scmp.ne.s32.totalorder %s270, %s272
    %p276 = scmp.eq.s32.totalorder %s26, 0
    %p277 = por %p275, %p276
    %p278 = scmp.ne.s32.totalorder %s270, %s272
    %p279 = scmp.eq.s32.totalorder %s31, 1
    %p280 = por %p278, %p279
    %p281 = scmp.ne.s32.totalorder %s272, %s273
    %p282 = scmp.eq.s32.totalorder %s31, 0
    %p283 = por %p281, %p282
    %p284 = scmp.ne.s32.totalorder %s272, %s273
    %p285 = scmp.eq.s32.totalorder %s32, 1
    %p286 = por %p284, %p285
    %p288 = scmp.ne.s32.totalorder %s273, %s287
    %p289 = scmp.eq.s32.totalorder %s32, 0
    %p290 = por %p288, %p289
    %s292 = sadd.s32 %s291, 1
    %p295 = scmp.eq.s32.totalorder %s26, 1
    %p296 = scmp.ne.s32.totalorder %s291, %s293
    %p297 = scmp.eq.s32.totalorder %s26, 0
    %p298 = por %p296, %p297
    %p299 = scmp.ne.s32.totalorder %s291, %s293
    %p300 = scmp.eq.s32.totalorder %s31, 1
    %p301 = por %p299, %p300
    %p302 = scmp.ne.s32.totalorder %s293, %s294
    %p303 = scmp.eq.s32.totalorder %s31, 0
    %p304 = por %p302, %p303
    %p305 = scmp.ne.s32.totalorder %s293, %s294
    %p306 = scmp.eq.s32.totalorder %s32, 1
    %p307 = por %p305, %p306
    %p309 = scmp.ne.s32.totalorder %s294, %s308
    %p310 = scmp.eq.s32.totalorder %s32, 0
    %p311 = por %p309, %p310
    %s313 = sadd.s32 %s312, 1
    %p316 = scmp.eq.s32.totalorder %s26, 1
    %p317 = scmp.ne.s32.totalorder %s312, %s314
    %p318 = scmp.eq.s32.totalorder %s26, 0
    %p319 = por %p317, %p318
    %p320 = scmp.ne.s32.totalorder %s312, %s314
    %p321 = scmp.eq.s32.totalorder %s31, 1
    %p322 = por %p320, %p321
    %p323 = scmp.ne.s32.totalorder %s314, %s315
    %p324 = scmp.eq.s32.totalorder %s31, 0
    %p325 = por %p323, %p324
    %p326 = scmp.ne.s32.totalorder %s314, %s315
    %p327 = scmp.eq.s32.totalorder %s32, 1
    %p328 = por %p326, %p327
    %p330 = scmp.ne.s32.totalorder %s315, %s329
    %p331 = scmp.eq.s32.totalorder %s32, 0
    %p332 = por %p330, %p331
    %s334 = sadd.s32 %s333, 1
    %p337 = scmp.eq.s32.totalorder %s26, 1
    %p338 = scmp.ne.s32.totalorder %s333, %s335
    %p339 = scmp.eq.s32.totalorder %s26, 0
    %p340 = por %p338, %p339
    %p341 = scmp.ne.s32.totalorder %s333, %s335
    %p342 = scmp.eq.s32.totalorder %s31, 1
    %p343 = por %p341, %p342
    %p344 = scmp.ne.s32.totalorder %s335, %s336
    %p345 = scmp.eq.s32.totalorder %s31, 0
    %p346 = por %p344, %p345
    %p347 = scmp.ne.s32.totalorder %s335, %s336
    %p348 = scmp.eq.s32.totalorder %s32, 1
    %p349 = por %p347, %p348
    %p351 = scmp.ne.s32.totalorder %s336, %s350
    %p352 = scmp.eq.s32.totalorder %s32, 0
    %p353 = por %p351, %p352
    %s355 = sadd.s32 %s354, 1
    %p358 = scmp.eq.s32.totalorder %s26, 1
    %p359 = scmp.ne.s32.totalorder %s354, %s356
    %p360 = scmp.eq.s32.totalorder %s26, 0
    %p361 = por %p359, %p360
    %p362 = scmp.ne.s32.totalorder %s354, %s356
    %p363 = scmp.eq.s32.totalorder %s31, 1
    %p364 = por %p362, %p363
    %p365 = scmp.ne.s32.totalorder %s356, %s357
    %p366 = scmp.eq.s32.totalorder %s31, 0
    %p367 = por %p365, %p366
    %p368 = scmp.ne.s32.totalorder %s356, %s357
    %p369 = scmp.eq.s32.totalorder %s32, 1
    %p370 = por %p368, %p369
    %p372 = scmp.ne.s32.totalorder %s357, %s371
    %p373 = scmp.eq.s32.totalorder %s32, 0
    %p374 = por %p372, %p373
    %s376 = sadd.s32 %s375, 1
    %p379 = scmp.eq.s32.totalorder %s26, 1
    %p380 = scmp.ne.s32.totalorder %s375, %s377
    %p381 = scmp.eq.s32.totalorder %s26, 0
    %p382 = por %p380, %p381
    %p383 = scmp.ne.s32.totalorder %s375, %s377
    %p384 = scmp.eq.s32.totalorder %s31, 1
    %p385 = por %p383, %p384
    %p386 = scmp.ne.s32.totalorder %s377, %s378
    %p387 = scmp.eq.s32.totalorder %s31, 0
    %p388 = por %p386, %p387
    %p389 = scmp.ne.s32.totalorder %s377, %s378
    %p390 = scmp.eq.s32.totalorder %s32, 1
    %p391 = por %p389, %p390
    %p393 = scmp.ne.s32.totalorder %s378, %s392
    %p394 = scmp.eq.s32.totalorder %s32, 0
    %p395 = por %p393, %p394
    %s397 = sadd.s32 %s396, 1
    %p400 = scmp.eq.s32.totalorder %s26, 1
    %p401 = scmp.ne.s32.totalorder %s396, %s398
    %p402 = scmp.eq.s32.totalorder %s26, 0
    %p403 = por %p401, %p402
    %p404 = scmp.ne.s32.totalorder %s396, %s398
    %p405 = scmp.eq.s32.totalorder %s31, 1
    %p406 = por %p404, %p405
    %p407 = scmp.ne.s32.totalorder %s398, %s399
    %p408 = scmp.eq.s32.totalorder %s31, 0
    %p409 = por %p407, %p408
    %p410 = scmp.ne.s32.totalorder %s398, %s399
    %p411 = scmp.eq.s32.totalorder %s32, 1
    %p412 = por %p410, %p411
    %p414 = scmp.ne.s32.totalorder %s399, %s413
    %p415 = scmp.eq.s32.totalorder %s32, 0
    %p416 = por %p414, %p415
    %s418 = sadd.s32 %s417, 1
    %p421 = scmp.eq.s32.totalorder %s26, 1
    %p422 = scmp.ne.s32.totalorder %s417, %s419
    %p423 = scmp.eq.s32.totalorder %s26, 0
    %p424 = por %p422, %p423
    %p425 = scmp.ne.s32.totalorder %s417, %s419
    %p426 = scmp.eq.s32.totalorder %s31, 1
    %p427 = por %p425, %p426
    %p428 = scmp.ne.s32.totalorder %s419, %s420
    %p429 = scmp.eq.s32.totalorder %s31, 0
    %p430 = por %p428, %p429
    %p431 = scmp.ne.s32.totalorder %s419, %s420
    %p432 = scmp.eq.s32.totalorder %s32, 1
    %p433 = por %p431, %p432
    %p435 = scmp.ne.s32.totalorder %s420, %s434
    %p436 = scmp.eq.s32.totalorder %s32, 0
    %p437 = por %p435, %p436
    %s439 = sadd.s32 %s438, 1
    %p442 = scmp.eq.s32.totalorder %s26, 1
    %p443 = scmp.ne.s32.totalorder %s438, %s440
    %p444 = scmp.eq.s32.totalorder %s26, 0
    %p445 = por %p443, %p444
    %p446 = scmp.ne.s32.totalorder %s438, %s440
    %p447 = scmp.eq.s32.totalorder %s31, 1
    %p448 = por %p446, %p447
    %p449 = scmp.ne.s32.totalorder %s440, %s441
    %p450 = scmp.eq.s32.totalorder %s31, 0
    %p451 = por %p449, %p450
    %p452 = scmp.ne.s32.totalorder %s440, %s441
    %p453 = scmp.eq.s32.totalorder %s32, 1
    %p454 = por %p452, %p453
    %p456 = scmp.ne.s32.totalorder %s441, %s455
    %p457 = scmp.eq.s32.totalorder %s32, 0
    %p458 = por %p456, %p457
    %s459 = ssub.s32 %s26, %s33
    %p460 = scmp.eq.s32.totalorder %s459, 0
    %s462 = sadd.s32 %s461, 1
    %s463 = scalar_select %p460, %s461, %s462
    %p466 = pneg %p460
    %p467 = scmp.eq.s32.totalorder %s26, 1
    %p468 = por %p466, %p467
    %p469 = scmp.ne.s32.totalorder %s461, %s464
    %p470 = scmp.eq.s32.totalorder %s26, 0
    %p471 = por %p469, %p470
    %p472 = scmp.ne.s32.totalorder %s461, %s464
    %p473 = scmp.eq.s32.totalorder %s31, 1
    %p474 = por %p472, %p473
    %p475 = scmp.ne.s32.totalorder %s464, %s465
    %p476 = scmp.eq.s32.totalorder %s31, 0
    %p477 = por %p475, %p476
    %p478 = scmp.ne.s32.totalorder %s464, %s465
    %p479 = scmp.eq.s32.totalorder %s32, 1
    %p480 = por %p478, %p479
    %p482 = scmp.ne.s32.totalorder %s465, %s481
    %p483 = scmp.eq.s32.totalorder %s32, 0
    %p484 = por %p482, %p483
    %p485 = scmp.le.s32.totalorder 1, %s26
    %p486 = scmp.lt.s32.totalorder %s26, 3
    %p487 = pnand %p485, %p486
    %p488 = pneg %p487
    // Predicated region
    $region9: #{vit_forward.1} parent=5 // pred_check
      _
    $region10: #{vit_forward.1} parent=5 // pred_check_branch
      %490 = sbr.rel (%p487) target = $region12
    $region11: #{vit_forward.1} parent=5 // pred_region
      %s491 = ssub.s32 %s26, 1
      // Predicated region
      $region13: #{vit_forward.1} parent=11 // pred_check
        %p492 = pneg %p73
      $region14: #{vit_forward.1} parent=11 // pred_check_branch
        %494 = sbr.rel (%p492) target = $region16
      $region15: #{vit_forward.1} parent=11 // pred_region
        _
      $region16: #{vit_forward.1} parent=11 // pred_fallthru
        _
      // Predicated region
      $region17: #{vit_forward.1} parent=11 // pred_check
        %p495 = pneg %p94
      $region18: #{vit_forward.1} parent=11 // pred_check_branch
        %497 = sbr.rel (%p495) target = $region20
      $region19: #{vit_forward.1} parent=11 // pred_region
        _
      $region20: #{vit_forward.1} parent=11 // pred_fallthru
        _
      // Predicated region
      $region21: #{vit_forward.1} parent=11 // pred_check
        %p498 = pneg %p115
      $region22: #{vit_forward.1} parent=11 // pred_check_branch
        %500 = sbr.rel (%p498) target = $region24
      $region23: #{vit_forward.1} parent=11 // pred_region
        _
      $region24: #{vit_forward.1} parent=11 // pred_fallthru
        _
      // Predicated region
      $region25: #{vit_forward.1} parent=11 // pred_check
        %p501 = pneg %p136
      $region26: #{vit_forward.1} parent=11 // pred_check_branch
        %503 = sbr.rel (%p501) target = $region28
      $region27: #{vit_forward.1} parent=11 // pred_region
        _
      $region28: #{vit_forward.1} parent=11 // pred_fallthru
        _
      // Predicated region
      $region29: #{vit_forward.1} parent=11 // pred_check
        %p504 = pneg %p157
      $region30: #{vit_forward.1} parent=11 // pred_check_branch
        %506 = sbr.rel (%p504) target = $region32
      $region31: #{vit_forward.1} parent=11 // pred_region
        _
      $region32: #{vit_forward.1} parent=11 // pred_fallthru
        _
      // Predicated region
      $region33: #{vit_forward.1} parent=11 // pred_check
        %p507 = pneg %p178
      $region34: #{vit_forward.1} parent=11 // pred_check_branch
        %509 = sbr.rel (%p507) target = $region36
      $region35: #{vit_forward.1} parent=11 // pred_region
        _
      $region36: #{vit_forward.1} parent=11 // pred_fallthru
        _
      // Predicated region
      $region37: #{vit_forward.1} parent=11 // pred_check
        %p510 = pneg %p199
      $region38: #{vit_forward.1} parent=11 // pred_check_branch
        %512 = sbr.rel (%p510) target = $region40
      $region39: #{vit_forward.1} parent=11 // pred_region
        _
      $region40: #{vit_forward.1} parent=11 // pred_fallthru
        _
      // Predicated region
      $region41: #{vit_forward.1} parent=11 // pred_check
        %p513 = pneg %p220
      $region42: #{vit_forward.1} parent=11 // pred_check_branch
        %515 = sbr.rel (%p513) target = $region44
      $region43: #{vit_forward.1} parent=11 // pred_region
        _
      $region44: #{vit_forward.1} parent=11 // pred_fallthru
        _
      // Predicated region
      $region45: #{vit_forward.1} parent=11 // pred_check
        %p516 = pneg %p241
      $region46: #{vit_forward.1} parent=11 // pred_check_branch
        %518 = sbr.rel (%p516) target = $region48
      $region47: #{vit_forward.1} parent=11 // pred_region
        _
      $region48: #{vit_forward.1} parent=11 // pred_fallthru
        _
      // Predicated region
      $region49: #{vit_forward.1} parent=11 // pred_check
        %p519 = pneg %p262
      $region50: #{vit_forward.1} parent=11 // pred_check_branch
        %521 = sbr.rel (%p519) target = $region52
      $region51: #{vit_forward.1} parent=11 // pred_region
        _
      $region52: #{vit_forward.1} parent=11 // pred_fallthru
        _
      // Predicated region
      $region53: #{vit_forward.1} parent=11 // pred_check
        %p522 = pneg %p283
      $region54: #{vit_forward.1} parent=11 // pred_check_branch
        %524 = sbr.rel (%p522) target = $region56
      $region55: #{vit_forward.1} parent=11 // pred_region
        _
      $region56: #{vit_forward.1} parent=11 // pred_fallthru
        _
      // Predicated region
      $region57: #{vit_forward.1} parent=11 // pred_check
        %p525 = pneg %p304
      $region58: #{vit_forward.1} parent=11 // pred_check_branch
        %527 = sbr.rel (%p525) target = $region60
      $region59: #{vit_forward.1} parent=11 // pred_region
        _
      $region60: #{vit_forward.1} parent=11 // pred_fallthru
        _
      // Predicated region
      $region61: #{vit_forward.1} parent=11 // pred_check
        %p528 = pneg %p325
      $region62: #{vit_forward.1} parent=11 // pred_check_branch
        %530 = sbr.rel (%p528) target = $region64
      $region63: #{vit_forward.1} parent=11 // pred_region
        _
      $region64: #{vit_forward.1} parent=11 // pred_fallthru
        _
      // Predicated region
      $region65: #{vit_forward.1} parent=11 // pred_check
        %p531 = pneg %p346
      $region66: #{vit_forward.1} parent=11 // pred_check_branch
        %533 = sbr.rel (%p531) target = $region68
      $region67: #{vit_forward.1} parent=11 // pred_region
        _
      $region68: #{vit_forward.1} parent=11 // pred_fallthru
        _
      // Predicated region
      $region69: #{vit_forward.1} parent=11 // pred_check
        %p534 = pneg %p367
      $region70: #{vit_forward.1} parent=11 // pred_check_branch
        %536 = sbr.rel (%p534) target = $region72
      $region71: #{vit_forward.1} parent=11 // pred_region
        _
      $region72: #{vit_forward.1} parent=11 // pred_fallthru
        _
      // Predicated region
      $region73: #{vit_forward.1} parent=11 // pred_check
        %p537 = pneg %p388
      $region74: #{vit_forward.1} parent=11 // pred_check_branch
        %539 = sbr.rel (%p537) target = $region76
      $region75: #{vit_forward.1} parent=11 // pred_region
        _
      $region76: #{vit_forward.1} parent=11 // pred_fallthru
        _
      // Predicated region
      $region77: #{vit_forward.1} parent=11 // pred_check
        %p540 = pneg %p409
      $region78: #{vit_forward.1} parent=11 // pred_check_branch
        %542 = sbr.rel (%p540) target = $region80
      $region79: #{vit_forward.1} parent=11 // pred_region
        _
      $region80: #{vit_forward.1} parent=11 // pred_fallthru
        _
      // Predicated region
      $region81: #{vit_forward.1} parent=11 // pred_check
        %p543 = pneg %p430
      $region82: #{vit_forward.1} parent=11 // pred_check_branch
        %545 = sbr.rel (%p543) target = $region84
      $region83: #{vit_forward.1} parent=11 // pred_region
        _
      $region84: #{vit_forward.1} parent=11 // pred_fallthru
        _
      // Predicated region
      $region85: #{vit_forward.1} parent=11 // pred_check
        %p546 = pneg %p451
      $region86: #{vit_forward.1} parent=11 // pred_check_branch
        %548 = sbr.rel (%p546) target = $region88
      $region87: #{vit_forward.1} parent=11 // pred_region
        _
      $region88: #{vit_forward.1} parent=11 // pred_fallthru
        _
    $region12: #{vit_forward.1} parent=5 // pred_fallthru
      _
    %p549 = scmp.lt.s32.totalorder %s26, 2
    // Predicated region
    $region89: #{vit_forward.1} parent=5 // pred_check
      %p550 = pneg %p549
    $region90: #{vit_forward.1} parent=5 // pred_check_branch
      %552 = sbr.rel (%p550) target = $region92
    $region91: #{vit_forward.1} parent=5 // pred_region
      // Predicated region
      $region93: #{vit_forward.1} parent=91 // pred_check
        %p553 = pneg %p46
      $region94: #{vit_forward.1} parent=91 // pred_check_branch
        %555 = sbr.rel (%p553) target = $region96
      $region95: #{vit_forward.1} parent=91 // pred_region
        %p556 = scmp.lt.s32.totalorder %s26, 1
        %s557 = scalar_select %p556, %s26, 1
        %s558 = smul.addr %s557, 4
        %s559 = smul.addr %s558, 4
        %s560 = scalar_lea.vmem %s0, %s559
      $region96: #{vit_forward.1} parent=91 // pred_fallthru
        _
    $region92: #{vit_forward.1} parent=5 // pred_fallthru
      _
    %p561 = scmp.le.s32.totalorder 1, %s26
    %p562 = scmp.lt.s32.totalorder %s26, 3
    %p563 = pnand %p561, %p562
    %p564 = pneg %p563
    // Predicated region
    $region97: #{vit_forward.1} parent=5 // pred_check
      _
    $region98: #{vit_forward.1} parent=5 // pred_check_branch
      %566 = sbr.rel (%p563) target = $region100
    $region99: #{vit_forward.1} parent=5 // pred_region
      %s567 = ssub.s32 %s26, 1
      %p568 = scmp.lt.s32.totalorder %s31, 1
      %s569 = scalar_select %p568, %s31, 1
      %s570 = smul.addr %s569, 4
      %s571 = smul.addr %s570, 4
      %s572 = scalar_lea.vmem %s0, %s571
      %p573 = pneg %p52
      %p574 = pneg %p49
      %p575 = pneg %p73
      %p576 = pneg %p70
      %p577 = pneg %p94
      %p578 = pneg %p91
      %p579 = pneg %p115
      %p580 = pneg %p112
      %p581 = pneg %p136
      %p582 = pneg %p133
      %p583 = pneg %p157
      %p584 = pneg %p154
      %p585 = pneg %p178
      %p586 = pneg %p175
      %p587 = pneg %p199
      %p588 = pneg %p196
      %p589 = pneg %p220
      %p590 = pneg %p217
      %p591 = pneg %p241
      %p592 = pneg %p238
      %p593 = pneg %p262
      %p594 = pneg %p259
      %p595 = pneg %p283
      %p596 = pneg %p280
      %p597 = pneg %p304
      %p598 = pneg %p301
      %p599 = pneg %p325
      %p600 = pneg %p322
      %p601 = pneg %p346
      %p602 = pneg %p343
      %p603 = pneg %p367
      %p604 = pneg %p364
      %p605 = pneg %p388
      %p606 = pneg %p385
      %p607 = pneg %p409
      %p608 = pneg %p406
      %p609 = pneg %p430
      %p610 = pneg %p427
      %p611 = pneg %p451
      %p612 = pneg %p448
      %p613 = pneg %p477
      %p614 = pneg %p474
      %p615 = scmp.lt.s32.totalorder %s31, 1
      %s616 = scalar_select %p615, %s31, 1
      %s617 = smul.addr %s616, 8
      %s618 = scalar_lea.vmem %s20, %s617
      %p619 = scmp.lt.s32.totalorder %s31, 1
      %s620 = scalar_select %p619, %s31, 1
      %s621 = smul.addr %s620, 4
      %s622 = smul.addr %s621, 4
      %s623 = scalar_lea.vmem %s0, %s622
      %p624 = scmp.lt.s32.totalorder %s31, 1
      %s625 = scalar_select %p624, %s31, 1
      %s626 = smul.addr %s625, 8
      %s627 = scalar_lea.vmem %s20, %s626
      %v629 = vld [vmem:[%s623] sm:$0xf]
      %v630 = vld [vmem:[%s623 + $0x4] sm:$0xf]
      %v631 = vld [vmem:[%s623 + $0x8] sm:$0xf]
      %v632 = vld [vmem:[%s623 + $0xc] sm:$0xf]
      %v633 = vld [vmem:[%s3] sm:$0xf]
      %v634 = vld [vmem:[%s3 + $0x4] sm:$0xf]
      %v635 = vld [vmem:[%s3 + $0x8] sm:$0xf]
      %v636 = vld [vmem:[%s3 + $0xc] sm:$0xf]
      %v637 = vld [vmem:[%s3 + $0x10] sm:$0xf]
      %v638 = vld [vmem:[%s3 + $0x14] sm:$0xf]
      %v639 = vld [vmem:[%s1] sm:$0xff]
      %v640 = vld [vmem:[%s1 + $0x8] sm:$0xff]
      %v641 = vld [vmem:[%s1 + $0x10] sm:$0xff]
      %v642 = vld [vmem:[%s1 + $0x18] sm:$0xff]
      %v647 = vunpack.c.l.b16 %v629
      %v648 = vunpack.c.l.b16 %v630
      %v649 = vunpack.c.l.b16 %v631
      %v650 = vunpack.c.l.b16 %v632
      %v651 = vpack.c.b16 %v648, %v647
      %v652 = vpack.c.b16 %v650, %v649
      %v659 = vunpack.c.l.b16 %v633
      %v660 = vunpack.c.l.b16 %v634
      %v661 = vunpack.c.l.b16 %v635
      %v662 = vunpack.c.l.b16 %v636
      %v663 = vunpack.c.l.b16 %v637
      %v664 = vunpack.c.l.b16 %v638
      %v665 = vpack.c.b16 %v660, %v659
      %v666 = vpack.c.b16 %v662, %v661
      %v667 = vpack.c.b16 %v664, %v663
      %vm671 = vcmask 392192
      %v673 = vsel %vm671, %v651, 0
      %v676 = vsel %vm671, %v652, 0
      %678 = vmatprep.subr.bf16.mxu0 0
      %679 = vmatpush1.bf16.msra.mxu0 0
      %680 = vmatprep.subr.bf16.mxu0 0
      %681 = vmatpush1.bf16.msra.mxu0 0
      %682 = vmatprep.subr.bf16.mxu0 0
      %683 = vmatpush1.bf16.msra.mxu0 0
      %684 = vmatprep.subr.bf16.mxu0 0
      %685 = vmatpush1.bf16.msra.mxu0 0
      %686 = vmatprep.subr.bf16.mxu0 0
      %687 = vmatpush1.bf16.msra.mxu0 0
      %688 = vmatprep.subr.bf16.mxu0 0
      %689 = vmatpush1.bf16.msra.mxu0 %v667
      %690 = vmatprep.subr.bf16.mxu0 0
      %691 = vmatpush1.bf16.msra.mxu0 %v666
      %692 = vmatprep.subr.bf16.mxu0 0
      %693 = vmatpush1.bf16.msra.mxu0 %v665
      %694 = vmatprep.subr.bf16.mxu0 0
      %695 = vmatpush2.bf16.msra.mxu0 0
      %696 = vmatprep.subr.bf16.mxu0 0
      %697 = vmatpush2.bf16.msra.mxu0 0
      %698 = vmatprep.subr.bf16.mxu0 0
      %699 = vmatpush2.bf16.msra.mxu0 0
      %700 = vmatprep.subr.bf16.mxu0 0
      %701 = vmatpush2.bf16.msra.mxu0 0
      %702 = vmatprep.subr.bf16.mxu0 0
      %703 = vmatpush2.bf16.msra.mxu0 0
      %704 = vmatprep.subr.bf16.mxu0 0
      %705 = vmatpush2.bf16.msra.mxu0 0
      %706 = vmatprep.subr.bf16.mxu0 0
      %707 = vmatpush2.bf16.msra.mxu0 0
      %708 = vmatprep.subr.bf16.mxu0 0
      %709 = vmatpush2.bf16.msra.mxu0 0
      %710 = vmatprep.mubr.bf16.mxu0 0
      %711 = vmatmul.mubr.bf16.gmra.mxu0 %v673
      %v712 = vpop.f32.mrf.mxu0
      %v713 = vadd.f32 %v639, %v712
      %v714 = vpop.f32.mrf.mxu0
      %v715 = vpop.f32.mrf.mxu0
      %v716 = vadd.f32 %v640, %v715
      %v717 = vpop.f32.mrf.mxu0
      %718 = vmatprep.mubr.bf16.mxu0 0
      %719 = vmatmul.mubr.bf16.gmra.mxu0 %v676
      %v720 = vpop.f32.mrf.mxu0
      %v721 = vadd.f32 %v641, %v720
      %v722 = vpop.f32.mrf.mxu0
      %v723 = vpop.f32.mrf.mxu0
      %v724 = vadd.f32 %v642, %v723
      %v725 = vpop.f32.mrf.mxu0
      %726 = vdwg.mxu0
      %v727 = vld [vmem:[%s2] sm:$0x1]
      %v728 = vld [vmem:[%s4] sm:$0x1]
      %v729 = vld [vmem:[%s5] sm:$0x1]
      %vm730 = vcmask 261120
      %v731 = vsel %vm730, %v713, 0.0
      %732 = vadd.xlane.f32.xlu0 %v731
      %v733 = vpop.xlane.xlu0 %732
      %v734 = vsel %vm730, %v716, 0.0
      %735 = vadd.xlane.f32.xlu0 %v734
      %v736 = vpop.xlane.xlu0 %735
      %v737 = vsel %vm730, %v721, 0.0
      %738 = vadd.xlane.f32.xlu0 %v737
      %v739 = vpop.xlane.xlu0 %738
      %v740 = vsel %vm730, %v724, 0.0
      %741 = vadd.xlane.f32.xlu0 %v740
      %v742 = vpop.xlane.xlu0 %741
      %v743 = vrcp.pop 32.0
      %v744 = vmul.f32 %v733, %v743
      %v745 = vmul.f32 %v736, %v743
      %v746 = vmul.f32 %v739, %v743
      %v747 = vmul.f32 %v742, %v743
      %v748 = vsub.f32 %v713, %v744
      %v749 = vsub.f32 %v716, %v745
      %v750 = vsub.f32 %v721, %v746
      %v751 = vsub.f32 %v724, %v747
      %v752 = vmul.f32 %v748, %v748
      %v753 = vmul.f32 %v749, %v749
      %v754 = vmul.f32 %v750, %v750
      %v755 = vmul.f32 %v751, %v751
      %v756 = vsel %vm730, %v752, 0.0
      %757 = vadd.xlane.f32.xlu0 %v756
      %v758 = vpop.xlane.xlu0 %757
      %v759 = vsel %vm730, %v753, 0.0
      %760 = vadd.xlane.f32.xlu0 %v759
      %v761 = vpop.xlane.xlu0 %760
      %v762 = vsel %vm730, %v754, 0.0
      %763 = vadd.xlane.f32.xlu0 %v762
      %v764 = vpop.xlane.xlu0 %763
      %v765 = vsel %vm730, %v755, 0.0
      %766 = vadd.xlane.f32.xlu0 %v765
      %v767 = vpop.xlane.xlu0 %766
      %v768 = vmul.f32 %v758, %v743
      %v769 = vmul.f32 %v761, %v743
      %v770 = vmul.f32 %v764, %v743
      %v771 = vmul.f32 %v767, %v743
      %v772 = vadd.f32 %v768, 1e-06
      %v773 = vadd.f32 %v769, 1e-06
      %v774 = vadd.f32 %v770, 1e-06
      %v775 = vadd.f32 %v771, 1e-06
      %v776 = vrsqrt.pop %v772
      %v777 = vrsqrt.pop %v773
      %v778 = vrsqrt.pop %v774
      %v779 = vrsqrt.pop %v775
      %v780 = vmul.f32 %v748, %v776
      %v781 = vmul.f32 %v749, %v777
      %v782 = vmul.f32 %v750, %v778
      %v783 = vmul.f32 %v751, %v779
      %v785 = vlaneseq
      %v786 = vshrl.u32 %v785, 7
      %v787 = vsub.s32 0, %v786
      %v788 = vrot.slane %v728, %v787
      %v790 = vmul.f32 %v780, %v788
      %v791 = vmul.f32 %v781, %v788
      %v792 = vmul.f32 %v782, %v788
      %v793 = vmul.f32 %v783, %v788
      %v795 = vlaneseq
      %v796 = vshrl.u32 %v795, 7
      %v797 = vsub.s32 0, %v796
      %v798 = vrot.slane %v729, %v797
      %v800 = vadd.f32 %v790, %v798
      %v801 = vadd.f32 %v791, %v798
      %v802 = vadd.f32 %v792, %v798
      %v803 = vadd.f32 %v793, %v798
      %v804 = vld [vmem:[%s6] sm:$0xf]
      %v805 = vld [vmem:[%s6 + $0x4] sm:$0xf]
      %v806 = vld [vmem:[%s6 + $0x8] sm:$0xf]
      %v807 = vld [vmem:[%s6 + $0xc] sm:$0xf]
      %v808 = vpack.c.bf16 %v801, %v800
      %v809 = vpack.c.bf16 %v803, %v802
      %v810 = vld [vmem:[%s7] sm:$0x1]
      %v812 = vlaneseq
      %v813 = vshrl.u32 %v812, 7
      %v814 = vsub.s32 0, %v813
      %v815 = vrot.slane %v810, %v814
      %v821 = vunpack.c.l.b16 %v804
      %v822 = vunpack.c.l.b16 %v805
      %v823 = vunpack.c.l.b16 %v806
      %v824 = vunpack.c.l.b16 %v807
      %v825 = vpack.c.b16 %v822, %v821
      %v826 = vpack.c.b16 %v824, %v823
      %v830 = vsel %vm730, %v808, 0
      %v833 = vsel %vm730, %v809, 0
      %835 = vmatprep.subr.bf16.mxu0 0
      %836 = vmatpush1.bf16.msra.mxu0 0
      %837 = vmatprep.subr.bf16.mxu0 0
      %838 = vmatpush1.bf16.msra.mxu0 0
      %839 = vmatprep.subr.bf16.mxu0 0
      %840 = vmatpush1.bf16.msra.mxu0 0
      %841 = vmatprep.subr.bf16.mxu0 0
      %842 = vmatpush1.bf16.msra.mxu0 0
      %843 = vmatprep.subr.bf16.mxu0 0
      %844 = vmatpush1.bf16.msra.mxu0 0
      %845 = vmatprep.subr.bf16.mxu0 0
      %846 = vmatpush1.bf16.msra.mxu0 0
      %847 = vmatprep.subr.bf16.mxu0 0
      %848 = vmatpush1.bf16.msra.mxu0 %v826
      %849 = vmatprep.subr.bf16.mxu0 0
      %850 = vmatpush1.bf16.msra.mxu0 %v825
      %851 = vmatprep.subr.bf16.mxu0 0
      %852 = vmatpush2.bf16.msra.mxu0 0
      %853 = vmatprep.subr.bf16.mxu0 0
      %854 = vmatpush2.bf16.msra.mxu0 0
      %855 = vmatprep.subr.bf16.mxu0 0
      %856 = vmatpush2.bf16.msra.mxu0 0
      %857 = vmatprep.subr.bf16.mxu0 0
      %858 = vmatpush2.bf16.msra.mxu0 0
      %859 = vmatprep.subr.bf16.mxu0 0
      %860 = vmatpush2.bf16.msra.mxu0 0
      %861 = vmatprep.subr.bf16.mxu0 0
      %862 = vmatpush2.bf16.msra.mxu0 0
      %863 = vmatprep.subr.bf16.mxu0 0
      %864 = vmatpush2.bf16.msra.mxu0 0
      %865 = vmatprep.subr.bf16.mxu0 0
      %866 = vmatpush2.bf16.msra.mxu0 0
      %867 = vmatprep.mubr.bf16.mxu0 0
      %868 = vmatmul.mubr.bf16.gmra.mxu0 %v830
      %v869 = vpop.f32.mrf.mxu0
      %v870 = vadd.f32 %v815, %v869
      %v871 = vpop.f32.mrf.mxu0
      %v872 = vpop.f32.mrf.mxu0
      %v873 = vadd.f32 %v815, %v872
      %v874 = vpop.f32.mrf.mxu0
      %875 = vmatprep.mubr.bf16.mxu0 0
      %876 = vmatmul.mubr.bf16.gmra.mxu0 %v833
      %v877 = vpop.f32.mrf.mxu0
      %v878 = vadd.f32 %v815, %v877
      %v879 = vpop.f32.mrf.mxu0
      %v880 = vpop.f32.mrf.mxu0
      %v881 = vadd.f32 %v815, %v880
      %v882 = vpop.f32.mrf.mxu0
      %883 = vdwg.mxu0
      %v884 = vpack.c.bf16 %v873, %v870
      %v885 = vpack.c.bf16 %v881, %v878
      %888 = vrot.lane.b32.xlu0 %v884, 120
      %v889 = vpop.permute.xlu0 %888
      %890 = vrot.lane.b32.xlu0 %v885, 120
      %v891 = vpop.permute.xlu0 %890
      %892 = vrot.lane.b32.xlu0 %v884, 112
      %v893 = vpop.permute.xlu0 %892
      %894 = vrot.lane.b32.xlu0 %v885, 112
      %v895 = vpop.permute.xlu0 %894
      %896 = vrot.lane.b32.xlu0 %v884, 104
      %v897 = vpop.permute.xlu0 %896
      %898 = vrot.lane.b32.xlu0 %v885, 104
      %v899 = vpop.permute.xlu0 %898
      %900 = vrot.lane.b32.xlu0 %v884, 96
      %v901 = vpop.permute.xlu0 %900
      %902 = vrot.lane.b32.xlu0 %v885, 96
      %v903 = vpop.permute.xlu0 %902
      %904 = vrot.lane.b32.xlu0 %v889, 96
      %v905 = vpop.permute.xlu0 %904
      %906 = vrot.lane.b32.xlu0 %v891, 96
      %v907 = vpop.permute.xlu0 %906
      %908 = vrot.lane.b32.xlu0 %v893, 96
      %v909 = vpop.permute.xlu0 %908
      %910 = vrot.lane.b32.xlu0 %v895, 96
      %v911 = vpop.permute.xlu0 %910
      %912 = vrot.lane.b32.xlu0 %v897, 96
      %v913 = vpop.permute.xlu0 %912
      %914 = vrot.lane.b32.xlu0 %v899, 96
      %v915 = vpop.permute.xlu0 %914
      %924 = vxpose.xlu0.c.b16.start [1/8] %v901, 128
      %925 = vxpose.xlu0.c.b16.cont [2/8] %v903, 128
      %926 = vxpose.xlu0.c.b16.cont [3/8] 0, 128
      %927 = vxpose.xlu0.c.b16.cont [4/8] 0, 128
      %928 = vxpose.xlu0.c.b16.cont [5/8] 0, 128
      %929 = vxpose.xlu0.c.b16.cont [6/8] 0, 128
      %930 = vxpose.xlu0.c.b16.cont [7/8] 0, 128
      %931 = vxpose.xlu0.c.b16.end [8/8] 0, 128
      %v932 = vpop.trf.xlu0
      %v933 = vpop.trf.xlu0
      %v934 = vpop.trf.xlu0
      %v935 = vpop.trf.xlu0
      %v936 = vpop.trf.xlu0
      %v937 = vpop.trf.xlu0
      %v938 = vpop.trf.xlu0
      %v939 = vpop.trf.xlu0
      %940 = vxpose.xlu0.c.b16.start [1/8] %v905, 128
      %941 = vxpose.xlu0.c.b16.cont [2/8] %v907, 128
      %942 = vxpose.xlu0.c.b16.cont [3/8] 0, 128
      %943 = vxpose.xlu0.c.b16.cont [4/8] 0, 128
      %944 = vxpose.xlu0.c.b16.cont [5/8] 0, 128
      %945 = vxpose.xlu0.c.b16.cont [6/8] 0, 128
      %946 = vxpose.xlu0.c.b16.cont [7/8] 0, 128
      %947 = vxpose.xlu0.c.b16.end [8/8] 0, 128
      %v948 = vpop.trf.xlu0
      %v949 = vpop.trf.xlu0
      %v950 = vpop.trf.xlu0
      %v951 = vpop.trf.xlu0
      %v952 = vpop.trf.xlu0
      %v953 = vpop.trf.xlu0
      %v954 = vpop.trf.xlu0
      %v955 = vpop.trf.xlu0
      %956 = vxpose.xlu0.c.b16.start [1/8] %v909, 128
      %957 = vxpose.xlu0.c.b16.cont [2/8] %v911, 128
      %958 = vxpose.xlu0.c.b16.cont [3/8] 0, 128
      %959 = vxpose.xlu0.c.b16.cont [4/8] 0, 128
      %960 = vxpose.xlu0.c.b16.cont [5/8] 0, 128
      %961 = vxpose.xlu0.c.b16.cont [6/8] 0, 128
      %962 = vxpose.xlu0.c.b16.cont [7/8] 0, 128
      %963 = vxpose.xlu0.c.b16.end [8/8] 0, 128
      %v964 = vpop.trf.xlu0
      %v965 = vpop.trf.xlu0
      %v966 = vpop.trf.xlu0
      %v967 = vpop.trf.xlu0
      %v968 = vpop.trf.xlu0
      %v969 = vpop.trf.xlu0
      %v970 = vpop.trf.xlu0
      %v971 = vpop.trf.xlu0
      %972 = vxpose.xlu0.c.b16.start [1/8] %v913, 128
      %973 = vxpose.xlu0.c.b16.cont [2/8] %v915, 128
      %974 = vxpose.xlu0.c.b16.cont [3/8] 0, 128
      %975 = vxpose.xlu0.c.b16.cont [4/8] 0, 128
      %976 = vxpose.xlu0.c.b16.cont [5/8] 0, 128
      %977 = vxpose.xlu0.c.b16.cont [6/8] 0, 128
      %978 = vxpose.xlu0.c.b16.cont [7/8] 0, 128
      %979 = vxpose.xlu0.c.b16.end [8/8] 0, 128
      %v980 = vpop.trf.xlu0
      %v981 = vpop.trf.xlu0
      %v982 = vpop.trf.xlu0
      %v983 = vpop.trf.xlu0
      %v984 = vpop.trf.xlu0
      %v985 = vpop.trf.xlu0
      %v986 = vpop.trf.xlu0
      %v987 = vpop.trf.xlu0
      %vm988 = vcmask 64512
      %v990 = vsel %vm988, %v884, 0
      %v993 = vsel %vm988, %v885, 0
      %vm995 = vcmask 1043456
      %v997 = vsel %vm995, %v932, 0
      %999 = vmatprep.subr.bf16.mxu0 0
      %1000 = vmatpush1.bf16.msra.mxu0 0
      %1001 = vmatprep.subr.bf16.mxu0 0
      %1002 = vmatpush1.bf16.msra.mxu0 0
      %1003 = vmatprep.subr.bf16.mxu0 0
      %1004 = vmatpush1.bf16.msra.mxu0 0
      %1005 = vmatprep.subr.bf16.mxu0 0
      %1006 = vmatpush1.bf16.msra.mxu0 0
      %1007 = vmatprep.subr.bf16.mxu0 0
      %1008 = vmatpush1.bf16.msra.mxu0 0
      %1009 = vmatprep.subr.bf16.mxu0 0
      %1010 = vmatpush1.bf16.msra.mxu0 0
      %1011 = vmatprep.subr.bf16.mxu0 0
      %1012 = vmatpush1.bf16.msra.mxu0 0
      %1013 = vmatprep.subr.bf16.mxu0 0
      %1014 = vmatpush1.bf16.msra.mxu0 %v997
      %1015 = vmatprep.subr.bf16.mxu0 0
      %1016 = vmatpush2.bf16.msra.mxu0 0
      %1017 = vmatprep.subr.bf16.mxu0 0
      %1018 = vmatpush2.bf16.msra.mxu0 0
      %1019 = vmatprep.subr.bf16.mxu0 0
      %1020 = vmatpush2.bf16.msra.mxu0 0
      %1021 = vmatprep.subr.bf16.mxu0 0
      %1022 = vmatpush2.bf16.msra.mxu0 0
      %1023 = vmatprep.subr.bf16.mxu0 0
      %1024 = vmatpush2.bf16.msra.mxu0 0
      %1025 = vmatprep.subr.bf16.mxu0 0
      %1026 = vmatpush2.bf16.msra.mxu0 0
      %1027 = vmatprep.subr.bf16.mxu0 0
      %1028 = vmatpush2.bf16.msra.mxu0 0
      %1029 = vmatprep.subr.bf16.mxu0 0
      %1030 = vmatpush2.bf16.msra.mxu0 0
      %1031 = vmatprep.mubr.bf16.mxu0 0
      %1032 = vmatmul.mubr.bf16.gmra.mxu0 %v990
      %v1033 = vpop.f32.mrf.mxu0
      %v1034 = vadd.f32 0.0, %v1033
      %v1035 = vpop.f32.mrf.mxu0
      %v1036 = vpop.f32.mrf.mxu0
      %v1037 = vadd.f32 0.0, %v1036
      %v1038 = vpop.f32.mrf.mxu0
      %1039 = vmatprep.mubr.bf16.mxu0 0
      %1040 = vmatmul.mubr.bf16.gmra.mxu0 %v993
      %v1041 = vpop.f32.mrf.mxu0
      %v1042 = vadd.f32 0.0, %v1041
      %v1043 = vpop.f32.mrf.mxu0
      %v1044 = vpop.f32.mrf.mxu0
      %v1045 = vadd.f32 0.0, %v1044
      %v1046 = vpop.f32.mrf.mxu0
      %1047 = vdwg.mxu0
      %v1049 = vsel %vm988, %v889, 0
      %v1052 = vsel %vm988, %v891, 0
      %v1055 = vsel %vm995, %v948, 0
      %1057 = vmatprep.subr.bf16.mxu0 0
      %1058 = vmatpush1.bf16.msra.mxu0 0
      %1059 = vmatprep.subr.bf16.mxu0 0
      %1060 = vmatpush1.bf16.msra.mxu0 0
      %1061 = vmatprep.subr.bf16.mxu0 0
      %1062 = vmatpush1.bf16.msra.mxu0 0
      %1063 = vmatprep.subr.bf16.mxu0 0
      %1064 = vmatpush1.bf16.msra.mxu0 0
      %1065 = vmatprep.subr.bf16.mxu0 0
      %1066 = vmatpush1.bf16.msra.mxu0 0
      %1067 = vmatprep.subr.bf16.mxu0 0
      %1068 = vmatpush1.bf16.msra.mxu0 0
      %1069 = vmatprep.subr.bf16.mxu0 0
      %1070 = vmatpush1.bf16.msra.mxu0 0
      %1071 = vmatprep.subr.bf16.mxu0 0
      %1072 = vmatpush1.bf16.msra.mxu0 %v1055
      %1073 = vmatprep.subr.bf16.mxu0 0
      %1074 = vmatpush2.bf16.msra.mxu0 0
      %1075 = vmatprep.subr.bf16.mxu0 0
      %1076 = vmatpush2.bf16.msra.mxu0 0
      %1077 = vmatprep.subr.bf16.mxu0 0
      %1078 = vmatpush2.bf16.msra.mxu0 0
      %1079 = vmatprep.subr.bf16.mxu0 0
      %1080 = vmatpush2.bf16.msra.mxu0 0
      %1081 = vmatprep.subr.bf16.mxu0 0
      %1082 = vmatpush2.bf16.msra.mxu0 0
      %1083 = vmatprep.subr.bf16.mxu0 0
      %1084 = vmatpush2.bf16.msra.mxu0 0
      %1085 = vmatprep.subr.bf16.mxu0 0
      %1086 = vmatpush2.bf16.msra.mxu0 0
      %1087 = vmatprep.subr.bf16.mxu0 0
      %1088 = vmatpush2.bf16.msra.mxu0 0
      %1089 = vmatprep.mubr.bf16.mxu0 0
      %1090 = vmatmul.mubr.bf16.gmra.mxu0 %v1049
      %v1091 = vpop.f32.mrf.mxu0
      %v1092 = vadd.f32 0.0, %v1091
      %v1093 = vpop.f32.mrf.mxu0
      %v1094 = vpop.f32.mrf.mxu0
      %v1095 = vadd.f32 0.0, %v1094
      %v1096 = vpop.f32.mrf.mxu0
      %1097 = vmatprep.mubr.bf16.mxu0 0
      %1098 = vmatmul.mubr.bf16.gmra.mxu0 %v1052
      %v1099 = vpop.f32.mrf.mxu0
      %v1100 = vadd.f32 0.0, %v1099
      %v1101 = vpop.f32.mrf.mxu0
      %v1102 = vpop.f32.mrf.mxu0
      %v1103 = vadd.f32 0.0, %v1102
      %v1104 = vpop.f32.mrf.mxu0
      %1105 = vdwg.mxu0
      %v1107 = vsel %vm988, %v893, 0
      %v1110 = vsel %vm988, %v895, 0
      %v1113 = vsel %vm995, %v964, 0
      %1115 = vmatprep.subr.bf16.mxu0 0
      %1116 = vmatpush1.bf16.msra.mxu0 0
      %1117 = vmatprep.subr.bf16.mxu0 0
      %1118 = vmatpush1.bf16.msra.mxu0 0
      %1119 = vmatprep.subr.bf16.mxu0 0
      %1120 = vmatpush1.bf16.msra.mxu0 0
      %1121 = vmatprep.subr.bf16.mxu0 0
      %1122 = vmatpush1.bf16.msra.mxu0 0
      %1123 = vmatprep.subr.bf16.mxu0 0
      %1124 = vmatpush1.bf16.msra.mxu0 0
      %1125 = vmatprep.subr.bf16.mxu0 0
      %1126 = vmatpush1.bf16.msra.mxu0 0
      %1127 = vmatprep.subr.bf16.mxu0 0
      %1128 = vmatpush1.bf16.msra.mxu0 0
      %1129 = vmatprep.subr.bf16.mxu0 0
      %1130 = vmatpush1.bf16.msra.mxu0 %v1113
      %1131 = vmatprep.subr.bf16.mxu0 0
      %1132 = vmatpush2.bf16.msra.mxu0 0
      %1133 = vmatprep.subr.bf16.mxu0 0
      %1134 = vmatpush2.bf16.msra.mxu0 0
      %1135 = vmatprep.subr.bf16.mxu0 0
      %1136 = vmatpush2.bf16.msra.mxu0 0
      %1137 = vmatprep.subr.bf16.mxu0 0
      %1138 = vmatpush2.bf16.msra.mxu0 0
      %1139 = vmatprep.subr.bf16.mxu0 0
      %1140 = vmatpush2.bf16.msra.mxu0 0
      %1141 = vmatprep.subr.bf16.mxu0 0
      %1142 = vmatpush2.bf16.msra.mxu0 0
      %1143 = vmatprep.subr.bf16.mxu0 0
      %1144 = vmatpush2.bf16.msra.mxu0 0
      %1145 = vmatprep.subr.bf16.mxu0 0
      %1146 = vmatpush2.bf16.msra.mxu0 0
      %1147 = vmatprep.mubr.bf16.mxu0 0
      %1148 = vmatmul.mubr.bf16.gmra.mxu0 %v1107
      %v1149 = vpop.f32.mrf.mxu0
      %v1150 = vadd.f32 0.0, %v1149
      %v1151 = vpop.f32.mrf.mxu0
      %v1152 = vpop.f32.mrf.mxu0
      %v1153 = vadd.f32 0.0, %v1152
      %v1154 = vpop.f32.mrf.mxu0
      %1155 = vmatprep.mubr.bf16.mxu0 0
      %1156 = vmatmul.mubr.bf16.gmra.mxu0 %v1110
      %v1157 = vpop.f32.mrf.mxu0
      %v1158 = vadd.f32 0.0, %v1157
      %v1159 = vpop.f32.mrf.mxu0
      %v1160 = vpop.f32.mrf.mxu0
      %v1161 = vadd.f32 0.0, %v1160
      %v1162 = vpop.f32.mrf.mxu0
      %1163 = vdwg.mxu0
      %v1165 = vsel %vm988, %v897, 0
      %v1168 = vsel %vm988, %v899, 0
      %v1171 = vsel %vm995, %v980, 0
      %1173 = vmatprep.subr.bf16.mxu0 0
      %1174 = vmatpush1.bf16.msra.mxu0 0
      %1175 = vmatprep.subr.bf16.mxu0 0
      %1176 = vmatpush1.bf16.msra.mxu0 0
      %1177 = vmatprep.subr.bf16.mxu0 0
      %1178 = vmatpush1.bf16.msra.mxu0 0
      %1179 = vmatprep.subr.bf16.mxu0 0
      %1180 = vmatpush1.bf16.msra.mxu0 0
      %1181 = vmatprep.subr.bf16.mxu0 0
      %1182 = vmatpush1.bf16.msra.mxu0 0
      %1183 = vmatprep.subr.bf16.mxu0 0
      %1184 = vmatpush1.bf16.msra.mxu0 0
      %1185 = vmatprep.subr.bf16.mxu0 0
      %1186 = vmatpush1.bf16.msra.mxu0 0
      %1187 = vmatprep.subr.bf16.mxu0 0
      %1188 = vmatpush1.bf16.msra.mxu0 %v1171
      %1189 = vmatprep.subr.bf16.mxu0 0
      %1190 = vmatpush2.bf16.msra.mxu0 0
      %1191 = vmatprep.subr.bf16.mxu0 0
      %1192 = vmatpush2.bf16.msra.mxu0 0
      %1193 = vmatprep.subr.bf16.mxu0 0
      %1194 = vmatpush2.bf16.msra.mxu0 0
      %1195 = vmatprep.subr.bf16.mxu0 0
      %1196 = vmatpush2.bf16.msra.mxu0 0
      %1197 = vmatprep.subr.bf16.mxu0 0
      %1198 = vmatpush2.bf16.msra.mxu0 0
      %1199 = vmatprep.subr.bf16.mxu0 0
      %1200 = vmatpush2.bf16.msra.mxu0 0
      %1201 = vmatprep.subr.bf16.mxu0 0
      %1202 = vmatpush2.bf16.msra.mxu0 0
      %1203 = vmatprep.subr.bf16.mxu0 0
      %1204 = vmatpush2.bf16.msra.mxu0 0
      %1205 = vmatprep.mubr.bf16.mxu0 0
      %1206 = vmatmul.mubr.bf16.gmra.mxu0 %v1165
      %v1207 = vpop.f32.mrf.mxu0
      %v1208 = vadd.f32 0.0, %v1207
      %v1209 = vpop.f32.mrf.mxu0
      %v1210 = vpop.f32.mrf.mxu0
      %v1211 = vadd.f32 0.0, %v1210
      %v1212 = vpop.f32.mrf.mxu0
      %1213 = vmatprep.mubr.bf16.mxu0 0
      %1214 = vmatmul.mubr.bf16.gmra.mxu0 %v1168
      %v1215 = vpop.f32.mrf.mxu0
      %v1216 = vadd.f32 0.0, %v1215
      %v1217 = vpop.f32.mrf.mxu0
      %v1218 = vpop.f32.mrf.mxu0
      %v1219 = vadd.f32 0.0, %v1218
      %v1220 = vpop.f32.mrf.mxu0
      %1221 = vdwg.mxu0
      %v1222 = vmul.f32 %v1034, 0.35355338
      %v1223 = vmul.f32 %v1037, 0.35355338
      %v1224 = vmul.f32 %v1042, 0.35355338
      %v1225 = vmul.f32 %v1045, 0.35355338
      %v1226 = vmul.f32 %v1092, 0.35355338
      %v1227 = vmul.f32 %v1095, 0.35355338
      %v1228 = vmul.f32 %v1100, 0.35355338
      %v1229 = vmul.f32 %v1103, 0.35355338
      %v1230 = vmul.f32 %v1150, 0.35355338
      %v1231 = vmul.f32 %v1153, 0.35355338
      %v1232 = vmul.f32 %v1158, 0.35355338
      %v1233 = vmul.f32 %v1161, 0.35355338
      %v1234 = vmul.f32 %v1208, 0.35355338
      %v1235 = vmul.f32 %v1211, 0.35355338
      %v1236 = vmul.f32 %v1216, 0.35355338
      %v1237 = vmul.f32 %v1219, 0.35355338
      %v1239 = vlaneseq
      %v1240 = vshrl.u32 %v1239, 7
      %v1241 = vsub.s32 0, %v1240
      %v1242 = vrot.slane %v727, %v1241
      %v1244 = vadd.f32 %v1222, %v1242
      %v1245 = vadd.f32 %v1223, %v1242
      %v1246 = vadd.f32 %v1224, %v1242
      %v1247 = vadd.f32 %v1225, %v1242
      %v1248 = vadd.f32 %v1226, %v1242
      %v1249 = vadd.f32 %v1227, %v1242
      %v1250 = vadd.f32 %v1228, %v1242
      %v1251 = vadd.f32 %v1229, %v1242
      %v1252 = vadd.f32 %v1230, %v1242
      %v1253 = vadd.f32 %v1231, %v1242
      %v1254 = vadd.f32 %v1232, %v1242
      %v1255 = vadd.f32 %v1233, %v1242
      %v1256 = vadd.f32 %v1234, %v1242
      %v1257 = vadd.f32 %v1235, %v1242
      %v1258 = vadd.f32 %v1236, %v1242
      %v1259 = vadd.f32 %v1237, %v1242
      %v1260 = vsel %vm730, %v1244, -inf
      %1261 = vmax.xlane.f32.xlu0 %v1260
      %v1262 = vpop.xlane.xlu0 %1261
      %v1263 = vsel %vm730, %v1245, -inf
      %1264 = vmax.xlane.f32.xlu0 %v1263
      %v1265 = vpop.xlane.xlu0 %1264
      %v1266 = vsel %vm730, %v1246, -inf
      %1267 = vmax.xlane.f32.xlu0 %v1266
      %v1268 = vpop.xlane.xlu0 %1267
      %v1269 = vsel %vm730, %v1247, -inf
      %1270 = vmax.xlane.f32.xlu0 %v1269
      %v1271 = vpop.xlane.xlu0 %1270
      %v1272 = vsel %vm730, %v1248, -inf
      %1273 = vmax.xlane.f32.xlu0 %v1272
      %v1274 = vpop.xlane.xlu0 %1273
      %v1275 = vsel %vm730, %v1249, -inf
      %1276 = vmax.xlane.f32.xlu0 %v1275
      %v1277 = vpop.xlane.xlu0 %1276
      %v1278 = vsel %vm730, %v1250, -inf
      %1279 = vmax.xlane.f32.xlu0 %v1278
      %v1280 = vpop.xlane.xlu0 %1279
      %v1281 = vsel %vm730, %v1251, -inf
      %1282 = vmax.xlane.f32.xlu0 %v1281
      %v1283 = vpop.xlane.xlu0 %1282
      %v1284 = vsel %vm730, %v1252, -inf
      %1285 = vmax.xlane.f32.xlu0 %v1284
      %v1286 = vpop.xlane.xlu0 %1285
      %v1287 = vsel %vm730, %v1253, -inf
      %1288 = vmax.xlane.f32.xlu0 %v1287
      %v1289 = vpop.xlane.xlu0 %1288
      %v1290 = vsel %vm730, %v1254, -inf
      %1291 = vmax.xlane.f32.xlu0 %v1290
      %v1292 = vpop.xlane.xlu0 %1291
      %v1293 = vsel %vm730, %v1255, -inf
      %1294 = vmax.xlane.f32.xlu0 %v1293
      %v1295 = vpop.xlane.xlu0 %1294
      %v1296 = vsel %vm730, %v1256, -inf
      %1297 = vmax.xlane.f32.xlu0 %v1296
      %v1298 = vpop.xlane.xlu0 %1297
      %v1299 = vsel %vm730, %v1257, -inf
      %1300 = vmax.xlane.f32.xlu0 %v1299
      %v1301 = vpop.xlane.xlu0 %1300
      %v1302 = vsel %vm730, %v1258, -inf
      %1303 = vmax.xlane.f32.xlu0 %v1302
      %v1304 = vpop.xlane.xlu0 %1303
      %v1305 = vsel %vm730, %v1259, -inf
      %1306 = vmax.xlane.f32.xlu0 %v1305
      %v1307 = vpop.xlane.xlu0 %1306
      %v1308 = vsub.f32 %v1244, %v1262
      %v1309 = vsub.f32 %v1245, %v1265
      %v1310 = vsub.f32 %v1246, %v1268
      %v1311 = vsub.f32 %v1247, %v1271
      %v1312 = vsub.f32 %v1248, %v1274
      %v1313 = vsub.f32 %v1249, %v1277
      %v1314 = vsub.f32 %v1250, %v1280
      %v1315 = vsub.f32 %v1251, %v1283
      %v1316 = vsub.f32 %v1252, %v1286
      %v1317 = vsub.f32 %v1253, %v1289
      %v1318 = vsub.f32 %v1254, %v1292
      %v1319 = vsub.f32 %v1255, %v1295
      %v1320 = vsub.f32 %v1256, %v1298
      %v1321 = vsub.f32 %v1257, %v1301
      %v1322 = vsub.f32 %v1258, %v1304
      %v1323 = vsub.f32 %v1259, %v1307
      %v1324 = vmul.f32 %v1308, 1.442695
      %v1325 = vpow.pop %v1324
      %v1326 = vmul.f32 %v1309, 1.442695
      %v1327 = vpow.pop %v1326
      %v1328 = vmul.f32 %v1310, 1.442695
      %v1329 = vpow.pop %v1328
      %v1330 = vmul.f32 %v1311, 1.442695
      %v1331 = vpow.pop %v1330
      %v1332 = vmul.f32 %v1312, 1.442695
      %v1333 = vpow.pop %v1332
      %v1334 = vmul.f32 %v1313, 1.442695
      %v1335 = vpow.pop %v1334
      %v1336 = vmul.f32 %v1314, 1.442695
      %v1337 = vpow.pop %v1336
      %v1338 = vmul.f32 %v1315, 1.442695
      %v1339 = vpow.pop %v1338
      %v1340 = vmul.f32 %v1316, 1.442695
      %v1341 = vpow.pop %v1340
      %v1342 = vmul.f32 %v1317, 1.442695
      %v1343 = vpow.pop %v1342
      %v1344 = vmul.f32 %v1318, 1.442695
      %v1345 = vpow.pop %v1344
      %v1346 = vmul.f32 %v1319, 1.442695
      %v1347 = vpow.pop %v1346
      %v1348 = vmul.f32 %v1320, 1.442695
      %v1349 = vpow.pop %v1348
      %v1350 = vmul.f32 %v1321, 1.442695
      %v1351 = vpow.pop %v1350
      %v1352 = vmul.f32 %v1322, 1.442695
      %v1353 = vpow.pop %v1352
      %v1354 = vmul.f32 %v1323, 1.442695
      %v1355 = vpow.pop %v1354
      %v1356 = vsel %vm730, %v1325, 0.0
      %1357 = vadd.xlane.f32.xlu0 %v1356
      %v1358 = vpop.xlane.xlu0 %1357
      %v1359 = vsel %vm730, %v1327, 0.0
      %1360 = vadd.xlane.f32.xlu0 %v1359
      %v1361 = vpop.xlane.xlu0 %1360
      %v1362 = vsel %vm730, %v1329, 0.0
      %1363 = vadd.xlane.f32.xlu0 %v1362
      %v1364 = vpop.xlane.xlu0 %1363
      %v1365 = vsel %vm730, %v1331, 0.0
      %1366 = vadd.xlane.f32.xlu0 %v1365
      %v1367 = vpop.xlane.xlu0 %1366
      %v1368 = vsel %vm730, %v1333, 0.0
      %1369 = vadd.xlane.f32.xlu0 %v1368
      %v1370 = vpop.xlane.xlu0 %1369
      %v1371 = vsel %vm730, %v1335, 0.0
      %1372 = vadd.xlane.f32.xlu0 %v1371
      %v1373 = vpop.xlane.xlu0 %1372
      %v1374 = vsel %vm730, %v1337, 0.0
      %1375 = vadd.xlane.f32.xlu0 %v1374
      %v1376 = vpop.xlane.xlu0 %1375
      %v1377 = vsel %vm730, %v1339, 0.0
      %1378 = vadd.xlane.f32.xlu0 %v1377
      %v1379 = vpop.xlane.xlu0 %1378
      %v1380 = vsel %vm730, %v1341, 0.0
      %1381 = vadd.xlane.f32.xlu0 %v1380
      %v1382 = vpop.xlane.xlu0 %1381
      %v1383 = vsel %vm730, %v1343, 0.0
      %1384 = vadd.xlane.f32.xlu0 %v1383
      %v1385 = vpop.xlane.xlu0 %1384
      %v1386 = vsel %vm730, %v1345, 0.0
      %1387 = vadd.xlane.f32.xlu0 %v1386
      %v1388 = vpop.xlane.xlu0 %1387
      %v1389 = vsel %vm730, %v1347, 0.0
      %1390 = vadd.xlane.f32.xlu0 %v1389
      %v1391 = vpop.xlane.xlu0 %1390
      %v1392 = vsel %vm730, %v1349, 0.0
      %1393 = vadd.xlane.f32.xlu0 %v1392
      %v1394 = vpop.xlane.xlu0 %1393
      %v1395 = vsel %vm730, %v1351, 0.0
      %1396 = vadd.xlane.f32.xlu0 %v1395
      %v1397 = vpop.xlane.xlu0 %1396
      %v1398 = vsel %vm730, %v1353, 0.0
      %1399 = vadd.xlane.f32.xlu0 %v1398
      %v1400 = vpop.xlane.xlu0 %1399
      %v1401 = vsel %vm730, %v1355, 0.0
      %1402 = vadd.xlane.f32.xlu0 %v1401
      %v1403 = vpop.xlane.xlu0 %1402
      %v1404 = vrcp.pop %v1358
      %v1405 = vrcp.pop %v1361
      %v1406 = vrcp.pop %v1364
      %v1407 = vrcp.pop %v1367
      %v1408 = vrcp.pop %v1370
      %v1409 = vrcp.pop %v1373
      %v1410 = vrcp.pop %v1376
      %v1411 = vrcp.pop %v1379
      %v1412 = vrcp.pop %v1382
      %v1413 = vrcp.pop %v1385
      %v1414 = vrcp.pop %v1388
      %v1415 = vrcp.pop %v1391
      %v1416 = vrcp.pop %v1394
      %v1417 = vrcp.pop %v1397
      %v1418 = vrcp.pop %v1400
      %v1419 = vrcp.pop %v1403
      %v1420 = vmul.f32 %v1325, %v1404
      %v1421 = vmul.f32 %v1327, %v1405
      %v1422 = vmul.f32 %v1329, %v1406
      %v1423 = vmul.f32 %v1331, %v1407
      %v1424 = vmul.f32 %v1333, %v1408
      %v1425 = vmul.f32 %v1335, %v1409
      %v1426 = vmul.f32 %v1337, %v1410
      %v1427 = vmul.f32 %v1339, %v1411
      %v1428 = vmul.f32 %v1341, %v1412
      %v1429 = vmul.f32 %v1343, %v1413
      %v1430 = vmul.f32 %v1345, %v1414
      %v1431 = vmul.f32 %v1347, %v1415
      %v1432 = vmul.f32 %v1349, %v1416
      %v1433 = vmul.f32 %v1351, %v1417
      %v1434 = vmul.f32 %v1353, %v1418
      %v1435 = vmul.f32 %v1355, %v1419
      %v1436 = vpack.c.bf16 %v1421, %v1420
      %v1437 = vpack.c.bf16 %v1423, %v1422
      %v1438 = vpack.c.bf16 %v1425, %v1424
      %v1439 = vpack.c.bf16 %v1427, %v1426
      %v1440 = vpack.c.bf16 %v1429, %v1428
      %v1441 = vpack.c.bf16 %v1431, %v1430
      %v1442 = vpack.c.bf16 %v1433, %v1432
      %v1443 = vpack.c.bf16 %v1435, %v1434
      %1444 = vrot.lane.b32.xlu0 %v884, 64
      %v1445 = vpop.permute.xlu0 %1444
      %1446 = vrot.lane.b32.xlu0 %v885, 64
      %v1447 = vpop.permute.xlu0 %1446
      %1448 = vrot.lane.b32.xlu0 %v889, 64
      %v1449 = vpop.permute.xlu0 %1448
      %1450 = vrot.lane.b32.xlu0 %v891, 64
      %v1451 = vpop.permute.xlu0 %1450
      %1452 = vrot.lane.b32.xlu0 %v893, 64
      %v1453 = vpop.permute.xlu0 %1452
      %1454 = vrot.lane.b32.xlu0 %v895, 64
      %v1455 = vpop.permute.xlu0 %1454
      %1456 = vrot.lane.b32.xlu0 %v897, 64
      %v1457 = vpop.permute.xlu0 %1456
      %1458 = vrot.lane.b32.xlu0 %v899, 64
      %v1459 = vpop.permute.xlu0 %1458
      %1468 = vxpose.xlu0.c.b16.start [1/8] %v1445, 128
      %1469 = vxpose.xlu0.c.b16.cont [2/8] %v1447, 128
      %1470 = vxpose.xlu0.c.b16.cont [3/8] 0, 128
      %1471 = vxpose.xlu0.c.b16.cont [4/8] 0, 128
      %1472 = vxpose.xlu0.c.b16.cont [5/8] 0, 128
      %1473 = vxpose.xlu0.c.b16.cont [6/8] 0, 128
      %1474 = vxpose.xlu0.c.b16.cont [7/8] 0, 128
      %1475 = vxpose.xlu0.c.b16.end [8/8] 0, 128
      %v1476 = vpop.trf.xlu0
      %v1477 = vpop.trf.xlu0
      %v1478 = vpop.trf.xlu0
      %v1479 = vpop.trf.xlu0
      %v1480 = vpop.trf.xlu0
      %v1481 = vpop.trf.xlu0
      %v1482 = vpop.trf.xlu0
      %v1483 = vpop.trf.xlu0
      %1484 = vxpose.xlu0.c.b16.start [1/8] %v1449, 128
      %1485 = vxpose.xlu0.c.b16.cont [2/8] %v1451, 128
      %1486 = vxpose.xlu0.c.b16.cont [3/8] 0, 128
      %1487 = vxpose.xlu0.c.b16.cont [4/8] 0, 128
      %1488 = vxpose.xlu0.c.b16.cont [5/8] 0, 128
      %1489 = vxpose.xlu0.c.b16.cont [6/8] 0, 128
      %1490 = vxpose.xlu0.c.b16.cont [7/8] 0, 128
      %1491 = vxpose.xlu0.c.b16.end [8/8] 0, 128
      %v1492 = vpop.trf.xlu0
      %v1493 = vpop.trf.xlu0
      %v1494 = vpop.trf.xlu0
      %v1495 = vpop.trf.xlu0
      %v1496 = vpop.trf.xlu0
      %v1497 = vpop.trf.xlu0
      %v1498 = vpop.trf.xlu0
      %v1499 = vpop.trf.xlu0
      %1500 = vxpose.xlu0.c.b16.start [1/8] %v1453, 128
      %1501 = vxpose.xlu0.c.b16.cont [2/8] %v1455, 128
      %1502 = vxpose.xlu0.c.b16.cont [3/8] 0, 128
      %1503 = vxpose.xlu0.c.b16.cont [4/8] 0, 128
      %1504 = vxpose.xlu0.c.b16.cont [5/8] 0, 128
      %1505 = vxpose.xlu0.c.b16.cont [6/8] 0, 128
      %1506 = vxpose.xlu0.c.b16.cont [7/8] 0, 128
      %1507 = vxpose.xlu0.c.b16.end [8/8] 0, 128
      %v1508 = vpop.trf.xlu0
      %v1509 = vpop.trf.xlu0
      %v1510 = vpop.trf.xlu0
      %v1511 = vpop.trf.xlu0
      %v1512 = vpop.trf.xlu0
      %v1513 = vpop.trf.xlu0
      %v1514 = vpop.trf.xlu0
      %v1515 = vpop.trf.xlu0
      %1516 = vxpose.xlu0.c.b16.start [1/8] %v1457, 128
      %1517 = vxpose.xlu0.c.b16.cont [2/8] %v1459, 128
      %1518 = vxpose.xlu0.c.b16.cont [3/8] 0, 128
      %1519 = vxpose.xlu0.c.b16.cont [4/8] 0, 128
      %1520 = vxpose.xlu0.c.b16.cont [5/8] 0, 128
      %1521 = vxpose.xlu0.c.b16.cont [6/8] 0, 128
      %1522 = vxpose.xlu0.c.b16.cont [7/8] 0, 128
      %1523 = vxpose.xlu0.c.b16.end [8/8] 0, 128
      %v1524 = vpop.trf.xlu0
      %v1525 = vpop.trf.xlu0
      %v1526 = vpop.trf.xlu0
      %v1527 = vpop.trf.xlu0
      %v1528 = vpop.trf.xlu0
      %v1529 = vpop.trf.xlu0
      %v1530 = vpop.trf.xlu0
      %v1531 = vpop.trf.xlu0
      %v1533 = vsel %vm730, %v1476, 0
      %v1536 = vsel %vm730, %v1436, 0
      %v1539 = vsel %vm730, %v1437, 0
      %1541 = vmatprep.subr.bf16.mxu0 0
      %1542 = vmatpush1.bf16.xpose.msra.mxu0 0
      %1543 = vmatprep.subr.bf16.mxu0 0
      %1544 = vmatpush1.bf16.xpose.msra.mxu0 0
      %1545 = vmatprep.subr.bf16.mxu0 0
      %1546 = vmatpush1.bf16.xpose.msra.mxu0 0
      %1547 = vmatprep.subr.bf16.mxu0 0
      %1548 = vmatpush1.bf16.xpose.msra.mxu0 0
      %1549 = vmatprep.subr.bf16.mxu0 0
      %1550 = vmatpush1.bf16.xpose.msra.mxu0 0
      %1551 = vmatprep.subr.bf16.mxu0 0
      %1552 = vmatpush1.bf16.xpose.msra.mxu0 0
      %1553 = vmatprep.subr.bf16.mxu0 0
      %1554 = vmatpush1.bf16.xpose.msra.mxu0 %v1539
      %1555 = vmatprep.subr.bf16.mxu0 0
      %1556 = vmatpush1.bf16.xpose.msra.mxu0 %v1536
      %1557 = vmatprep.subr.bf16.mxu0 0
      %1558 = vmatpush2.bf16.xpose.msra.mxu0 0
      %1559 = vmatprep.subr.bf16.mxu0 0
      %1560 = vmatpush2.bf16.xpose.msra.mxu0 0
      %1561 = vmatprep.subr.bf16.mxu0 0
      %1562 = vmatpush2.bf16.xpose.msra.mxu0 0
      %1563 = vmatprep.subr.bf16.mxu0 0
      %1564 = vmatpush2.bf16.xpose.msra.mxu0 0
      %1565 = vmatprep.subr.bf16.mxu0 0
      %1566 = vmatpush2.bf16.xpose.msra.mxu0 0
      %1567 = vmatprep.subr.bf16.mxu0 0
      %1568 = vmatpush2.bf16.xpose.msra.mxu0 0
      %1569 = vmatprep.subr.bf16.mxu0 0
      %1570 = vmatpush2.bf16.xpose.msra.mxu0 0
      %1571 = vmatprep.subr.bf16.mxu0 0
      %1572 = vmatpush2.bf16.xpose.msra.mxu0 0
      %1573 = vmatprep.mubr.bf16.mxu0 0
      %1574 = vmatmul.mubr.bf16.gmra.mxu0 %v1533
      %v1575 = vpop.f32.mrf.mxu0
      %v1576 = vadd.f32 0.0, %v1575
      %v1577 = vpop.f32.mrf.mxu0
      %v1578 = vpop.f32.mrf.mxu0
      %v1579 = vpop.f32.mrf.mxu0
      %1580 = vdwg.mxu0
      %v1582 = vsel %vm730, %v1492, 0
      %v1585 = vsel %vm730, %v1438, 0
      %v1588 = vsel %vm730, %v1439, 0
      %1590 = vmatprep.subr.bf16.mxu0 0
      %1591 = vmatpush1.bf16.xpose.msra.mxu0 0
      %1592 = vmatprep.subr.bf16.mxu0 0
      %1593 = vmatpush1.bf16.xpose.msra.mxu0 0
      %1594 = vmatprep.subr.bf16.mxu0 0
      %1595 = vmatpush1.bf16.xpose.msra.mxu0 0
      %1596 = vmatprep.subr.bf16.mxu0 0
      %1597 = vmatpush1.bf16.xpose.msra.mxu0 0
      %1598 = vmatprep.subr.bf16.mxu0 0
      %1599 = vmatpush1.bf16.xpose.msra.mxu0 0
      %1600 = vmatprep.subr.bf16.mxu0 0
      %1601 = vmatpush1.bf16.xpose.msra.mxu0 0
      %1602 = vmatprep.subr.bf16.mxu0 0
      %1603 = vmatpush1.bf16.xpose.msra.mxu0 %v1588
      %1604 = vmatprep.subr.bf16.mxu0 0
      %1605 = vmatpush1.bf16.xpose.msra.mxu0 %v1585
      %1606 = vmatprep.subr.bf16.mxu0 0
      %1607 = vmatpush2.bf16.xpose.msra.mxu0 0
      %1608 = vmatprep.subr.bf16.mxu0 0
      %1609 = vmatpush2.bf16.xpose.msra.mxu0 0
      %1610 = vmatprep.subr.bf16.mxu0 0
      %1611 = vmatpush2.bf16.xpose.msra.mxu0 0
      %1612 = vmatprep.subr.bf16.mxu0 0
      %1613 = vmatpush2.bf16.xpose.msra.mxu0 0
      %1614 = vmatprep.subr.bf16.mxu0 0
      %1615 = vmatpush2.bf16.xpose.msra.mxu0 0
      %1616 = vmatprep.subr.bf16.mxu0 0
      %1617 = vmatpush2.bf16.xpose.msra.mxu0 0
      %1618 = vmatprep.subr.bf16.mxu0 0
      %1619 = vmatpush2.bf16.xpose.msra.mxu0 0
      %1620 = vmatprep.subr.bf16.mxu0 0
      %1621 = vmatpush2.bf16.xpose.msra.mxu0 0
      %1622 = vmatprep.mubr.bf16.mxu0 0
      %1623 = vmatmul.mubr.bf16.gmra.mxu0 %v1582
      %v1624 = vpop.f32.mrf.mxu0
      %v1625 = vadd.f32 0.0, %v1624
      %v1626 = vpop.f32.mrf.mxu0
      %v1627 = vpop.f32.mrf.mxu0
      %v1628 = vpop.f32.mrf.mxu0
      %1629 = vdwg.mxu0
      %v1631 = vsel %vm730, %v1508, 0
      %v1634 = vsel %vm730, %v1440, 0
      %v1637 = vsel %vm730, %v1441, 0
      %1639 = vmatprep.subr.bf16.mxu0 0
      %1640 = vmatpush1.bf16.xpose.msra.mxu0 0
      %1641 = vmatprep.subr.bf16.mxu0 0
      %1642 = vmatpush1.bf16.xpose.msra.mxu0 0
      %1643 = vmatprep.subr.bf16.mxu0 0
      %1644 = vmatpush1.bf16.xpose.msra.mxu0 0
      %1645 = vmatprep.subr.bf16.mxu0 0
      %1646 = vmatpush1.bf16.xpose.msra.mxu0 0
      %1647 = vmatprep.subr.bf16.mxu0 0
      %1648 = vmatpush1.bf16.xpose.msra.mxu0 0
      %1649 = vmatprep.subr.bf16.mxu0 0
      %1650 = vmatpush1.bf16.xpose.msra.mxu0 0
      %1651 = vmatprep.subr.bf16.mxu0 0
      %1652 = vmatpush1.bf16.xpose.msra.mxu0 %v1637
      %1653 = vmatprep.subr.bf16.mxu0 0
      %1654 = vmatpush1.bf16.xpose.msra.mxu0 %v1634
      %1655 = vmatprep.subr.bf16.mxu0 0
      %1656 = vmatpush2.bf16.xpose.msra.mxu0 0
      %1657 = vmatprep.subr.bf16.mxu0 0
      %1658 = vmatpush2.bf16.xpose.msra.mxu0 0
      %1659 = vmatprep.subr.bf16.mxu0 0
      %1660 = vmatpush2.bf16.xpose.msra.mxu0 0
      %1661 = vmatprep.subr.bf16.mxu0 0
      %1662 = vmatpush2.bf16.xpose.msra.mxu0 0
      %1663 = vmatprep.subr.bf16.mxu0 0
      %1664 = vmatpush2.bf16.xpose.msra.mxu0 0
      %1665 = vmatprep.subr.bf16.mxu0 0
      %1666 = vmatpush2.bf16.xpose.msra.mxu0 0
      %1667 = vmatprep.subr.bf16.mxu0 0
      %1668 = vmatpush2.bf16.xpose.msra.mxu0 0
      %1669 = vmatprep.subr.bf16.mxu0 0
      %1670 = vmatpush2.bf16.xpose.msra.mxu0 0
      %1671 = vmatprep.mubr.bf16.mxu0 0
      %1672 = vmatmul.mubr.bf16.gmra.mxu0 %v1631
      %v1673 = vpop.f32.mrf.mxu0
      %v1674 = vadd.f32 0.0, %v1673
      %v1675 = vpop.f32.mrf.mxu0
      %v1676 = vpop.f32.mrf.mxu0
      %v1677 = vpop.f32.mrf.mxu0
      %1678 = vdwg.mxu0
      %v1680 = vsel %vm730, %v1524, 0
      %v1683 = vsel %vm730, %v1442, 0
      %v1686 = vsel %vm730, %v1443, 0
      %1688 = vmatprep.subr.bf16.mxu0 0
      %1689 = vmatpush1.bf16.xpose.msra.mxu0 0
      %1690 = vmatprep.subr.bf16.mxu0 0
      %1691 = vmatpush1.bf16.xpose.msra.mxu0 0
      %1692 = vmatprep.subr.bf16.mxu0 0
      %1693 = vmatpush1.bf16.xpose.msra.mxu0 0
      %1694 = vmatprep.subr.bf16.mxu0 0
      %1695 = vmatpush1.bf16.xpose.msra.mxu0 0
      %1696 = vmatprep.subr.bf16.mxu0 0
      %1697 = vmatpush1.bf16.xpose.msra.mxu0 0
      %1698 = vmatprep.subr.bf16.mxu0 0
      %1699 = vmatpush1.bf16.xpose.msra.mxu0 0
      %1700 = vmatprep.subr.bf16.mxu0 0
      %1701 = vmatpush1.bf16.xpose.msra.mxu0 %v1686
      %1702 = vmatprep.subr.bf16.mxu0 0
      %1703 = vmatpush1.bf16.xpose.msra.mxu0 %v1683
      %1704 = vmatprep.subr.bf16.mxu0 0
      %1705 = vmatpush2.bf16.xpose.msra.mxu0 0
      %1706 = vmatprep.subr.bf16.mxu0 0
      %1707 = vmatpush2.bf16.xpose.msra.mxu0 0
      %1708 = vmatprep.subr.bf16.mxu0 0
      %1709 = vmatpush2.bf16.xpose.msra.mxu0 0
      %1710 = vmatprep.subr.bf16.mxu0 0
      %1711 = vmatpush2.bf16.xpose.msra.mxu0 0
      %1712 = vmatprep.subr.bf16.mxu0 0
      %1713 = vmatpush2.bf16.xpose.msra.mxu0 0
      %1714 = vmatprep.subr.bf16.mxu0 0
      %1715 = vmatpush2.bf16.xpose.msra.mxu0 0
      %1716 = vmatprep.subr.bf16.mxu0 0
      %1717 = vmatpush2.bf16.xpose.msra.mxu0 0
      %1718 = vmatprep.subr.bf16.mxu0 0
      %1719 = vmatpush2.bf16.xpose.msra.mxu0 0
      %1720 = vmatprep.mubr.bf16.mxu0 0
      %1721 = vmatmul.mubr.bf16.gmra.mxu0 %v1680
      %v1722 = vpop.f32.mrf.mxu0
      %v1723 = vadd.f32 0.0, %v1722
      %v1724 = vpop.f32.mrf.mxu0
      %v1725 = vpop.f32.mrf.mxu0
      %v1726 = vpop.f32.mrf.mxu0
      %1727 = vdwg.mxu0
      %1728 = vxpose.xlu0.b32.start [1/16] %v1576, 128
      %1729 = vxpose.xlu0.b32.cont [2/16] 0.0, 128
      %1730 = vxpose.xlu0.b32.cont [3/16] 0.0, 128
      %1731 = vxpose.xlu0.b32.cont [4/16] 0.0, 128
      %1732 = vxpose.xlu0.b32.cont [5/16] 0.0, 128
      %1733 = vxpose.xlu0.b32.cont [6/16] 0.0, 128
      %1734 = vxpose.xlu0.b32.cont [7/16] 0.0, 128
      %1735 = vxpose.xlu0.b32.cont [8/16] 0.0, 128
      %1736 = vxpose.xlu0.b32.cont [9/16] 0.0, 128
      %1737 = vxpose.xlu0.b32.cont [10/16] 0.0, 128
      %1738 = vxpose.xlu0.b32.cont [11/16] 0.0, 128
      %1739 = vxpose.xlu0.b32.cont [12/16] 0.0, 128
      %1740 = vxpose.xlu0.b32.cont [13/16] 0.0, 128
      %1741 = vxpose.xlu0.b32.cont [14/16] 0.0, 128
      %1742 = vxpose.xlu0.b32.cont [15/16] 0.0, 128
      %1743 = vxpose.xlu0.b32.end [16/16] 0.0, 128
      %v1744 = vpop.trf.xlu0
      %v1745 = vpop.trf.xlu0
      %v1746 = vpop.trf.xlu0
      %v1747 = vpop.trf.xlu0
      %v1748 = vpop.trf.xlu0
      %v1749 = vpop.trf.xlu0
      %v1750 = vpop.trf.xlu0
      %v1751 = vpop.trf.xlu0
      %v1752 = vpop.trf.xlu0
      %v1753 = vpop.trf.xlu0
      %v1754 = vpop.trf.xlu0
      %v1755 = vpop.trf.xlu0
      %v1756 = vpop.trf.xlu0
      %v1757 = vpop.trf.xlu0
      %v1758 = vpop.trf.xlu0
      %v1759 = vpop.trf.xlu0
      %1760 = vxpose.xlu0.b32.start [1/16] %v1625, 128
      %1761 = vxpose.xlu0.b32.cont [2/16] 0.0, 128
      %1762 = vxpose.xlu0.b32.cont [3/16] 0.0, 128
      %1763 = vxpose.xlu0.b32.cont [4/16] 0.0, 128
      %1764 = vxpose.xlu0.b32.cont [5/16] 0.0, 128
      %1765 = vxpose.xlu0.b32.cont [6/16] 0.0, 128
      %1766 = vxpose.xlu0.b32.cont [7/16] 0.0, 128
      %1767 = vxpose.xlu0.b32.cont [8/16] 0.0, 128
      %1768 = vxpose.xlu0.b32.cont [9/16] 0.0, 128
      %1769 = vxpose.xlu0.b32.cont [10/16] 0.0, 128
      %1770 = vxpose.xlu0.b32.cont [11/16] 0.0, 128
      %1771 = vxpose.xlu0.b32.cont [12/16] 0.0, 128
      %1772 = vxpose.xlu0.b32.cont [13/16] 0.0, 128
      %1773 = vxpose.xlu0.b32.cont [14/16] 0.0, 128
      %1774 = vxpose.xlu0.b32.cont [15/16] 0.0, 128
      %1775 = vxpose.xlu0.b32.end [16/16] 0.0, 128
      %v1776 = vpop.trf.xlu0
      %v1777 = vpop.trf.xlu0
      %v1778 = vpop.trf.xlu0
      %v1779 = vpop.trf.xlu0
      %v1780 = vpop.trf.xlu0
      %v1781 = vpop.trf.xlu0
      %v1782 = vpop.trf.xlu0
      %v1783 = vpop.trf.xlu0
      %v1784 = vpop.trf.xlu0
      %v1785 = vpop.trf.xlu0
      %v1786 = vpop.trf.xlu0
      %v1787 = vpop.trf.xlu0
      %v1788 = vpop.trf.xlu0
      %v1789 = vpop.trf.xlu0
      %v1790 = vpop.trf.xlu0
      %v1791 = vpop.trf.xlu0
      %1792 = vxpose.xlu0.b32.start [1/16] %v1674, 128
      %1793 = vxpose.xlu0.b32.cont [2/16] 0.0, 128
      %1794 = vxpose.xlu0.b32.cont [3/16] 0.0, 128
      %1795 = vxpose.xlu0.b32.cont [4/16] 0.0, 128
      %1796 = vxpose.xlu0.b32.cont [5/16] 0.0, 128
      %1797 = vxpose.xlu0.b32.cont [6/16] 0.0, 128
      %1798 = vxpose.xlu0.b32.cont [7/16] 0.0, 128
      %1799 = vxpose.xlu0.b32.cont [8/16] 0.0, 128
      %1800 = vxpose.xlu0.b32.cont [9/16] 0.0, 128
      %1801 = vxpose.xlu0.b32.cont [10/16] 0.0, 128
      %1802 = vxpose.xlu0.b32.cont [11/16] 0.0, 128
      %1803 = vxpose.xlu0.b32.cont [12/16] 0.0, 128
      %1804 = vxpose.xlu0.b32.cont [13/16] 0.0, 128
      %1805 = vxpose.xlu0.b32.cont [14/16] 0.0, 128
      %1806 = vxpose.xlu0.b32.cont [15/16] 0.0, 128
      %1807 = vxpose.xlu0.b32.end [16/16] 0.0, 128
      %v1808 = vpop.trf.xlu0
      %v1809 = vpop.trf.xlu0
      %v1810 = vpop.trf.xlu0
      %v1811 = vpop.trf.xlu0
      %v1812 = vpop.trf.xlu0
      %v1813 = vpop.trf.xlu0
      %v1814 = vpop.trf.xlu0
      %v1815 = vpop.trf.xlu0
      %v1816 = vpop.trf.xlu0
      %v1817 = vpop.trf.xlu0
      %v1818 = vpop.trf.xlu0
      %v1819 = vpop.trf.xlu0
      %v1820 = vpop.trf.xlu0
      %v1821 = vpop.trf.xlu0
      %v1822 = vpop.trf.xlu0
      %v1823 = vpop.trf.xlu0
      %1824 = vxpose.xlu0.b32.start [1/16] %v1723, 128
      %1825 = vxpose.xlu0.b32.cont [2/16] 0.0, 128
      %1826 = vxpose.xlu0.b32.cont [3/16] 0.0, 128
      %1827 = vxpose.xlu0.b32.cont [4/16] 0.0, 128
      %1828 = vxpose.xlu0.b32.cont [5/16] 0.0, 128
      %1829 = vxpose.xlu0.b32.cont [6/16] 0.0, 128
      %1830 = vxpose.xlu0.b32.cont [7/16] 0.0, 128
      %1831 = vxpose.xlu0.b32.cont [8/16] 0.0, 128
      %1832 = vxpose.xlu0.b32.cont [9/16] 0.0, 128
      %1833 = vxpose.xlu0.b32.cont [10/16] 0.0, 128
      %1834 = vxpose.xlu0.b32.cont [11/16] 0.0, 128
      %1835 = vxpose.xlu0.b32.cont [12/16] 0.0, 128
      %1836 = vxpose.xlu0.b32.cont [13/16] 0.0, 128
      %1837 = vxpose.xlu0.b32.cont [14/16] 0.0, 128
      %1838 = vxpose.xlu0.b32.cont [15/16] 0.0, 128
      %1839 = vxpose.xlu0.b32.end [16/16] 0.0, 128
      %v1840 = vpop.trf.xlu0
      %v1841 = vpop.trf.xlu0
      %v1842 = vpop.trf.xlu0
      %v1843 = vpop.trf.xlu0
      %v1844 = vpop.trf.xlu0
      %v1845 = vpop.trf.xlu0
      %v1846 = vpop.trf.xlu0
      %v1847 = vpop.trf.xlu0
      %v1848 = vpop.trf.xlu0
      %v1849 = vpop.trf.xlu0
      %v1850 = vpop.trf.xlu0
      %v1851 = vpop.trf.xlu0
      %v1852 = vpop.trf.xlu0
      %v1853 = vpop.trf.xlu0
      %v1854 = vpop.trf.xlu0
      %v1855 = vpop.trf.xlu0
      %v1856 = vcombine.low %v1744, %v1808
      %v1857 = vcombine.high %v1744, %v1808
      %v1859 = vunpack.c.l.s4 1983009808
      %v1860 = vunpack.c.0.s8 %v1859
      %v1861 = vlaneseq
      %v1862 = vshrl.u32 %v1861, 7
      %v1863 = vsub.s32 %v1860, %v1862
      %v1864 = vrot.slane %v1856, %v1863
      %v1866 = vunpack.c.l.s4 1983009808
      %v1867 = vunpack.c.0.s8 %v1866
      %v1868 = vlaneseq
      %v1869 = vshrl.u32 %v1868, 7
      %v1870 = vsub.s32 %v1867, %v1869
      %v1871 = vrot.slane %v1857, %v1870
      %v1872 = vcombine.low %v1776, %v1840
      %v1873 = vcombine.high %v1776, %v1840
      %v1875 = vunpack.c.l.s4 1983009808
      %v1876 = vunpack.c.0.s8 %v1875
      %v1877 = vlaneseq
      %v1878 = vshrl.u32 %v1877, 7
      %v1879 = vsub.s32 %v1876, %v1878
      %v1880 = vrot.slane %v1872, %v1879
      %v1882 = vunpack.c.l.s4 1983009808
      %v1883 = vunpack.c.0.s8 %v1882
      %v1884 = vlaneseq
      %v1885 = vshrl.u32 %v1884, 7
      %v1886 = vsub.s32 %v1883, %v1885
      %v1887 = vrot.slane %v1873, %v1886
      %v1888 = vcombine.low %v1864, %v1880
      %v1889 = vcombine.high %v1864, %v1880
      %v1891 = vunpack.c.l.s4 1934713408
      %v1892 = vunpack.c.0.s8 %v1891
      %v1893 = vlaneseq
      %v1894 = vshrl.u32 %v1893, 7
      %v1895 = vsub.s32 %v1892, %v1894
      %v1896 = vrot.slane %v1888, %v1895
      %v1898 = vunpack.c.l.s4 1934713408
      %v1899 = vunpack.c.0.s8 %v1898
      %v1900 = vlaneseq
      %v1901 = vshrl.u32 %v1900, 7
      %v1902 = vsub.s32 %v1899, %v1901
      %v1903 = vrot.slane %v1889, %v1902
      %v1904 = vcombine.low %v1871, %v1887
      %v1905 = vcombine.high %v1871, %v1887
      %v1907 = vunpack.c.l.s4 1934713408
      %v1908 = vunpack.c.0.s8 %v1907
      %v1909 = vlaneseq
      %v1910 = vshrl.u32 %v1909, 7
      %v1911 = vsub.s32 %v1908, %v1910
      %v1912 = vrot.slane %v1904, %v1911
      %v1914 = vunpack.c.l.s4 1934713408
      %v1915 = vunpack.c.0.s8 %v1914
      %v1916 = vlaneseq
      %v1917 = vshrl.u32 %v1916, 7
      %v1918 = vsub.s32 %v1915, %v1917
      %v1919 = vrot.slane %v1905, %v1918
      %v1920 = vcombine.high %v1896, 0.0
      %v1921 = vcombine.high %v1903, 0.0
      %v1922 = vcombine.high %v1912, 0.0
      %v1923 = vcombine.high %v1919, 0.0
      %v1924 = vcombine.low %v1745, %v1809
      %v1925 = vcombine.high %v1745, %v1809
      %v1927 = vunpack.c.l.s4 1983009808
      %v1928 = vunpack.c.0.s8 %v1927
      %v1929 = vlaneseq
      %v1930 = vshrl.u32 %v1929, 7
      %v1931 = vsub.s32 %v1928, %v1930
      %v1932 = vrot.slane %v1924, %v1931
      %v1934 = vunpack.c.l.s4 1983009808
      %v1935 = vunpack.c.0.s8 %v1934
      %v1936 = vlaneseq
      %v1937 = vshrl.u32 %v1936, 7
      %v1938 = vsub.s32 %v1935, %v1937
      %v1939 = vrot.slane %v1925, %v1938
      %v1940 = vcombine.low %v1777, %v1841
      %v1941 = vcombine.high %v1777, %v1841
      %v1943 = vunpack.c.l.s4 1983009808
      %v1944 = vunpack.c.0.s8 %v1943
      %v1945 = vlaneseq
      %v1946 = vshrl.u32 %v1945, 7
      %v1947 = vsub.s32 %v1944, %v1946
      %v1948 = vrot.slane %v1940, %v1947
      %v1950 = vunpack.c.l.s4 1983009808
      %v1951 = vunpack.c.0.s8 %v1950
      %v1952 = vlaneseq
      %v1953 = vshrl.u32 %v1952, 7
      %v1954 = vsub.s32 %v1951, %v1953
      %v1955 = vrot.slane %v1941, %v1954
      %v1956 = vcombine.low %v1932, %v1948
      %v1957 = vcombine.high %v1932, %v1948
      %v1959 = vunpack.c.l.s4 1934713408
      %v1960 = vunpack.c.0.s8 %v1959
      %v1961 = vlaneseq
      %v1962 = vshrl.u32 %v1961, 7
      %v1963 = vsub.s32 %v1960, %v1962
      %v1964 = vrot.slane %v1956, %v1963
      %v1966 = vunpack.c.l.s4 1934713408
      %v1967 = vunpack.c.0.s8 %v1966
      %v1968 = vlaneseq
      %v1969 = vshrl.u32 %v1968, 7
      %v1970 = vsub.s32 %v1967, %v1969
      %v1971 = vrot.slane %v1957, %v1970
      %v1972 = vcombine.low %v1939, %v1955
      %v1973 = vcombine.high %v1939, %v1955
      %v1975 = vunpack.c.l.s4 1934713408
      %v1976 = vunpack.c.0.s8 %v1975
      %v1977 = vlaneseq
      %v1978 = vshrl.u32 %v1977, 7
      %v1979 = vsub.s32 %v1976, %v1978
      %v1980 = vrot.slane %v1972, %v1979
      %v1982 = vunpack.c.l.s4 1934713408
      %v1983 = vunpack.c.0.s8 %v1982
      %v1984 = vlaneseq
      %v1985 = vshrl.u32 %v1984, 7
      %v1986 = vsub.s32 %v1983, %v1985
      %v1987 = vrot.slane %v1973, %v1986
      %v1988 = vcombine.high %v1964, 0.0
      %v1989 = vcombine.high %v1971, 0.0
      %v1990 = vcombine.high %v1980, 0.0
      %v1991 = vcombine.high %v1987, 0.0
      %v1992 = vcombine.low %v1746, %v1810
      %v1993 = vcombine.high %v1746, %v1810
      %v1995 = vunpack.c.l.s4 1983009808
      %v1996 = vunpack.c.0.s8 %v1995
      %v1997 = vlaneseq
      %v1998 = vshrl.u32 %v1997, 7
      %v1999 = vsub.s32 %v1996, %v1998
      %v2000 = vrot.slane %v1992, %v1999
      %v2002 = vunpack.c.l.s4 1983009808
      %v2003 = vunpack.c.0.s8 %v2002
      %v2004 = vlaneseq
      %v2005 = vshrl.u32 %v2004, 7
      %v2006 = vsub.s32 %v2003, %v2005
      %v2007 = vrot.slane %v1993, %v2006
      %v2008 = vcombine.low %v1778, %v1842
      %v2009 = vcombine.high %v1778, %v1842
      %v2011 = vunpack.c.l.s4 1983009808
      %v2012 = vunpack.c.0.s8 %v2011
      %v2013 = vlaneseq
      %v2014 = vshrl.u32 %v2013, 7
      %v2015 = vsub.s32 %v2012, %v2014
      %v2016 = vrot.slane %v2008, %v2015
      %v2018 = vunpack.c.l.s4 1983009808
      %v2019 = vunpack.c.0.s8 %v2018
      %v2020 = vlaneseq
      %v2021 = vshrl.u32 %v2020, 7
      %v2022 = vsub.s32 %v2019, %v2021
      %v2023 = vrot.slane %v2009, %v2022
      %v2024 = vcombine.low %v2000, %v2016
      %v2025 = vcombine.high %v2000, %v2016
      %v2027 = vunpack.c.l.s4 1934713408
      %v2028 = vunpack.c.0.s8 %v2027
      %v2029 = vlaneseq
      %v2030 = vshrl.u32 %v2029, 7
      %v2031 = vsub.s32 %v2028, %v2030
      %v2032 = vrot.slane %v2024, %v2031
      %v2034 = vunpack.c.l.s4 1934713408
      %v2035 = vunpack.c.0.s8 %v2034
      %v2036 = vlaneseq
      %v2037 = vshrl.u32 %v2036, 7
      %v2038 = vsub.s32 %v2035, %v2037
      %v2039 = vrot.slane %v2025, %v2038
      %v2040 = vcombine.low %v2007, %v2023
      %v2041 = vcombine.high %v2007, %v2023
      %v2043 = vunpack.c.l.s4 1934713408
      %v2044 = vunpack.c.0.s8 %v2043
      %v2045 = vlaneseq
      %v2046 = vshrl.u32 %v2045, 7
      %v2047 = vsub.s32 %v2044, %v2046
      %v2048 = vrot.slane %v2040, %v2047
      %v2050 = vunpack.c.l.s4 1934713408
      %v2051 = vunpack.c.0.s8 %v2050
      %v2052 = vlaneseq
      %v2053 = vshrl.u32 %v2052, 7
      %v2054 = vsub.s32 %v2051, %v2053
      %v2055 = vrot.slane %v2041, %v2054
      %v2056 = vcombine.high %v2032, 0.0
      %v2057 = vcombine.high %v2039, 0.0
      %v2058 = vcombine.high %v2048, 0.0
      %v2059 = vcombine.high %v2055, 0.0
      %v2060 = vcombine.low %v1747, %v1811
      %v2061 = vcombine.high %v1747, %v1811
      %v2063 = vunpack.c.l.s4 1983009808
      %v2064 = vunpack.c.0.s8 %v2063
      %v2065 = vlaneseq
      %v2066 = vshrl.u32 %v2065, 7
      %v2067 = vsub.s32 %v2064, %v2066
      %v2068 = vrot.slane %v2060, %v2067
      %v2070 = vunpack.c.l.s4 1983009808
      %v2071 = vunpack.c.0.s8 %v2070
      %v2072 = vlaneseq
      %v2073 = vshrl.u32 %v2072, 7
      %v2074 = vsub.s32 %v2071, %v2073
      %v2075 = vrot.slane %v2061, %v2074
      %v2076 = vcombine.low %v1779, %v1843
      %v2077 = vcombine.high %v1779, %v1843
      %v2079 = vunpack.c.l.s4 1983009808
      %v2080 = vunpack.c.0.s8 %v2079
      %v2081 = vlaneseq
      %v2082 = vshrl.u32 %v2081, 7
      %v2083 = vsub.s32 %v2080, %v2082
      %v2084 = vrot.slane %v2076, %v2083
      %v2086 = vunpack.c.l.s4 1983009808
      %v2087 = vunpack.c.0.s8 %v2086
      %v2088 = vlaneseq
      %v2089 = vshrl.u32 %v2088, 7
      %v2090 = vsub.s32 %v2087, %v2089
      %v2091 = vrot.slane %v2077, %v2090
      %v2092 = vcombine.low %v2068, %v2084
      %v2093 = vcombine.high %v2068, %v2084
      %v2095 = vunpack.c.l.s4 1934713408
      %v2096 = vunpack.c.0.s8 %v2095
      %v2097 = vlaneseq
      %v2098 = vshrl.u32 %v2097, 7
      %v2099 = vsub.s32 %v2096, %v2098
      %v2100 = vrot.slane %v2092, %v2099
      %v2102 = vunpack.c.l.s4 1934713408
      %v2103 = vunpack.c.0.s8 %v2102
      %v2104 = vlaneseq
      %v2105 = vshrl.u32 %v2104, 7
      %v2106 = vsub.s32 %v2103, %v2105
      %v2107 = vrot.slane %v2093, %v2106
      %v2108 = vcombine.low %v2075, %v2091
      %v2109 = vcombine.high %v2075, %v2091
      %v2111 = vunpack.c.l.s4 1934713408
      %v2112 = vunpack.c.0.s8 %v2111
      %v2113 = vlaneseq
      %v2114 = vshrl.u32 %v2113, 7
      %v2115 = vsub.s32 %v2112, %v2114
      %v2116 = vrot.slane %v2108, %v2115
      %v2118 = vunpack.c.l.s4 1934713408
      %v2119 = vunpack.c.0.s8 %v2118
      %v2120 = vlaneseq
      %v2121 = vshrl.u32 %v2120, 7
      %v2122 = vsub.s32 %v2119, %v2121
      %v2123 = vrot.slane %v2109, %v2122
      %v2124 = vcombine.high %v2100, 0.0
      %v2125 = vcombine.high %v2107, 0.0
      %v2126 = vcombine.high %v2116, 0.0
      %v2127 = vcombine.high %v2123, 0.0
      %v2128 = vcombine.low %v1896, %v1903
      %v2130 = vunpack.c.l.s4 1983009808
      %v2131 = vunpack.c.0.s8 %v2130
      %v2132 = vlaneseq
      %v2133 = vshrl.u32 %v2132, 7
      %v2134 = vsub.s32 %v2131, %v2133
      %v2135 = vrot.slane %v2128, %v2134
      %v2136 = vcombine.low %v1920, %v1921
      %v2138 = vunpack.c.l.s4 1983009808
      %v2139 = vunpack.c.0.s8 %v2138
      %v2140 = vlaneseq
      %v2141 = vshrl.u32 %v2140, 7
      %v2142 = vsub.s32 %v2139, %v2141
      %v2143 = vrot.slane %v2136, %v2142
      %v2144 = vcombine.low %v1912, %v1919
      %v2146 = vunpack.c.l.s4 1983009808
      %v2147 = vunpack.c.0.s8 %v2146
      %v2148 = vlaneseq
      %v2149 = vshrl.u32 %v2148, 7
      %v2150 = vsub.s32 %v2147, %v2149
      %v2151 = vrot.slane %v2144, %v2150
      %v2152 = vcombine.low %v1922, %v1923
      %v2154 = vunpack.c.l.s4 1983009808
      %v2155 = vunpack.c.0.s8 %v2154
      %v2156 = vlaneseq
      %v2157 = vshrl.u32 %v2156, 7
      %v2158 = vsub.s32 %v2155, %v2157
      %v2159 = vrot.slane %v2152, %v2158
      %v2160 = vcombine.low %v2135, %v2143
      %v2161 = vcombine.high %v2135, %v2143
      %v2163 = vunpack.c.l.s4 1934713408
      %v2164 = vunpack.c.0.s8 %v2163
      %v2165 = vlaneseq
      %v2166 = vshrl.u32 %v2165, 7
      %v2167 = vsub.s32 %v2164, %v2166
      %v2168 = vrot.slane %v2160, %v2167
      %v2170 = vunpack.c.l.s4 1934713408
      %v2171 = vunpack.c.0.s8 %v2170
      %v2172 = vlaneseq
      %v2173 = vshrl.u32 %v2172, 7
      %v2174 = vsub.s32 %v2171, %v2173
      %v2175 = vrot.slane %v2161, %v2174
      %v2176 = vcombine.low %v2151, %v2159
      %v2177 = vcombine.high %v2151, %v2159
      %v2179 = vunpack.c.l.s4 1934713408
      %v2180 = vunpack.c.0.s8 %v2179
      %v2181 = vlaneseq
      %v2182 = vshrl.u32 %v2181, 7
      %v2183 = vsub.s32 %v2180, %v2182
      %v2184 = vrot.slane %v2176, %v2183
      %v2186 = vunpack.c.l.s4 1934713408
      %v2187 = vunpack.c.0.s8 %v2186
      %v2188 = vlaneseq
      %v2189 = vshrl.u32 %v2188, 7
      %v2190 = vsub.s32 %v2187, %v2189
      %v2191 = vrot.slane %v2177, %v2190
      %v2192 = vcombine.low %v2168, %v2184
      %v2193 = vcombine.high %v2168, %v2184
      %v2194 = vcombine.low %v2175, %v2191
      %v2195 = vcombine.high %v2175, %v2191
      %v2196 = vcombine.low %v1964, %v1971
      %v2198 = vunpack.c.l.s4 1983009808
      %v2199 = vunpack.c.0.s8 %v2198
      %v2200 = vlaneseq
      %v2201 = vshrl.u32 %v2200, 7
      %v2202 = vsub.s32 %v2199, %v2201
      %v2203 = vrot.slane %v2196, %v2202
      %v2204 = vcombine.low %v1988, %v1989
      %v2206 = vunpack.c.l.s4 1983009808
      %v2207 = vunpack.c.0.s8 %v2206
      %v2208 = vlaneseq
      %v2209 = vshrl.u32 %v2208, 7
      %v2210 = vsub.s32 %v2207, %v2209
      %v2211 = vrot.slane %v2204, %v2210
      %v2212 = vcombine.low %v1980, %v1987
      %v2214 = vunpack.c.l.s4 1983009808
      %v2215 = vunpack.c.0.s8 %v2214
      %v2216 = vlaneseq
      %v2217 = vshrl.u32 %v2216, 7
      %v2218 = vsub.s32 %v2215, %v2217
      %v2219 = vrot.slane %v2212, %v2218
      %v2220 = vcombine.low %v1990, %v1991
      %v2222 = vunpack.c.l.s4 1983009808
      %v2223 = vunpack.c.0.s8 %v2222
      %v2224 = vlaneseq
      %v2225 = vshrl.u32 %v2224, 7
      %v2226 = vsub.s32 %v2223, %v2225
      %v2227 = vrot.slane %v2220, %v2226
      %v2228 = vcombine.low %v2203, %v2211
      %v2229 = vcombine.high %v2203, %v2211
      %v2231 = vunpack.c.l.s4 1934713408
      %v2232 = vunpack.c.0.s8 %v2231
      %v2233 = vlaneseq
      %v2234 = vshrl.u32 %v2233, 7
      %v2235 = vsub.s32 %v2232, %v2234
      %v2236 = vrot.slane %v2228, %v2235
      %v2238 = vunpack.c.l.s4 1934713408
      %v2239 = vunpack.c.0.s8 %v2238
      %v2240 = vlaneseq
      %v2241 = vshrl.u32 %v2240, 7
      %v2242 = vsub.s32 %v2239, %v2241
      %v2243 = vrot.slane %v2229, %v2242
      %v2244 = vcombine.low %v2219, %v2227
      %v2245 = vcombine.high %v2219, %v2227
      %v2247 = vunpack.c.l.s4 1934713408
      %v2248 = vunpack.c.0.s8 %v2247
      %v2249 = vlaneseq
      %v2250 = vshrl.u32 %v2249, 7
      %v2251 = vsub.s32 %v2248, %v2250
      %v2252 = vrot.slane %v2244, %v2251
      %v2254 = vunpack.c.l.s4 1934713408
      %v2255 = vunpack.c.0.s8 %v2254
      %v2256 = vlaneseq
      %v2257 = vshrl.u32 %v2256, 7
      %v2258 = vsub.s32 %v2255, %v2257
      %v2259 = vrot.slane %v2245, %v2258
      %v2260 = vcombine.low %v2236, %v2252
      %v2261 = vcombine.high %v2236, %v2252
      %v2262 = vcombine.low %v2243, %v2259
      %v2263 = vcombine.high %v2243, %v2259
      %v2264 = vcombine.low %v2032, %v2039
      %v2266 = vunpack.c.l.s4 1983009808
      %v2267 = vunpack.c.0.s8 %v2266
      %v2268 = vlaneseq
      %v2269 = vshrl.u32 %v2268, 7
      %v2270 = vsub.s32 %v2267, %v2269
      %v2271 = vrot.slane %v2264, %v2270
      %v2272 = vcombine.low %v2056, %v2057
      %v2274 = vunpack.c.l.s4 1983009808
      %v2275 = vunpack.c.0.s8 %v2274
      %v2276 = vlaneseq
      %v2277 = vshrl.u32 %v2276, 7
      %v2278 = vsub.s32 %v2275, %v2277
      %v2279 = vrot.slane %v2272, %v2278
      %v2280 = vcombine.low %v2048, %v2055
      %v2282 = vunpack.c.l.s4 1983009808
      %v2283 = vunpack.c.0.s8 %v2282
      %v2284 = vlaneseq
      %v2285 = vshrl.u32 %v2284, 7
      %v2286 = vsub.s32 %v2283, %v2285
      %v2287 = vrot.slane %v2280, %v2286
      %v2288 = vcombine.low %v2058, %v2059
      %v2290 = vunpack.c.l.s4 1983009808
      %v2291 = vunpack.c.0.s8 %v2290
      %v2292 = vlaneseq
      %v2293 = vshrl.u32 %v2292, 7
      %v2294 = vsub.s32 %v2291, %v2293
      %v2295 = vrot.slane %v2288, %v2294
      %v2296 = vcombine.low %v2271, %v2279
      %v2297 = vcombine.high %v2271, %v2279
      %v2299 = vunpack.c.l.s4 1934713408
      %v2300 = vunpack.c.0.s8 %v2299
      %v2301 = vlaneseq
      %v2302 = vshrl.u32 %v2301, 7
      %v2303 = vsub.s32 %v2300, %v2302
      %v2304 = vrot.slane %v2296, %v2303
      %v2306 = vunpack.c.l.s4 1934713408
      %v2307 = vunpack.c.0.s8 %v2306
      %v2308 = vlaneseq
      %v2309 = vshrl.u32 %v2308, 7
      %v2310 = vsub.s32 %v2307, %v2309
      %v2311 = vrot.slane %v2297, %v2310
      %v2312 = vcombine.low %v2287, %v2295
      %v2313 = vcombine.high %v2287, %v2295
      %v2315 = vunpack.c.l.s4 1934713408
      %v2316 = vunpack.c.0.s8 %v2315
      %v2317 = vlaneseq
      %v2318 = vshrl.u32 %v2317, 7
      %v2319 = vsub.s32 %v2316, %v2318
      %v2320 = vrot.slane %v2312, %v2319
      %v2322 = vunpack.c.l.s4 1934713408
      %v2323 = vunpack.c.0.s8 %v2322
      %v2324 = vlaneseq
      %v2325 = vshrl.u32 %v2324, 7
      %v2326 = vsub.s32 %v2323, %v2325
      %v2327 = vrot.slane %v2313, %v2326
      %v2328 = vcombine.low %v2304, %v2320
      %v2329 = vcombine.high %v2304, %v2320
      %v2330 = vcombine.low %v2311, %v2327
      %v2331 = vcombine.high %v2311, %v2327
      %v2332 = vcombine.low %v2100, %v2107
      %v2334 = vunpack.c.l.s4 1983009808
      %v2335 = vunpack.c.0.s8 %v2334
      %v2336 = vlaneseq
      %v2337 = vshrl.u32 %v2336, 7
      %v2338 = vsub.s32 %v2335, %v2337
      %v2339 = vrot.slane %v2332, %v2338
      %v2340 = vcombine.low %v2124, %v2125
      %v2342 = vunpack.c.l.s4 1983009808
      %v2343 = vunpack.c.0.s8 %v2342
      %v2344 = vlaneseq
      %v2345 = vshrl.u32 %v2344, 7
      %v2346 = vsub.s32 %v2343, %v2345
      %v2347 = vrot.slane %v2340, %v2346
      %v2348 = vcombine.low %v2116, %v2123
      %v2350 = vunpack.c.l.s4 1983009808
      %v2351 = vunpack.c.0.s8 %v2350
      %v2352 = vlaneseq
      %v2353 = vshrl.u32 %v2352, 7
      %v2354 = vsub.s32 %v2351, %v2353
      %v2355 = vrot.slane %v2348, %v2354
      %v2356 = vcombine.low %v2126, %v2127
      %v2358 = vunpack.c.l.s4 1983009808
      %v2359 = vunpack.c.0.s8 %v2358
      %v2360 = vlaneseq
      %v2361 = vshrl.u32 %v2360, 7
      %v2362 = vsub.s32 %v2359, %v2361
      %v2363 = vrot.slane %v2356, %v2362
      %v2364 = vcombine.low %v2339, %v2347
      %v2365 = vcombine.high %v2339, %v2347
      %v2367 = vunpack.c.l.s4 1934713408
      %v2368 = vunpack.c.0.s8 %v2367
      %v2369 = vlaneseq
      %v2370 = vshrl.u32 %v2369, 7
      %v2371 = vsub.s32 %v2368, %v2370
      %v2372 = vrot.slane %v2364, %v2371
      %v2374 = vunpack.c.l.s4 1934713408
      %v2375 = vunpack.c.0.s8 %v2374
      %v2376 = vlaneseq
      %v2377 = vshrl.u32 %v2376, 7
      %v2378 = vsub.s32 %v2375, %v2377
      %v2379 = vrot.slane %v2365, %v2378
      %v2380 = vcombine.low %v2355, %v2363
      %v2381 = vcombine.high %v2355, %v2363
      %v2383 = vunpack.c.l.s4 1934713408
      %v2384 = vunpack.c.0.s8 %v2383
      %v2385 = vlaneseq
      %v2386 = vshrl.u32 %v2385, 7
      %v2387 = vsub.s32 %v2384, %v2386
      %v2388 = vrot.slane %v2380, %v2387
      %v2390 = vunpack.c.l.s4 1934713408
      %v2391 = vunpack.c.0.s8 %v2390
      %v2392 = vlaneseq
      %v2393 = vshrl.u32 %v2392, 7
      %v2394 = vsub.s32 %v2391, %v2393
      %v2395 = vrot.slane %v2381, %v2394
      %v2396 = vcombine.low %v2372, %v2388
      %v2397 = vcombine.high %v2372, %v2388
      %v2398 = vcombine.low %v2379, %v2395
      %v2399 = vcombine.high %v2379, %v2395
      %2404 = vrot.lane.b32.xlu0 %v2193, 8
      %v2405 = vpop.permute.xlu0 %2404
      %2406 = vrot.lane.b32.xlu0 %v2261, 8
      %v2407 = vpop.permute.xlu0 %2406
      %2408 = vrot.lane.b32.xlu0 %v2329, 8
      %v2409 = vpop.permute.xlu0 %2408
      %2410 = vrot.lane.b32.xlu0 %v2397, 8
      %v2411 = vpop.permute.xlu0 %2410
      %2420 = vrot.lane.b32.xlu0 %v2194, 16
      %v2421 = vpop.permute.xlu0 %2420
      %2422 = vrot.lane.b32.xlu0 %v2262, 16
      %v2423 = vpop.permute.xlu0 %2422
      %2424 = vrot.lane.b32.xlu0 %v2330, 16
      %v2425 = vpop.permute.xlu0 %2424
      %2426 = vrot.lane.b32.xlu0 %v2398, 16
      %v2427 = vpop.permute.xlu0 %2426
      %2436 = vrot.lane.b32.xlu0 %v2195, 24
      %v2437 = vpop.permute.xlu0 %2436
      %2438 = vrot.lane.b32.xlu0 %v2263, 24
      %v2439 = vpop.permute.xlu0 %2438
      %2440 = vrot.lane.b32.xlu0 %v2331, 24
      %v2441 = vpop.permute.xlu0 %2440
      %2442 = vrot.lane.b32.xlu0 %v2399, 24
      %v2443 = vpop.permute.xlu0 %2442
      %v2448 = vsel %vm988, %v2192, %v2405
      %v2449 = vsel %vm988, %v2260, %v2407
      %v2450 = vsel %vm988, %v2328, %v2409
      %v2451 = vsel %vm988, %v2396, %v2411
      %vm2452 = vcmask 130048
      %v2453 = vsel %vm2452, %v2448, %v2421
      %v2454 = vsel %vm2452, %v2449, %v2423
      %v2455 = vsel %vm2452, %v2450, %v2425
      %v2456 = vsel %vm2452, %v2451, %v2427
      %vm2457 = vcmask 195584
      %v2458 = vsel %vm2457, %v2453, %v2437
      %v2459 = vsel %vm2457, %v2454, %v2439
      %v2460 = vsel %vm2457, %v2455, %v2441
      %v2461 = vsel %vm2457, %v2456, %v2443
      %v2462 = vld [vmem:[%s8] sm:$0xf]
      %v2463 = vld [vmem:[%s8 + $0x4] sm:$0xf]
      %v2464 = vld [vmem:[%s8 + $0x8] sm:$0xf]
      %v2465 = vld [vmem:[%s8 + $0xc] sm:$0xf]
      %v2466 = vpack.c.bf16 %v2459, %v2458
      %v2467 = vpack.c.bf16 %v2461, %v2460
      %v2472 = vunpack.c.l.b16 %v2462
      %v2473 = vunpack.c.l.b16 %v2463
      %v2474 = vunpack.c.l.b16 %v2464
      %v2475 = vunpack.c.l.b16 %v2465
      %v2476 = vpack.c.b16 %v2473, %v2472
      %v2477 = vpack.c.b16 %v2475, %v2474
      %v2481 = vsel %vm730, %v2466, 0
      %v2484 = vsel %vm730, %v2467, 0
      %2486 = vmatprep.subr.bf16.mxu0 0
      %2487 = vmatpush1.bf16.msra.mxu0 0
      %2488 = vmatprep.subr.bf16.mxu0 0
      %2489 = vmatpush1.bf16.msra.mxu0 0
      %2490 = vmatprep.subr.bf16.mxu0 0
      %2491 = vmatpush1.bf16.msra.mxu0 0
      %2492 = vmatprep.subr.bf16.mxu0 0
      %2493 = vmatpush1.bf16.msra.mxu0 0
      %2494 = vmatprep.subr.bf16.mxu0 0
      %2495 = vmatpush1.bf16.msra.mxu0 0
      %2496 = vmatprep.subr.bf16.mxu0 0
      %2497 = vmatpush1.bf16.msra.mxu0 0
      %2498 = vmatprep.subr.bf16.mxu0 0
      %2499 = vmatpush1.bf16.msra.mxu0 %v2477
      %2500 = vmatprep.subr.bf16.mxu0 0
      %2501 = vmatpush1.bf16.msra.mxu0 %v2476
      %2502 = vmatprep.subr.bf16.mxu0 0
      %2503 = vmatpush2.bf16.msra.mxu0 0
      %2504 = vmatprep.subr.bf16.mxu0 0
      %2505 = vmatpush2.bf16.msra.mxu0 0
      %2506 = vmatprep.subr.bf16.mxu0 0
      %2507 = vmatpush2.bf16.msra.mxu0 0
      %2508 = vmatprep.subr.bf16.mxu0 0
      %2509 = vmatpush2.bf16.msra.mxu0 0
      %2510 = vmatprep.subr.bf16.mxu0 0
      %2511 = vmatpush2.bf16.msra.mxu0 0
      %2512 = vmatprep.subr.bf16.mxu0 0
      %2513 = vmatpush2.bf16.msra.mxu0 0
      %2514 = vmatprep.subr.bf16.mxu0 0
      %2515 = vmatpush2.bf16.msra.mxu0 0
      %2516 = vmatprep.subr.bf16.mxu0 0
      %2517 = vmatpush2.bf16.msra.mxu0 0
      %2518 = vmatprep.mubr.bf16.mxu0 0
      %2519 = vmatmul.mubr.bf16.gmra.mxu0 %v2481
      %v2520 = vpop.f32.mrf.mxu0
      %v2521 = vadd.f32 0.0, %v2520
      %v2522 = vpop.f32.mrf.mxu0
      %v2523 = vpop.f32.mrf.mxu0
      %v2524 = vadd.f32 0.0, %v2523
      %v2525 = vpop.f32.mrf.mxu0
      %2526 = vmatprep.mubr.bf16.mxu0 0
      %2527 = vmatmul.mubr.bf16.gmra.mxu0 %v2484
      %v2528 = vpop.f32.mrf.mxu0
      %v2529 = vadd.f32 0.0, %v2528
      %v2530 = vpop.f32.mrf.mxu0
      %v2531 = vpop.f32.mrf.mxu0
      %v2532 = vadd.f32 0.0, %v2531
      %v2533 = vpop.f32.mrf.mxu0
      %2534 = vdwg.mxu0
      %v2535 = vadd.f32 %v713, %v2521
      %v2536 = vadd.f32 %v716, %v2524
      %v2537 = vadd.f32 %v721, %v2529
      %v2538 = vadd.f32 %v724, %v2532
      %v2539 = vld [vmem:[%s9] sm:$0x1]
      %v2541 = vlaneseq
      %v2542 = vshrl.u32 %v2541, 7
      %v2543 = vsub.s32 0, %v2542
      %v2544 = vrot.slane %v2539, %v2543
      %v2546 = vadd.f32 %v2535, %v2544
      %v2547 = vadd.f32 %v2536, %v2544
      %v2548 = vadd.f32 %v2537, %v2544
      %v2549 = vadd.f32 %v2538, %v2544
      %v2550 = vld [vmem:[%s10] sm:$0x1]
      %v2551 = vld [vmem:[%s11] sm:$0x1]
      %v2552 = vsel %vm730, %v2546, 0.0
      %2553 = vadd.xlane.f32.xlu0 %v2552
      %v2554 = vpop.xlane.xlu0 %2553
      %v2555 = vsel %vm730, %v2547, 0.0
      %2556 = vadd.xlane.f32.xlu0 %v2555
      %v2557 = vpop.xlane.xlu0 %2556
      %v2558 = vsel %vm730, %v2548, 0.0
      %2559 = vadd.xlane.f32.xlu0 %v2558
      %v2560 = vpop.xlane.xlu0 %2559
      %v2561 = vsel %vm730, %v2549, 0.0
      %2562 = vadd.xlane.f32.xlu0 %v2561
      %v2563 = vpop.xlane.xlu0 %2562
      %v2564 = vmul.f32 %v2554, %v743
      %v2565 = vmul.f32 %v2557, %v743
      %v2566 = vmul.f32 %v2560, %v743
      %v2567 = vmul.f32 %v2563, %v743
      %v2568 = vsub.f32 %v2546, %v2564
      %v2569 = vsub.f32 %v2547, %v2565
      %v2570 = vsub.f32 %v2548, %v2566
      %v2571 = vsub.f32 %v2549, %v2567
      %v2572 = vmul.f32 %v2568, %v2568
      %v2573 = vmul.f32 %v2569, %v2569
      %v2574 = vmul.f32 %v2570, %v2570
      %v2575 = vmul.f32 %v2571, %v2571
      %v2576 = vsel %vm730, %v2572, 0.0
      %2577 = vadd.xlane.f32.xlu0 %v2576
      %v2578 = vpop.xlane.xlu0 %2577
      %v2579 = vsel %vm730, %v2573, 0.0
      %2580 = vadd.xlane.f32.xlu0 %v2579
      %v2581 = vpop.xlane.xlu0 %2580
      %v2582 = vsel %vm730, %v2574, 0.0
      %2583 = vadd.xlane.f32.xlu0 %v2582
      %v2584 = vpop.xlane.xlu0 %2583
      %v2585 = vsel %vm730, %v2575, 0.0
      %2586 = vadd.xlane.f32.xlu0 %v2585
      %v2587 = vpop.xlane.xlu0 %2586
      %v2588 = vmul.f32 %v2578, %v743
      %v2589 = vmul.f32 %v2581, %v743
      %v2590 = vmul.f32 %v2584, %v743
      %v2591 = vmul.f32 %v2587, %v743
      %v2592 = vadd.f32 %v2588, 1e-06
      %v2593 = vadd.f32 %v2589, 1e-06
      %v2594 = vadd.f32 %v2590, 1e-06
      %v2595 = vadd.f32 %v2591, 1e-06
      %v2596 = vrsqrt.pop %v2592
      %v2597 = vrsqrt.pop %v2593
      %v2598 = vrsqrt.pop %v2594
      %v2599 = vrsqrt.pop %v2595
      %v2600 = vmul.f32 %v2568, %v2596
      %v2601 = vmul.f32 %v2569, %v2597
      %v2602 = vmul.f32 %v2570, %v2598
      %v2603 = vmul.f32 %v2571, %v2599
      %v2605 = vlaneseq
      %v2606 = vshrl.u32 %v2605, 7
      %v2607 = vsub.s32 0, %v2606
      %v2608 = vrot.slane %v2550, %v2607
      %v2610 = vmul.f32 %v2600, %v2608
      %v2611 = vmul.f32 %v2601, %v2608
      %v2612 = vmul.f32 %v2602, %v2608
      %v2613 = vmul.f32 %v2603, %v2608
      %v2615 = vlaneseq
      %v2616 = vshrl.u32 %v2615, 7
      %v2617 = vsub.s32 0, %v2616
      %v2618 = vrot.slane %v2551, %v2617
      %v2620 = vadd.f32 %v2610, %v2618
      %v2621 = vadd.f32 %v2611, %v2618
      %v2622 = vadd.f32 %v2612, %v2618
      %v2623 = vadd.f32 %v2613, %v2618
      %v2624 = vld [vmem:[%s12] sm:$0xf]
      %v2625 = vld [vmem:[%s12 + $0x4] sm:$0xf]
      %v2626 = vld [vmem:[%s12 + $0x8] sm:$0xf]
      %v2627 = vld [vmem:[%s12 + $0xc] sm:$0xf]
      %v2628 = vpack.c.bf16 %v2621, %v2620
      %v2629 = vpack.c.bf16 %v2623, %v2622
      %v2630 = vld [vmem:[%s13] sm:$0x1]
      %v2632 = vlaneseq
      %v2633 = vshrl.u32 %v2632, 7
      %v2634 = vsub.s32 0, %v2633
      %v2635 = vrot.slane %v2630, %v2634
      %v2641 = vunpack.c.l.b16 %v2624
      %v2642 = vunpack.c.l.b16 %v2625
      %v2643 = vunpack.c.l.b16 %v2626
      %v2644 = vunpack.c.l.b16 %v2627
      %v2645 = vpack.c.b16 %v2642, %v2641
      %v2646 = vpack.c.b16 %v2644, %v2643
      %v2650 = vsel %vm730, %v2628, 0
      %v2653 = vsel %vm730, %v2629, 0
      %2655 = vmatprep.subr.bf16.mxu0 0
      %2656 = vmatpush1.bf16.msra.mxu0 0
      %2657 = vmatprep.subr.bf16.mxu0 0
      %2658 = vmatpush1.bf16.msra.mxu0 0
      %2659 = vmatprep.subr.bf16.mxu0 0
      %2660 = vmatpush1.bf16.msra.mxu0 0
      %2661 = vmatprep.subr.bf16.mxu0 0
      %2662 = vmatpush1.bf16.msra.mxu0 0
      %2663 = vmatprep.subr.bf16.mxu0 0
      %2664 = vmatpush1.bf16.msra.mxu0 0
      %2665 = vmatprep.subr.bf16.mxu0 0
      %2666 = vmatpush1.bf16.msra.mxu0 0
      %2667 = vmatprep.subr.bf16.mxu0 0
      %2668 = vmatpush1.bf16.msra.mxu0 %v2646
      %2669 = vmatprep.subr.bf16.mxu0 0
      %2670 = vmatpush1.bf16.msra.mxu0 %v2645
      %2671 = vmatprep.subr.bf16.mxu0 0
      %2672 = vmatpush2.bf16.msra.mxu0 0
      %2673 = vmatprep.subr.bf16.mxu0 0
      %2674 = vmatpush2.bf16.msra.mxu0 0
      %2675 = vmatprep.subr.bf16.mxu0 0
      %2676 = vmatpush2.bf16.msra.mxu0 0
      %2677 = vmatprep.subr.bf16.mxu0 0
      %2678 = vmatpush2.bf16.msra.mxu0 0
      %2679 = vmatprep.subr.bf16.mxu0 0
      %2680 = vmatpush2.bf16.msra.mxu0 0
      %2681 = vmatprep.subr.bf16.mxu0 0
      %2682 = vmatpush2.bf16.msra.mxu0 0
      %2683 = vmatprep.subr.bf16.mxu0 0
      %2684 = vmatpush2.bf16.msra.mxu0 0
      %2685 = vmatprep.subr.bf16.mxu0 0
      %2686 = vmatpush2.bf16.msra.mxu0 0
      %2687 = vmatprep.mubr.bf16.mxu0 0
      %2688 = vmatmul.mubr.bf16.gmra.mxu0 %v2650
      %v2689 = vpop.f32.mrf.mxu0
      %v2690 = vadd.f32 %v2635, %v2689
      %v2691 = vpop.f32.mrf.mxu0
      %v2692 = vpop.f32.mrf.mxu0
      %v2693 = vadd.f32 %v2635, %v2692
      %v2694 = vpop.f32.mrf.mxu0
      %2695 = vmatprep.mubr.bf16.mxu0 0
      %2696 = vmatmul.mubr.bf16.gmra.mxu0 %v2653
      %v2697 = vpop.f32.mrf.mxu0
      %v2698 = vadd.f32 %v2635, %v2697
      %v2699 = vpop.f32.mrf.mxu0
      %v2700 = vpop.f32.mrf.mxu0
      %v2701 = vadd.f32 %v2635, %v2700
      %v2702 = vpop.f32.mrf.mxu0
      %2703 = vdwg.mxu0
      %v2704 = vmul.f32 %v2690, 0.5
      %v2705 = vmul.f32 %v2693, 0.5
      %v2706 = vmul.f32 %v2698, 0.5
      %v2707 = vmul.f32 %v2701, 0.5
      %v2708 = vmul.f32 %v2690, 0.044715
      %v2709 = vmul.f32 %v2693, 0.044715
      %v2710 = vmul.f32 %v2698, 0.044715
      %v2711 = vmul.f32 %v2701, 0.044715
      %v2712 = vmul.f32 %v2708, %v2690
      %v2713 = vmul.f32 %v2709, %v2693
      %v2714 = vmul.f32 %v2710, %v2698
      %v2715 = vmul.f32 %v2711, %v2701
      %v2716 = vmul.f32 %v2712, %v2690
      %v2717 = vmul.f32 %v2713, %v2693
      %v2718 = vmul.f32 %v2714, %v2698
      %v2719 = vmul.f32 %v2715, %v2701
      %v2720 = vadd.f32 %v2690, %v2716
      %v2721 = vadd.f32 %v2693, %v2717
      %v2722 = vadd.f32 %v2698, %v2718
      %v2723 = vadd.f32 %v2701, %v2719
      %v2724 = vmul.f32 %v2720, 0.7978846
      %v2725 = vmul.f32 %v2721, 0.7978846
      %v2726 = vmul.f32 %v2722, 0.7978846
      %v2727 = vmul.f32 %v2723, 0.7978846
      %v2728 = vtanh.pop %v2724
      %v2729 = vtanh.pop %v2725
      %v2730 = vtanh.pop %v2726
      %v2731 = vtanh.pop %v2727
      %v2732 = vadd.f32 %v2728, 1.0
      %v2733 = vadd.f32 %v2729, 1.0
      %v2734 = vadd.f32 %v2730, 1.0
      %v2735 = vadd.f32 %v2731, 1.0
      %v2736 = vmul.f32 %v2704, %v2732
      %v2737 = vmul.f32 %v2705, %v2733
      %v2738 = vmul.f32 %v2706, %v2734
      %v2739 = vmul.f32 %v2707, %v2735
      %v2740 = vld [vmem:[%s14] sm:$0xf]
      %v2741 = vld [vmem:[%s14 + $0x4] sm:$0xf]
      %v2742 = vld [vmem:[%s14 + $0x8] sm:$0xf]
      %v2743 = vld [vmem:[%s14 + $0xc] sm:$0xf]
      %v2744 = vld [vmem:[%s14 + $0x10] sm:$0xf]
      %v2745 = vld [vmem:[%s14 + $0x14] sm:$0xf]
      %v2746 = vld [vmem:[%s14 + $0x18] sm:$0xf]
      %v2747 = vld [vmem:[%s14 + $0x1c] sm:$0xf]
      %v2748 = vpack.c.bf16 %v2737, %v2736
      %v2749 = vpack.c.bf16 %v2739, %v2738
      %v2758 = vunpack.c.l.b16 %v2740
      %v2759 = vunpack.c.l.b16 %v2741
      %v2760 = vunpack.c.l.b16 %v2742
      %v2761 = vunpack.c.l.b16 %v2743
      %v2762 = vunpack.c.l.b16 %v2744
      %v2763 = vunpack.c.l.b16 %v2745
      %v2764 = vunpack.c.l.b16 %v2746
      %v2765 = vunpack.c.l.b16 %v2747
      %v2766 = vpack.c.b16 %v2759, %v2758
      %v2767 = vpack.c.b16 %v2761, %v2760
      %v2768 = vpack.c.b16 %v2763, %v2762
      %v2769 = vpack.c.b16 %v2765, %v2764
      %vm2774 = vcmask 523264
      %v2776 = vsel %vm2774, %v2748, 0
      %v2779 = vsel %vm2774, %v2749, 0
      %2781 = vmatprep.subr.bf16.mxu0 0
      %2782 = vmatpush1.bf16.msra.mxu0 0
      %2783 = vmatprep.subr.bf16.mxu0 0
      %2784 = vmatpush1.bf16.msra.mxu0 0
      %2785 = vmatprep.subr.bf16.mxu0 0
      %2786 = vmatpush1.bf16.msra.mxu0 0
      %2787 = vmatprep.subr.bf16.mxu0 0
      %2788 = vmatpush1.bf16.msra.mxu0 0
      %2789 = vmatprep.subr.bf16.mxu0 0
      %2790 = vmatpush1.bf16.msra.mxu0 %v2769
      %2791 = vmatprep.subr.bf16.mxu0 0
      %2792 = vmatpush1.bf16.msra.mxu0 %v2768
      %2793 = vmatprep.subr.bf16.mxu0 0
      %2794 = vmatpush1.bf16.msra.mxu0 %v2767
      %2795 = vmatprep.subr.bf16.mxu0 0
      %2796 = vmatpush1.bf16.msra.mxu0 %v2766
      %2797 = vmatprep.subr.bf16.mxu0 0
      %2798 = vmatpush2.bf16.msra.mxu0 0
      %2799 = vmatprep.subr.bf16.mxu0 0
      %2800 = vmatpush2.bf16.msra.mxu0 0
      %2801 = vmatprep.subr.bf16.mxu0 0
      %2802 = vmatpush2.bf16.msra.mxu0 0
      %2803 = vmatprep.subr.bf16.mxu0 0
      %2804 = vmatpush2.bf16.msra.mxu0 0
      %2805 = vmatprep.subr.bf16.mxu0 0
      %2806 = vmatpush2.bf16.msra.mxu0 0
      %2807 = vmatprep.subr.bf16.mxu0 0
      %2808 = vmatpush2.bf16.msra.mxu0 0
      %2809 = vmatprep.subr.bf16.mxu0 0
      %2810 = vmatpush2.bf16.msra.mxu0 0
      %2811 = vmatprep.subr.bf16.mxu0 0
      %2812 = vmatpush2.bf16.msra.mxu0 0
      %2813 = vmatprep.mubr.bf16.mxu0 0
      %2814 = vmatmul.mubr.bf16.gmra.mxu0 %v2776
      %v2815 = vpop.f32.mrf.mxu0
      %v2816 = vadd.f32 0.0, %v2815
      %v2817 = vpop.f32.mrf.mxu0
      %v2818 = vpop.f32.mrf.mxu0
      %v2819 = vadd.f32 0.0, %v2818
      %v2820 = vpop.f32.mrf.mxu0
      %2821 = vmatprep.mubr.bf16.mxu0 0
      %2822 = vmatmul.mubr.bf16.gmra.mxu0 %v2779
      %v2823 = vpop.f32.mrf.mxu0
      %v2824 = vadd.f32 0.0, %v2823
      %v2825 = vpop.f32.mrf.mxu0
      %v2826 = vpop.f32.mrf.mxu0
      %v2827 = vadd.f32 0.0, %v2826
      %v2828 = vpop.f32.mrf.mxu0
      %2829 = vdwg.mxu0
      %v2830 = vadd.f32 %v2546, %v2816
      %v2831 = vadd.f32 %v2547, %v2819
      %v2832 = vadd.f32 %v2548, %v2824
      %v2833 = vadd.f32 %v2549, %v2827
      %v2834 = vld [vmem:[%s15] sm:$0x1]
      %v2836 = vlaneseq
      %v2837 = vshrl.u32 %v2836, 7
      %v2838 = vsub.s32 0, %v2837
      %v2839 = vrot.slane %v2834, %v2838
      %v2841 = vadd.f32 %v2830, %v2839
      %v2842 = vadd.f32 %v2831, %v2839
      %v2843 = vadd.f32 %v2832, %v2839
      %v2844 = vadd.f32 %v2833, %v2839
      %s2845 = scalar_lea.vmem %s4, 1
      %v2846 = vld [vmem:[%s2845] sm:$0x1]
      %s2847 = scalar_lea.vmem %s5, 1
      %v2848 = vld [vmem:[%s2847] sm:$0x1]
      %v2849 = vsel %vm730, %v2841, 0.0
      %2850 = vadd.xlane.f32.xlu0 %v2849
      %v2851 = vpop.xlane.xlu0 %2850
      %v2852 = vsel %vm730, %v2842, 0.0
      %2853 = vadd.xlane.f32.xlu0 %v2852
      %v2854 = vpop.xlane.xlu0 %2853
      %v2855 = vsel %vm730, %v2843, 0.0
      %2856 = vadd.xlane.f32.xlu0 %v2855
      %v2857 = vpop.xlane.xlu0 %2856
      %v2858 = vsel %vm730, %v2844, 0.0
      %2859 = vadd.xlane.f32.xlu0 %v2858
      %v2860 = vpop.xlane.xlu0 %2859
      %v2861 = vmul.f32 %v2851, %v743
      %v2862 = vmul.f32 %v2854, %v743
      %v2863 = vmul.f32 %v2857, %v743
      %v2864 = vmul.f32 %v2860, %v743
      %v2865 = vsub.f32 %v2841, %v2861
      %v2866 = vsub.f32 %v2842, %v2862
      %v2867 = vsub.f32 %v2843, %v2863
      %v2868 = vsub.f32 %v2844, %v2864
      %v2869 = vmul.f32 %v2865, %v2865
      %v2870 = vmul.f32 %v2866, %v2866
      %v2871 = vmul.f32 %v2867, %v2867
      %v2872 = vmul.f32 %v2868, %v2868
      %v2873 = vsel %vm730, %v2869, 0.0
      %2874 = vadd.xlane.f32.xlu0 %v2873
      %v2875 = vpop.xlane.xlu0 %2874
      %v2876 = vsel %vm730, %v2870, 0.0
      %2877 = vadd.xlane.f32.xlu0 %v2876
      %v2878 = vpop.xlane.xlu0 %2877
      %v2879 = vsel %vm730, %v2871, 0.0
      %2880 = vadd.xlane.f32.xlu0 %v2879
      %v2881 = vpop.xlane.xlu0 %2880
      %v2882 = vsel %vm730, %v2872, 0.0
      %2883 = vadd.xlane.f32.xlu0 %v2882
      %v2884 = vpop.xlane.xlu0 %2883
      %v2885 = vmul.f32 %v2875, %v743
      %v2886 = vmul.f32 %v2878, %v743
      %v2887 = vmul.f32 %v2881, %v743
      %v2888 = vmul.f32 %v2884, %v743
      %v2889 = vadd.f32 %v2885, 1e-06
      %v2890 = vadd.f32 %v2886, 1e-06
      %v2891 = vadd.f32 %v2887, 1e-06
      %v2892 = vadd.f32 %v2888, 1e-06
      %v2893 = vrsqrt.pop %v2889
      %v2894 = vrsqrt.pop %v2890
      %v2895 = vrsqrt.pop %v2891
      %v2896 = vrsqrt.pop %v2892
      %v2897 = vmul.f32 %v2865, %v2893
      %v2898 = vmul.f32 %v2866, %v2894
      %v2899 = vmul.f32 %v2867, %v2895
      %v2900 = vmul.f32 %v2868, %v2896
      %v2902 = vlaneseq
      %v2903 = vshrl.u32 %v2902, 7
      %v2904 = vsub.s32 0, %v2903
      %v2905 = vrot.slane %v2846, %v2904
      %v2907 = vmul.f32 %v2897, %v2905
      %v2908 = vmul.f32 %v2898, %v2905
      %v2909 = vmul.f32 %v2899, %v2905
      %v2910 = vmul.f32 %v2900, %v2905
      %v2912 = vlaneseq
      %v2913 = vshrl.u32 %v2912, 7
      %v2914 = vsub.s32 0, %v2913
      %v2915 = vrot.slane %v2848, %v2914
      %v2917 = vadd.f32 %v2907, %v2915
      %v2918 = vadd.f32 %v2908, %v2915
      %v2919 = vadd.f32 %v2909, %v2915
      %v2920 = vadd.f32 %v2910, %v2915
      %s2921 = scalar_lea.vmem %s6, 16
      %v2922 = vld [vmem:[%s2921] sm:$0xf]
      %v2923 = vld [vmem:[%s2921 + $0x4] sm:$0xf]
      %v2924 = vld [vmem:[%s2921 + $0x8] sm:$0xf]
      %v2925 = vld [vmem:[%s2921 + $0xc] sm:$0xf]
      %v2926 = vpack.c.bf16 %v2918, %v2917
      %v2927 = vpack.c.bf16 %v2920, %v2919
      %s2928 = scalar_lea.vmem %s7, 1
      %v2929 = vld [vmem:[%s2928] sm:$0x1]
      %v2931 = vlaneseq
      %v2932 = vshrl.u32 %v2931, 7
      %v2933 = vsub.s32 0, %v2932
      %v2934 = vrot.slane %v2929, %v2933
      %v2940 = vunpack.c.l.b16 %v2922
      %v2941 = vunpack.c.l.b16 %v2923
      %v2942 = vunpack.c.l.b16 %v2924
      %v2943 = vunpack.c.l.b16 %v2925
      %v2944 = vpack.c.b16 %v2941, %v2940
      %v2945 = vpack.c.b16 %v2943, %v2942
      %v2949 = vsel %vm730, %v2926, 0
      %v2952 = vsel %vm730, %v2927, 0
      %2954 = vmatprep.subr.bf16.mxu0 0
      %2955 = vmatpush1.bf16.msra.mxu0 0
      %2956 = vmatprep.subr.bf16.mxu0 0
      %2957 = vmatpush1.bf16.msra.mxu0 0
      %2958 = vmatprep.subr.bf16.mxu0 0
      %2959 = vmatpush1.bf16.msra.mxu0 0
      %2960 = vmatprep.subr.bf16.mxu0 0
      %2961 = vmatpush1.bf16.msra.mxu0 0
      %2962 = vmatprep.subr.bf16.mxu0 0
      %2963 = vmatpush1.bf16.msra.mxu0 0
      %2964 = vmatprep.subr.bf16.mxu0 0
      %2965 = vmatpush1.bf16.msra.mxu0 0
      %2966 = vmatprep.subr.bf16.mxu0 0
      %2967 = vmatpush1.bf16.msra.mxu0 %v2945
      %2968 = vmatprep.subr.bf16.mxu0 0
      %2969 = vmatpush1.bf16.msra.mxu0 %v2944
      %2970 = vmatprep.subr.bf16.mxu0 0
      %2971 = vmatpush2.bf16.msra.mxu0 0
      %2972 = vmatprep.subr.bf16.mxu0 0
      %2973 = vmatpush2.bf16.msra.mxu0 0
      %2974 = vmatprep.subr.bf16.mxu0 0
      %2975 = vmatpush2.bf16.msra.mxu0 0
      %2976 = vmatprep.subr.bf16.mxu0 0
      %2977 = vmatpush2.bf16.msra.mxu0 0
      %2978 = vmatprep.subr.bf16.mxu0 0
      %2979 = vmatpush2.bf16.msra.mxu0 0
      %2980 = vmatprep.subr.bf16.mxu0 0
      %2981 = vmatpush2.bf16.msra.mxu0 0
      %2982 = vmatprep.subr.bf16.mxu0 0
      %2983 = vmatpush2.bf16.msra.mxu0 0
      %2984 = vmatprep.subr.bf16.mxu0 0
      %2985 = vmatpush2.bf16.msra.mxu0 0
      %2986 = vmatprep.mubr.bf16.mxu0 0
      %2987 = vmatmul.mubr.bf16.gmra.mxu0 %v2949
      %v2988 = vpop.f32.mrf.mxu0
      %v2989 = vadd.f32 %v2934, %v2988
      %v2990 = vpop.f32.mrf.mxu0
      %v2991 = vpop.f32.mrf.mxu0
      %v2992 = vadd.f32 %v2934, %v2991
      %v2993 = vpop.f32.mrf.mxu0
      %2994 = vmatprep.mubr.bf16.mxu0 0
      %2995 = vmatmul.mubr.bf16.gmra.mxu0 %v2952
      %v2996 = vpop.f32.mrf.mxu0
      %v2997 = vadd.f32 %v2934, %v2996
      %v2998 = vpop.f32.mrf.mxu0
      %v2999 = vpop.f32.mrf.mxu0
      %v3000 = vadd.f32 %v2934, %v2999
      %v3001 = vpop.f32.mrf.mxu0
      %3002 = vdwg.mxu0
      %v3003 = vpack.c.bf16 %v2992, %v2989
      %v3004 = vpack.c.bf16 %v3000, %v2997
      %3007 = vrot.lane.b32.xlu0 %v3003, 120
      %v3008 = vpop.permute.xlu0 %3007
      %3009 = vrot.lane.b32.xlu0 %v3004, 120
      %v3010 = vpop.permute.xlu0 %3009
      %3011 = vrot.lane.b32.xlu0 %v3003, 112
      %v3012 = vpop.permute.xlu0 %3011
      %3013 = vrot.lane.b32.xlu0 %v3004, 112
      %v3014 = vpop.permute.xlu0 %3013
      %3015 = vrot.lane.b32.xlu0 %v3003, 104
      %v3016 = vpop.permute.xlu0 %3015
      %3017 = vrot.lane.b32.xlu0 %v3004, 104
      %v3018 = vpop.permute.xlu0 %3017
      %3019 = vrot.lane.b32.xlu0 %v3003, 96
      %v3020 = vpop.permute.xlu0 %3019
      %3021 = vrot.lane.b32.xlu0 %v3004, 96
      %v3022 = vpop.permute.xlu0 %3021
      %3023 = vrot.lane.b32.xlu0 %v3008, 96
      %v3024 = vpop.permute.xlu0 %3023
      %3025 = vrot.lane.b32.xlu0 %v3010, 96
      %v3026 = vpop.permute.xlu0 %3025
      %3027 = vrot.lane.b32.xlu0 %v3012, 96
      %v3028 = vpop.permute.xlu0 %3027
      %3029 = vrot.lane.b32.xlu0 %v3014, 96
      %v3030 = vpop.permute.xlu0 %3029
      %3031 = vrot.lane.b32.xlu0 %v3016, 96
      %v3032 = vpop.permute.xlu0 %3031
      %3033 = vrot.lane.b32.xlu0 %v3018, 96
      %v3034 = vpop.permute.xlu0 %3033
      %3043 = vxpose.xlu0.c.b16.start [1/8] %v3020, 128
      %3044 = vxpose.xlu0.c.b16.cont [2/8] %v3022, 128
      %3045 = vxpose.xlu0.c.b16.cont [3/8] 0, 128
      %3046 = vxpose.xlu0.c.b16.cont [4/8] 0, 128
      %3047 = vxpose.xlu0.c.b16.cont [5/8] 0, 128
      %3048 = vxpose.xlu0.c.b16.cont [6/8] 0, 128
      %3049 = vxpose.xlu0.c.b16.cont [7/8] 0, 128
      %3050 = vxpose.xlu0.c.b16.end [8/8] 0, 128
      %v3051 = vpop.trf.xlu0
      %v3052 = vpop.trf.xlu0
      %v3053 = vpop.trf.xlu0
      %v3054 = vpop.trf.xlu0
      %v3055 = vpop.trf.xlu0
      %v3056 = vpop.trf.xlu0
      %v3057 = vpop.trf.xlu0
      %v3058 = vpop.trf.xlu0
      %3059 = vxpose.xlu0.c.b16.start [1/8] %v3024, 128
      %3060 = vxpose.xlu0.c.b16.cont [2/8] %v3026, 128
      %3061 = vxpose.xlu0.c.b16.cont [3/8] 0, 128
      %3062 = vxpose.xlu0.c.b16.cont [4/8] 0, 128
      %3063 = vxpose.xlu0.c.b16.cont [5/8] 0, 128
      %3064 = vxpose.xlu0.c.b16.cont [6/8] 0, 128
      %3065 = vxpose.xlu0.c.b16.cont [7/8] 0, 128
      %3066 = vxpose.xlu0.c.b16.end [8/8] 0, 128
      %v3067 = vpop.trf.xlu0
      %v3068 = vpop.trf.xlu0
      %v3069 = vpop.trf.xlu0
      %v3070 = vpop.trf.xlu0
      %v3071 = vpop.trf.xlu0
      %v3072 = vpop.trf.xlu0
      %v3073 = vpop.trf.xlu0
      %v3074 = vpop.trf.xlu0
      %3075 = vxpose.xlu0.c.b16.start [1/8] %v3028, 128
      %3076 = vxpose.xlu0.c.b16.cont [2/8] %v3030, 128
      %3077 = vxpose.xlu0.c.b16.cont [3/8] 0, 128
      %3078 = vxpose.xlu0.c.b16.cont [4/8] 0, 128
      %3079 = vxpose.xlu0.c.b16.cont [5/8] 0, 128
      %3080 = vxpose.xlu0.c.b16.cont [6/8] 0, 128
      %3081 = vxpose.xlu0.c.b16.cont [7/8] 0, 128
      %3082 = vxpose.xlu0.c.b16.end [8/8] 0, 128
      %v3083 = vpop.trf.xlu0
      %v3084 = vpop.trf.xlu0
      %v3085 = vpop.trf.xlu0
      %v3086 = vpop.trf.xlu0
      %v3087 = vpop.trf.xlu0
      %v3088 = vpop.trf.xlu0
      %v3089 = vpop.trf.xlu0
      %v3090 = vpop.trf.xlu0
      %3091 = vxpose.xlu0.c.b16.start [1/8] %v3032, 128
      %3092 = vxpose.xlu0.c.b16.cont [2/8] %v3034, 128
      %3093 = vxpose.xlu0.c.b16.cont [3/8] 0, 128
      %3094 = vxpose.xlu0.c.b16.cont [4/8] 0, 128
      %3095 = vxpose.xlu0.c.b16.cont [5/8] 0, 128
      %3096 = vxpose.xlu0.c.b16.cont [6/8] 0, 128
      %3097 = vxpose.xlu0.c.b16.cont [7/8] 0, 128
      %3098 = vxpose.xlu0.c.b16.end [8/8] 0, 128
      %v3099 = vpop.trf.xlu0
      %v3100 = vpop.trf.xlu0
      %v3101 = vpop.trf.xlu0
      %v3102 = vpop.trf.xlu0
      %v3103 = vpop.trf.xlu0
      %v3104 = vpop.trf.xlu0
      %v3105 = vpop.trf.xlu0
      %v3106 = vpop.trf.xlu0
      %v3108 = vsel %vm988, %v3003, 0
      %v3111 = vsel %vm988, %v3004, 0
      %v3114 = vsel %vm995, %v3051, 0
      %3116 = vmatprep.subr.bf16.mxu0 0
      %3117 = vmatpush1.bf16.msra.mxu0 0
      %3118 = vmatprep.subr.bf16.mxu0 0
      %3119 = vmatpush1.bf16.msra.mxu0 0
      %3120 = vmatprep.subr.bf16.mxu0 0
      %3121 = vmatpush1.bf16.msra.mxu0 0
      %3122 = vmatprep.subr.bf16.mxu0 0
      %3123 = vmatpush1.bf16.msra.mxu0 0
      %3124 = vmatprep.subr.bf16.mxu0 0
      %3125 = vmatpush1.bf16.msra.mxu0 0
      %3126 = vmatprep.subr.bf16.mxu0 0
      %3127 = vmatpush1.bf16.msra.mxu0 0
      %3128 = vmatprep.subr.bf16.mxu0 0
      %3129 = vmatpush1.bf16.msra.mxu0 0
      %3130 = vmatprep.subr.bf16.mxu0 0
      %3131 = vmatpush1.bf16.msra.mxu0 %v3114
      %3132 = vmatprep.subr.bf16.mxu0 0
      %3133 = vmatpush2.bf16.msra.mxu0 0
      %3134 = vmatprep.subr.bf16.mxu0 0
      %3135 = vmatpush2.bf16.msra.mxu0 0
      %3136 = vmatprep.subr.bf16.mxu0 0
      %3137 = vmatpush2.bf16.msra.mxu0 0
      %3138 = vmatprep.subr.bf16.mxu0 0
      %3139 = vmatpush2.bf16.msra.mxu0 0
      %3140 = vmatprep.subr.bf16.mxu0 0
      %3141 = vmatpush2.bf16.msra.mxu0 0
      %3142 = vmatprep.subr.bf16.mxu0 0
      %3143 = vmatpush2.bf16.msra.mxu0 0
      %3144 = vmatprep.subr.bf16.mxu0 0
      %3145 = vmatpush2.bf16.msra.mxu0 0
      %3146 = vmatprep.subr.bf16.mxu0 0
      %3147 = vmatpush2.bf16.msra.mxu0 0
      %3148 = vmatprep.mubr.bf16.mxu0 0
      %3149 = vmatmul.mubr.bf16.gmra.mxu0 %v3108
      %v3150 = vpop.f32.mrf.mxu0
      %v3151 = vadd.f32 0.0, %v3150
      %v3152 = vpop.f32.mrf.mxu0
      %v3153 = vpop.f32.mrf.mxu0
      %v3154 = vadd.f32 0.0, %v3153
      %v3155 = vpop.f32.mrf.mxu0
      %3156 = vmatprep.mubr.bf16.mxu0 0
      %3157 = vmatmul.mubr.bf16.gmra.mxu0 %v3111
      %v3158 = vpop.f32.mrf.mxu0
      %v3159 = vadd.f32 0.0, %v3158
      %v3160 = vpop.f32.mrf.mxu0
      %v3161 = vpop.f32.mrf.mxu0
      %v3162 = vadd.f32 0.0, %v3161
      %v3163 = vpop.f32.mrf.mxu0
      %3164 = vdwg.mxu0
      %v3166 = vsel %vm988, %v3008, 0
      %v3169 = vsel %vm988, %v3010, 0
      %v3172 = vsel %vm995, %v3067, 0
      %3174 = vmatprep.subr.bf16.mxu0 0
      %3175 = vmatpush1.bf16.msra.mxu0 0
      %3176 = vmatprep.subr.bf16.mxu0 0
      %3177 = vmatpush1.bf16.msra.mxu0 0
      %3178 = vmatprep.subr.bf16.mxu0 0
      %3179 = vmatpush1.bf16.msra.mxu0 0
      %3180 = vmatprep.subr.bf16.mxu0 0
      %3181 = vmatpush1.bf16.msra.mxu0 0
      %3182 = vmatprep.subr.bf16.mxu0 0
      %3183 = vmatpush1.bf16.msra.mxu0 0
      %3184 = vmatprep.subr.bf16.mxu0 0
      %3185 = vmatpush1.bf16.msra.mxu0 0
      %3186 = vmatprep.subr.bf16.mxu0 0
      %3187 = vmatpush1.bf16.msra.mxu0 0
      %3188 = vmatprep.subr.bf16.mxu0 0
      %3189 = vmatpush1.bf16.msra.mxu0 %v3172
      %3190 = vmatprep.subr.bf16.mxu0 0
      %3191 = vmatpush2.bf16.msra.mxu0 0
      %3192 = vmatprep.subr.bf16.mxu0 0
      %3193 = vmatpush2.bf16.msra.mxu0 0
      %3194 = vmatprep.subr.bf16.mxu0 0
      %3195 = vmatpush2.bf16.msra.mxu0 0
      %3196 = vmatprep.subr.bf16.mxu0 0
      %3197 = vmatpush2.bf16.msra.mxu0 0
      %3198 = vmatprep.subr.bf16.mxu0 0
      %3199 = vmatpush2.bf16.msra.mxu0 0
      %3200 = vmatprep.subr.bf16.mxu0 0
      %3201 = vmatpush2.bf16.msra.mxu0 0
      %3202 = vmatprep.subr.bf16.mxu0 0
      %3203 = vmatpush2.bf16.msra.mxu0 0
      %3204 = vmatprep.subr.bf16.mxu0 0
      %3205 = vmatpush2.bf16.msra.mxu0 0
      %3206 = vmatprep.mubr.bf16.mxu0 0
      %3207 = vmatmul.mubr.bf16.gmra.mxu0 %v3166
      %v3208 = vpop.f32.mrf.mxu0
      %v3209 = vadd.f32 0.0, %v3208
      %v3210 = vpop.f32.mrf.mxu0
      %v3211 = vpop.f32.mrf.mxu0
      %v3212 = vadd.f32 0.0, %v3211
      %v3213 = vpop.f32.mrf.mxu0
      %3214 = vmatprep.mubr.bf16.mxu0 0
      %3215 = vmatmul.mubr.bf16.gmra.mxu0 %v3169
      %v3216 = vpop.f32.mrf.mxu0
      %v3217 = vadd.f32 0.0, %v3216
      %v3218 = vpop.f32.mrf.mxu0
      %v3219 = vpop.f32.mrf.mxu0
      %v3220 = vadd.f32 0.0, %v3219
      %v3221 = vpop.f32.mrf.mxu0
      %3222 = vdwg.mxu0
      %v3224 = vsel %vm988, %v3012, 0
      %v3227 = vsel %vm988, %v3014, 0
      %v3230 = vsel %vm995, %v3083, 0
      %3232 = vmatprep.subr.bf16.mxu0 0
      %3233 = vmatpush1.bf16.msra.mxu0 0
      %3234 = vmatprep.subr.bf16.mxu0 0
      %3235 = vmatpush1.bf16.msra.mxu0 0
      %3236 = vmatprep.subr.bf16.mxu0 0
      %3237 = vmatpush1.bf16.msra.mxu0 0
      %3238 = vmatprep.subr.bf16.mxu0 0
      %3239 = vmatpush1.bf16.msra.mxu0 0
      %3240 = vmatprep.subr.bf16.mxu0 0
      %3241 = vmatpush1.bf16.msra.mxu0 0
      %3242 = vmatprep.subr.bf16.mxu0 0
      %3243 = vmatpush1.bf16.msra.mxu0 0
      %3244 = vmatprep.subr.bf16.mxu0 0
      %3245 = vmatpush1.bf16.msra.mxu0 0
      %3246 = vmatprep.subr.bf16.mxu0 0
      %3247 = vmatpush1.bf16.msra.mxu0 %v3230
      %3248 = vmatprep.subr.bf16.mxu0 0
      %3249 = vmatpush2.bf16.msra.mxu0 0
      %3250 = vmatprep.subr.bf16.mxu0 0
      %3251 = vmatpush2.bf16.msra.mxu0 0
      %3252 = vmatprep.subr.bf16.mxu0 0
      %3253 = vmatpush2.bf16.msra.mxu0 0
      %3254 = vmatprep.subr.bf16.mxu0 0
      %3255 = vmatpush2.bf16.msra.mxu0 0
      %3256 = vmatprep.subr.bf16.mxu0 0
      %3257 = vmatpush2.bf16.msra.mxu0 0
      %3258 = vmatprep.subr.bf16.mxu0 0
      %3259 = vmatpush2.bf16.msra.mxu0 0
      %3260 = vmatprep.subr.bf16.mxu0 0
      %3261 = vmatpush2.bf16.msra.mxu0 0
      %3262 = vmatprep.subr.bf16.mxu0 0
      %3263 = vmatpush2.bf16.msra.mxu0 0
      %3264 = vmatprep.mubr.bf16.mxu0 0
      %3265 = vmatmul.mubr.bf16.gmra.mxu0 %v3224
      %v3266 = vpop.f32.mrf.mxu0
      %v3267 = vadd.f32 0.0, %v3266
      %v3268 = vpop.f32.mrf.mxu0
      %v3269 = vpop.f32.mrf.mxu0
      %v3270 = vadd.f32 0.0, %v3269
      %v3271 = vpop.f32.mrf.mxu0
      %3272 = vmatprep.mubr.bf16.mxu0 0
      %3273 = vmatmul.mubr.bf16.gmra.mxu0 %v3227
      %v3274 = vpop.f32.mrf.mxu0
      %v3275 = vadd.f32 0.0, %v3274
      %v3276 = vpop.f32.mrf.mxu0
      %v3277 = vpop.f32.mrf.mxu0
      %v3278 = vadd.f32 0.0, %v3277
      %v3279 = vpop.f32.mrf.mxu0
      %3280 = vdwg.mxu0
      %v3282 = vsel %vm988, %v3016, 0
      %v3285 = vsel %vm988, %v3018, 0
      %v3288 = vsel %vm995, %v3099, 0
      %3290 = vmatprep.subr.bf16.mxu0 0
      %3291 = vmatpush1.bf16.msra.mxu0 0
      %3292 = vmatprep.subr.bf16.mxu0 0
      %3293 = vmatpush1.bf16.msra.mxu0 0
      %3294 = vmatprep.subr.bf16.mxu0 0
      %3295 = vmatpush1.bf16.msra.mxu0 0
      %3296 = vmatprep.subr.bf16.mxu0 0
      %3297 = vmatpush1.bf16.msra.mxu0 0
      %3298 = vmatprep.subr.bf16.mxu0 0
      %3299 = vmatpush1.bf16.msra.mxu0 0
      %3300 = vmatprep.subr.bf16.mxu0 0
      %3301 = vmatpush1.bf16.msra.mxu0 0
      %3302 = vmatprep.subr.bf16.mxu0 0
      %3303 = vmatpush1.bf16.msra.mxu0 0
      %3304 = vmatprep.subr.bf16.mxu0 0
      %3305 = vmatpush1.bf16.msra.mxu0 %v3288
      %3306 = vmatprep.subr.bf16.mxu0 0
      %3307 = vmatpush2.bf16.msra.mxu0 0
      %3308 = vmatprep.subr.bf16.mxu0 0
      %3309 = vmatpush2.bf16.msra.mxu0 0
      %3310 = vmatprep.subr.bf16.mxu0 0
      %3311 = vmatpush2.bf16.msra.mxu0 0
      %3312 = vmatprep.subr.bf16.mxu0 0
      %3313 = vmatpush2.bf16.msra.mxu0 0
      %3314 = vmatprep.subr.bf16.mxu0 0
      %3315 = vmatpush2.bf16.msra.mxu0 0
      %3316 = vmatprep.subr.bf16.mxu0 0
      %3317 = vmatpush2.bf16.msra.mxu0 0
      %3318 = vmatprep.subr.bf16.mxu0 0
      %3319 = vmatpush2.bf16.msra.mxu0 0
      %3320 = vmatprep.subr.bf16.mxu0 0
      %3321 = vmatpush2.bf16.msra.mxu0 0
      %3322 = vmatprep.mubr.bf16.mxu0 0
      %3323 = vmatmul.mubr.bf16.gmra.mxu0 %v3282
      %v3324 = vpop.f32.mrf.mxu0
      %v3325 = vadd.f32 0.0, %v3324
      %v3326 = vpop.f32.mrf.mxu0
      %v3327 = vpop.f32.mrf.mxu0
      %v3328 = vadd.f32 0.0, %v3327
      %v3329 = vpop.f32.mrf.mxu0
      %3330 = vmatprep.mubr.bf16.mxu0 0
      %3331 = vmatmul.mubr.bf16.gmra.mxu0 %v3285
      %v3332 = vpop.f32.mrf.mxu0
      %v3333 = vadd.f32 0.0, %v3332
      %v3334 = vpop.f32.mrf.mxu0
      %v3335 = vpop.f32.mrf.mxu0
      %v3336 = vadd.f32 0.0, %v3335
      %v3337 = vpop.f32.mrf.mxu0
      %3338 = vdwg.mxu0
      %v3339 = vmul.f32 %v3151, 0.35355338
      %v3340 = vmul.f32 %v3154, 0.35355338
      %v3341 = vmul.f32 %v3159, 0.35355338
      %v3342 = vmul.f32 %v3162, 0.35355338
      %v3343 = vmul.f32 %v3209, 0.35355338
      %v3344 = vmul.f32 %v3212, 0.35355338
      %v3345 = vmul.f32 %v3217, 0.35355338
      %v3346 = vmul.f32 %v3220, 0.35355338
      %v3347 = vmul.f32 %v3267, 0.35355338
      %v3348 = vmul.f32 %v3270, 0.35355338
      %v3349 = vmul.f32 %v3275, 0.35355338
      %v3350 = vmul.f32 %v3278, 0.35355338
      %v3351 = vmul.f32 %v3325, 0.35355338
      %v3352 = vmul.f32 %v3328, 0.35355338
      %v3353 = vmul.f32 %v3333, 0.35355338
      %v3354 = vmul.f32 %v3336, 0.35355338
      %v3355 = vadd.f32 %v3339, %v1242
      %v3356 = vadd.f32 %v3340, %v1242
      %v3357 = vadd.f32 %v3341, %v1242
      %v3358 = vadd.f32 %v3342, %v1242
      %v3359 = vadd.f32 %v3343, %v1242
      %v3360 = vadd.f32 %v3344, %v1242
      %v3361 = vadd.f32 %v3345, %v1242
      %v3362 = vadd.f32 %v3346, %v1242
      %v3363 = vadd.f32 %v3347, %v1242
      %v3364 = vadd.f32 %v3348, %v1242
      %v3365 = vadd.f32 %v3349, %v1242
      %v3366 = vadd.f32 %v3350, %v1242
      %v3367 = vadd.f32 %v3351, %v1242
      %v3368 = vadd.f32 %v3352, %v1242
      %v3369 = vadd.f32 %v3353, %v1242
      %v3370 = vadd.f32 %v3354, %v1242
      %v3371 = vsel %vm730, %v3355, -inf
      %3372 = vmax.xlane.f32.xlu0 %v3371
      %v3373 = vpop.xlane.xlu0 %3372
      %v3374 = vsel %vm730, %v3356, -inf
      %3375 = vmax.xlane.f32.xlu0 %v3374
      %v3376 = vpop.xlane.xlu0 %3375
      %v3377 = vsel %vm730, %v3357, -inf
      %3378 = vmax.xlane.f32.xlu0 %v3377
      %v3379 = vpop.xlane.xlu0 %3378
      %v3380 = vsel %vm730, %v3358, -inf
      %3381 = vmax.xlane.f32.xlu0 %v3380
      %v3382 = vpop.xlane.xlu0 %3381
      %v3383 = vsel %vm730, %v3359, -inf
      %3384 = vmax.xlane.f32.xlu0 %v3383
      %v3385 = vpop.xlane.xlu0 %3384
      %v3386 = vsel %vm730, %v3360, -inf
      %3387 = vmax.xlane.f32.xlu0 %v3386
      %v3388 = vpop.xlane.xlu0 %3387
      %v3389 = vsel %vm730, %v3361, -inf
      %3390 = vmax.xlane.f32.xlu0 %v3389
      %v3391 = vpop.xlane.xlu0 %3390
      %v3392 = vsel %vm730, %v3362, -inf
      %3393 = vmax.xlane.f32.xlu0 %v3392
      %v3394 = vpop.xlane.xlu0 %3393
      %v3395 = vsel %vm730, %v3363, -inf
      %3396 = vmax.xlane.f32.xlu0 %v3395
      %v3397 = vpop.xlane.xlu0 %3396
      %v3398 = vsel %vm730, %v3364, -inf
      %3399 = vmax.xlane.f32.xlu0 %v3398
      %v3400 = vpop.xlane.xlu0 %3399
      %v3401 = vsel %vm730, %v3365, -inf
      %3402 = vmax.xlane.f32.xlu0 %v3401
      %v3403 = vpop.xlane.xlu0 %3402
      %v3404 = vsel %vm730, %v3366, -inf
      %3405 = vmax.xlane.f32.xlu0 %v3404
      %v3406 = vpop.xlane.xlu0 %3405
      %v3407 = vsel %vm730, %v3367, -inf
      %3408 = vmax.xlane.f32.xlu0 %v3407
      %v3409 = vpop.xlane.xlu0 %3408
      %v3410 = vsel %vm730, %v3368, -inf
      %3411 = vmax.xlane.f32.xlu0 %v3410
      %v3412 = vpop.xlane.xlu0 %3411
      %v3413 = vsel %vm730, %v3369, -inf
      %3414 = vmax.xlane.f32.xlu0 %v3413
      %v3415 = vpop.xlane.xlu0 %3414
      %v3416 = vsel %vm730, %v3370, -inf
      %3417 = vmax.xlane.f32.xlu0 %v3416
      %v3418 = vpop.xlane.xlu0 %3417
      %v3419 = vsub.f32 %v3355, %v3373
      %v3420 = vsub.f32 %v3356, %v3376
      %v3421 = vsub.f32 %v3357, %v3379
      %v3422 = vsub.f32 %v3358, %v3382
      %v3423 = vsub.f32 %v3359, %v3385
      %v3424 = vsub.f32 %v3360, %v3388
      %v3425 = vsub.f32 %v3361, %v3391
      %v3426 = vsub.f32 %v3362, %v3394
      %v3427 = vsub.f32 %v3363, %v3397
      %v3428 = vsub.f32 %v3364, %v3400
      %v3429 = vsub.f32 %v3365, %v3403
      %v3430 = vsub.f32 %v3366, %v3406
      %v3431 = vsub.f32 %v3367, %v3409
      %v3432 = vsub.f32 %v3368, %v3412
      %v3433 = vsub.f32 %v3369, %v3415
      %v3434 = vsub.f32 %v3370, %v3418
      %v3435 = vmul.f32 %v3419, 1.442695
      %v3436 = vpow.pop %v3435
      %v3437 = vmul.f32 %v3420, 1.442695
      %v3438 = vpow.pop %v3437
      %v3439 = vmul.f32 %v3421, 1.442695
      %v3440 = vpow.pop %v3439
      %v3441 = vmul.f32 %v3422, 1.442695
      %v3442 = vpow.pop %v3441
      %v3443 = vmul.f32 %v3423, 1.442695
      %v3444 = vpow.pop %v3443
      %v3445 = vmul.f32 %v3424, 1.442695
      %v3446 = vpow.pop %v3445
      %v3447 = vmul.f32 %v3425, 1.442695
      %v3448 = vpow.pop %v3447
      %v3449 = vmul.f32 %v3426, 1.442695
      %v3450 = vpow.pop %v3449
      %v3451 = vmul.f32 %v3427, 1.442695
      %v3452 = vpow.pop %v3451
      %v3453 = vmul.f32 %v3428, 1.442695
      %v3454 = vpow.pop %v3453
      %v3455 = vmul.f32 %v3429, 1.442695
      %v3456 = vpow.pop %v3455
      %v3457 = vmul.f32 %v3430, 1.442695
      %v3458 = vpow.pop %v3457
      %v3459 = vmul.f32 %v3431, 1.442695
      %v3460 = vpow.pop %v3459
      %v3461 = vmul.f32 %v3432, 1.442695
      %v3462 = vpow.pop %v3461
      %v3463 = vmul.f32 %v3433, 1.442695
      %v3464 = vpow.pop %v3463
      %v3465 = vmul.f32 %v3434, 1.442695
      %v3466 = vpow.pop %v3465
      %v3467 = vsel %vm730, %v3436, 0.0
      %3468 = vadd.xlane.f32.xlu0 %v3467
      %v3469 = vpop.xlane.xlu0 %3468
      %v3470 = vsel %vm730, %v3438, 0.0
      %3471 = vadd.xlane.f32.xlu0 %v3470
      %v3472 = vpop.xlane.xlu0 %3471
      %v3473 = vsel %vm730, %v3440, 0.0
      %3474 = vadd.xlane.f32.xlu0 %v3473
      %v3475 = vpop.xlane.xlu0 %3474
      %v3476 = vsel %vm730, %v3442, 0.0
      %3477 = vadd.xlane.f32.xlu0 %v3476
      %v3478 = vpop.xlane.xlu0 %3477
      %v3479 = vsel %vm730, %v3444, 0.0
      %3480 = vadd.xlane.f32.xlu0 %v3479
      %v3481 = vpop.xlane.xlu0 %3480
      %v3482 = vsel %vm730, %v3446, 0.0
      %3483 = vadd.xlane.f32.xlu0 %v3482
      %v3484 = vpop.xlane.xlu0 %3483
      %v3485 = vsel %vm730, %v3448, 0.0
      %3486 = vadd.xlane.f32.xlu0 %v3485
      %v3487 = vpop.xlane.xlu0 %3486
      %v3488 = vsel %vm730, %v3450, 0.0
      %3489 = vadd.xlane.f32.xlu0 %v3488
      %v3490 = vpop.xlane.xlu0 %3489
      %v3491 = vsel %vm730, %v3452, 0.0
      %3492 = vadd.xlane.f32.xlu0 %v3491
      %v3493 = vpop.xlane.xlu0 %3492
      %v3494 = vsel %vm730, %v3454, 0.0
      %3495 = vadd.xlane.f32.xlu0 %v3494
      %v3496 = vpop.xlane.xlu0 %3495
      %v3497 = vsel %vm730, %v3456, 0.0
      %3498 = vadd.xlane.f32.xlu0 %v3497
      %v3499 = vpop.xlane.xlu0 %3498
      %v3500 = vsel %vm730, %v3458, 0.0
      %3501 = vadd.xlane.f32.xlu0 %v3500
      %v3502 = vpop.xlane.xlu0 %3501
      %v3503 = vsel %vm730, %v3460, 0.0
      %3504 = vadd.xlane.f32.xlu0 %v3503
      %v3505 = vpop.xlane.xlu0 %3504
      %v3506 = vsel %vm730, %v3462, 0.0
      %3507 = vadd.xlane.f32.xlu0 %v3506
      %v3508 = vpop.xlane.xlu0 %3507
      %v3509 = vsel %vm730, %v3464, 0.0
      %3510 = vadd.xlane.f32.xlu0 %v3509
      %v3511 = vpop.xlane.xlu0 %3510
      %v3512 = vsel %vm730, %v3466, 0.0
      %3513 = vadd.xlane.f32.xlu0 %v3512
      %v3514 = vpop.xlane.xlu0 %3513
      %v3515 = vrcp.pop %v3469
      %v3516 = vrcp.pop %v3472
      %v3517 = vrcp.pop %v3475
      %v3518 = vrcp.pop %v3478
      %v3519 = vrcp.pop %v3481
      %v3520 = vrcp.pop %v3484
      %v3521 = vrcp.pop %v3487
      %v3522 = vrcp.pop %v3490
      %v3523 = vrcp.pop %v3493
      %v3524 = vrcp.pop %v3496
      %v3525 = vrcp.pop %v3499
      %v3526 = vrcp.pop %v3502
      %v3527 = vrcp.pop %v3505
      %v3528 = vrcp.pop %v3508
      %v3529 = vrcp.pop %v3511
      %v3530 = vrcp.pop %v3514
      %v3531 = vmul.f32 %v3436, %v3515
      %v3532 = vmul.f32 %v3438, %v3516
      %v3533 = vmul.f32 %v3440, %v3517
      %v3534 = vmul.f32 %v3442, %v3518
      %v3535 = vmul.f32 %v3444, %v3519
      %v3536 = vmul.f32 %v3446, %v3520
      %v3537 = vmul.f32 %v3448, %v3521
      %v3538 = vmul.f32 %v3450, %v3522
      %v3539 = vmul.f32 %v3452, %v3523
      %v3540 = vmul.f32 %v3454, %v3524
      %v3541 = vmul.f32 %v3456, %v3525
      %v3542 = vmul.f32 %v3458, %v3526
      %v3543 = vmul.f32 %v3460, %v3527
      %v3544 = vmul.f32 %v3462, %v3528
      %v3545 = vmul.f32 %v3464, %v3529
      %v3546 = vmul.f32 %v3466, %v3530
      %v3547 = vpack.c.bf16 %v3532, %v3531
      %v3548 = vpack.c.bf16 %v3534, %v3533
      %v3549 = vpack.c.bf16 %v3536, %v3535
      %v3550 = vpack.c.bf16 %v3538, %v3537
      %v3551 = vpack.c.bf16 %v3540, %v3539
      %v3552 = vpack.c.bf16 %v3542, %v3541
      %v3553 = vpack.c.bf16 %v3544, %v3543
      %v3554 = vpack.c.bf16 %v3546, %v3545
      %3555 = vrot.lane.b32.xlu0 %v3003, 64
      %v3556 = vpop.permute.xlu0 %3555
      %3557 = vrot.lane.b32.xlu0 %v3004, 64
      %v3558 = vpop.permute.xlu0 %3557
      %3559 = vrot.lane.b32.xlu0 %v3008, 64
      %v3560 = vpop.permute.xlu0 %3559
      %3561 = vrot.lane.b32.xlu0 %v3010, 64
      %v3562 = vpop.permute.xlu0 %3561
      %3563 = vrot.lane.b32.xlu0 %v3012, 64
      %v3564 = vpop.permute.xlu0 %3563
      %3565 = vrot.lane.b32.xlu0 %v3014, 64
      %v3566 = vpop.permute.xlu0 %3565
      %3567 = vrot.lane.b32.xlu0 %v3016, 64
      %v3568 = vpop.permute.xlu0 %3567
      %3569 = vrot.lane.b32.xlu0 %v3018, 64
      %v3570 = vpop.permute.xlu0 %3569
      %3579 = vxpose.xlu0.c.b16.start [1/8] %v3556, 128
      %3580 = vxpose.xlu0.c.b16.cont [2/8] %v3558, 128
      %3581 = vxpose.xlu0.c.b16.cont [3/8] 0, 128
      %3582 = vxpose.xlu0.c.b16.cont [4/8] 0, 128
      %3583 = vxpose.xlu0.c.b16.cont [5/8] 0, 128
      %3584 = vxpose.xlu0.c.b16.cont [6/8] 0, 128
      %3585 = vxpose.xlu0.c.b16.cont [7/8] 0, 128
      %3586 = vxpose.xlu0.c.b16.end [8/8] 0, 128
      %v3587 = vpop.trf.xlu0
      %v3588 = vpop.trf.xlu0
      %v3589 = vpop.trf.xlu0
      %v3590 = vpop.trf.xlu0
      %v3591 = vpop.trf.xlu0
      %v3592 = vpop.trf.xlu0
      %v3593 = vpop.trf.xlu0
      %v3594 = vpop.trf.xlu0
      %3595 = vxpose.xlu0.c.b16.start [1/8] %v3560, 128
      %3596 = vxpose.xlu0.c.b16.cont [2/8] %v3562, 128
      %3597 = vxpose.xlu0.c.b16.cont [3/8] 0, 128
      %3598 = vxpose.xlu0.c.b16.cont [4/8] 0, 128
      %3599 = vxpose.xlu0.c.b16.cont [5/8] 0, 128
      %3600 = vxpose.xlu0.c.b16.cont [6/8] 0, 128
      %3601 = vxpose.xlu0.c.b16.cont [7/8] 0, 128
      %3602 = vxpose.xlu0.c.b16.end [8/8] 0, 128
      %v3603 = vpop.trf.xlu0
      %v3604 = vpop.trf.xlu0
      %v3605 = vpop.trf.xlu0
      %v3606 = vpop.trf.xlu0
      %v3607 = vpop.trf.xlu0
      %v3608 = vpop.trf.xlu0
      %v3609 = vpop.trf.xlu0
      %v3610 = vpop.trf.xlu0
      %3611 = vxpose.xlu0.c.b16.start [1/8] %v3564, 128
      %3612 = vxpose.xlu0.c.b16.cont [2/8] %v3566, 128
      %3613 = vxpose.xlu0.c.b16.cont [3/8] 0, 128
      %3614 = vxpose.xlu0.c.b16.cont [4/8] 0, 128
      %3615 = vxpose.xlu0.c.b16.cont [5/8] 0, 128
      %3616 = vxpose.xlu0.c.b16.cont [6/8] 0, 128
      %3617 = vxpose.xlu0.c.b16.cont [7/8] 0, 128
      %3618 = vxpose.xlu0.c.b16.end [8/8] 0, 128
      %v3619 = vpop.trf.xlu0
      %v3620 = vpop.trf.xlu0
      %v3621 = vpop.trf.xlu0
      %v3622 = vpop.trf.xlu0
      %v3623 = vpop.trf.xlu0
      %v3624 = vpop.trf.xlu0
      %v3625 = vpop.trf.xlu0
      %v3626 = vpop.trf.xlu0
      %3627 = vxpose.xlu0.c.b16.start [1/8] %v3568, 128
      %3628 = vxpose.xlu0.c.b16.cont [2/8] %v3570, 128
      %3629 = vxpose.xlu0.c.b16.cont [3/8] 0, 128
      %3630 = vxpose.xlu0.c.b16.cont [4/8] 0, 128
      %3631 = vxpose.xlu0.c.b16.cont [5/8] 0, 128
      %3632 = vxpose.xlu0.c.b16.cont [6/8] 0, 128
      %3633 = vxpose.xlu0.c.b16.cont [7/8] 0, 128
      %3634 = vxpose.xlu0.c.b16.end [8/8] 0, 128
      %v3635 = vpop.trf.xlu0
      %v3636 = vpop.trf.xlu0
      %v3637 = vpop.trf.xlu0
      %v3638 = vpop.trf.xlu0
      %v3639 = vpop.trf.xlu0
      %v3640 = vpop.trf.xlu0
      %v3641 = vpop.trf.xlu0
      %v3642 = vpop.trf.xlu0
      %v3644 = vsel %vm730, %v3587, 0
      %v3647 = vsel %vm730, %v3547, 0
      %v3650 = vsel %vm730, %v3548, 0
      %3652 = vmatprep.subr.bf16.mxu0 0
      %3653 = vmatpush1.bf16.xpose.msra.mxu0 0
      %3654 = vmatprep.subr.bf16.mxu0 0
      %3655 = vmatpush1.bf16.xpose.msra.mxu0 0
      %3656 = vmatprep.subr.bf16.mxu0 0
      %3657 = vmatpush1.bf16.xpose.msra.mxu0 0
      %3658 = vmatprep.subr.bf16.mxu0 0
      %3659 = vmatpush1.bf16.xpose.msra.mxu0 0
      %3660 = vmatprep.subr.bf16.mxu0 0
      %3661 = vmatpush1.bf16.xpose.msra.mxu0 0
      %3662 = vmatprep.subr.bf16.mxu0 0
      %3663 = vmatpush1.bf16.xpose.msra.mxu0 0
      %3664 = vmatprep.subr.bf16.mxu0 0
      %3665 = vmatpush1.bf16.xpose.msra.mxu0 %v3650
      %3666 = vmatprep.subr.bf16.mxu0 0
      %3667 = vmatpush1.bf16.xpose.msra.mxu0 %v3647
      %3668 = vmatprep.subr.bf16.mxu0 0
      %3669 = vmatpush2.bf16.xpose.msra.mxu0 0
      %3670 = vmatprep.subr.bf16.mxu0 0
      %3671 = vmatpush2.bf16.xpose.msra.mxu0 0
      %3672 = vmatprep.subr.bf16.mxu0 0
      %3673 = vmatpush2.bf16.xpose.msra.mxu0 0
      %3674 = vmatprep.subr.bf16.mxu0 0
      %3675 = vmatpush2.bf16.xpose.msra.mxu0 0
      %3676 = vmatprep.subr.bf16.mxu0 0
      %3677 = vmatpush2.bf16.xpose.msra.mxu0 0
      %3678 = vmatprep.subr.bf16.mxu0 0
      %3679 = vmatpush2.bf16.xpose.msra.mxu0 0
      %3680 = vmatprep.subr.bf16.mxu0 0
      %3681 = vmatpush2.bf16.xpose.msra.mxu0 0
      %3682 = vmatprep.subr.bf16.mxu0 0
      %3683 = vmatpush2.bf16.xpose.msra.mxu0 0
      %3684 = vmatprep.mubr.bf16.mxu0 0
      %3685 = vmatmul.mubr.bf16.gmra.mxu0 %v3644
      %v3686 = vpop.f32.mrf.mxu0
      %v3687 = vadd.f32 0.0, %v3686
      %v3688 = vpop.f32.mrf.mxu0
      %v3689 = vpop.f32.mrf.mxu0
      %v3690 = vpop.f32.mrf.mxu0
      %3691 = vdwg.mxu0
      %v3693 = vsel %vm730, %v3603, 0
      %v3696 = vsel %vm730, %v3549, 0
      %v3699 = vsel %vm730, %v3550, 0
      %3701 = vmatprep.subr.bf16.mxu0 0
      %3702 = vmatpush1.bf16.xpose.msra.mxu0 0
      %3703 = vmatprep.subr.bf16.mxu0 0
      %3704 = vmatpush1.bf16.xpose.msra.mxu0 0
      %3705 = vmatprep.subr.bf16.mxu0 0
      %3706 = vmatpush1.bf16.xpose.msra.mxu0 0
      %3707 = vmatprep.subr.bf16.mxu0 0
      %3708 = vmatpush1.bf16.xpose.msra.mxu0 0
      %3709 = vmatprep.subr.bf16.mxu0 0
      %3710 = vmatpush1.bf16.xpose.msra.mxu0 0
      %3711 = vmatprep.subr.bf16.mxu0 0
      %3712 = vmatpush1.bf16.xpose.msra.mxu0 0
      %3713 = vmatprep.subr.bf16.mxu0 0
      %3714 = vmatpush1.bf16.xpose.msra.mxu0 %v3699
      %3715 = vmatprep.subr.bf16.mxu0 0
      %3716 = vmatpush1.bf16.xpose.msra.mxu0 %v3696
      %3717 = vmatprep.subr.bf16.mxu0 0
      %3718 = vmatpush2.bf16.xpose.msra.mxu0 0
      %3719 = vmatprep.subr.bf16.mxu0 0
      %3720 = vmatpush2.bf16.xpose.msra.mxu0 0
      %3721 = vmatprep.subr.bf16.mxu0 0
      %3722 = vmatpush2.bf16.xpose.msra.mxu0 0
      %3723 = vmatprep.subr.bf16.mxu0 0
      %3724 = vmatpush2.bf16.xpose.msra.mxu0 0
      %3725 = vmatprep.subr.bf16.mxu0 0
      %3726 = vmatpush2.bf16.xpose.msra.mxu0 0
      %3727 = vmatprep.subr.bf16.mxu0 0
      %3728 = vmatpush2.bf16.xpose.msra.mxu0 0
      %3729 = vmatprep.subr.bf16.mxu0 0
      %3730 = vmatpush2.bf16.xpose.msra.mxu0 0
      %3731 = vmatprep.subr.bf16.mxu0 0
      %3732 = vmatpush2.bf16.xpose.msra.mxu0 0
      %3733 = vmatprep.mubr.bf16.mxu0 0
      %3734 = vmatmul.mubr.bf16.gmra.mxu0 %v3693
      %v3735 = vpop.f32.mrf.mxu0
      %v3736 = vadd.f32 0.0, %v3735
      %v3737 = vpop.f32.mrf.mxu0
      %v3738 = vpop.f32.mrf.mxu0
      %v3739 = vpop.f32.mrf.mxu0
      %3740 = vdwg.mxu0
      %v3742 = vsel %vm730, %v3619, 0
      %v3745 = vsel %vm730, %v3551, 0
      %v3748 = vsel %vm730, %v3552, 0
      %3750 = vmatprep.subr.bf16.mxu0 0
      %3751 = vmatpush1.bf16.xpose.msra.mxu0 0
      %3752 = vmatprep.subr.bf16.mxu0 0
      %3753 = vmatpush1.bf16.xpose.msra.mxu0 0
      %3754 = vmatprep.subr.bf16.mxu0 0
      %3755 = vmatpush1.bf16.xpose.msra.mxu0 0
      %3756 = vmatprep.subr.bf16.mxu0 0
      %3757 = vmatpush1.bf16.xpose.msra.mxu0 0
      %3758 = vmatprep.subr.bf16.mxu0 0
      %3759 = vmatpush1.bf16.xpose.msra.mxu0 0
      %3760 = vmatprep.subr.bf16.mxu0 0
      %3761 = vmatpush1.bf16.xpose.msra.mxu0 0
      %3762 = vmatprep.subr.bf16.mxu0 0
      %3763 = vmatpush1.bf16.xpose.msra.mxu0 %v3748
      %3764 = vmatprep.subr.bf16.mxu0 0
      %3765 = vmatpush1.bf16.xpose.msra.mxu0 %v3745
      %3766 = vmatprep.subr.bf16.mxu0 0
      %3767 = vmatpush2.bf16.xpose.msra.mxu0 0
      %3768 = vmatprep.subr.bf16.mxu0 0
      %3769 = vmatpush2.bf16.xpose.msra.mxu0 0
      %3770 = vmatprep.subr.bf16.mxu0 0
      %3771 = vmatpush2.bf16.xpose.msra.mxu0 0
      %3772 = vmatprep.subr.bf16.mxu0 0
      %3773 = vmatpush2.bf16.xpose.msra.mxu0 0
      %3774 = vmatprep.subr.bf16.mxu0 0
      %3775 = vmatpush2.bf16.xpose.msra.mxu0 0
      %3776 = vmatprep.subr.bf16.mxu0 0
      %3777 = vmatpush2.bf16.xpose.msra.mxu0 0
      %3778 = vmatprep.subr.bf16.mxu0 0
      %3779 = vmatpush2.bf16.xpose.msra.mxu0 0
      %3780 = vmatprep.subr.bf16.mxu0 0
      %3781 = vmatpush2.bf16.xpose.msra.mxu0 0
      %3782 = vmatprep.mubr.bf16.mxu0 0
      %3783 = vmatmul.mubr.bf16.gmra.mxu0 %v3742
      %v3784 = vpop.f32.mrf.mxu0
      %v3785 = vadd.f32 0.0, %v3784
      %v3786 = vpop.f32.mrf.mxu0
      %v3787 = vpop.f32.mrf.mxu0
      %v3788 = vpop.f32.mrf.mxu0
      %3789 = vdwg.mxu0
      %v3791 = vsel %vm730, %v3635, 0
      %v3794 = vsel %vm730, %v3553, 0
      %v3797 = vsel %vm730, %v3554, 0
      %3799 = vmatprep.subr.bf16.mxu0 0
      %3800 = vmatpush1.bf16.xpose.msra.mxu0 0
      %3801 = vmatprep.subr.bf16.mxu0 0
      %3802 = vmatpush1.bf16.xpose.msra.mxu0 0
      %3803 = vmatprep.subr.bf16.mxu0 0
      %3804 = vmatpush1.bf16.xpose.msra.mxu0 0
      %3805 = vmatprep.subr.bf16.mxu0 0
      %3806 = vmatpush1.bf16.xpose.msra.mxu0 0
      %3807 = vmatprep.subr.bf16.mxu0 0
      %3808 = vmatpush1.bf16.xpose.msra.mxu0 0
      %3809 = vmatprep.subr.bf16.mxu0 0
      %3810 = vmatpush1.bf16.xpose.msra.mxu0 0
      %3811 = vmatprep.subr.bf16.mxu0 0
      %3812 = vmatpush1.bf16.xpose.msra.mxu0 %v3797
      %3813 = vmatprep.subr.bf16.mxu0 0
      %3814 = vmatpush1.bf16.xpose.msra.mxu0 %v3794
      %3815 = vmatprep.subr.bf16.mxu0 0
      %3816 = vmatpush2.bf16.xpose.msra.mxu0 0
      %3817 = vmatprep.subr.bf16.mxu0 0
      %3818 = vmatpush2.bf16.xpose.msra.mxu0 0
      %3819 = vmatprep.subr.bf16.mxu0 0
      %3820 = vmatpush2.bf16.xpose.msra.mxu0 0
      %3821 = vmatprep.subr.bf16.mxu0 0
      %3822 = vmatpush2.bf16.xpose.msra.mxu0 0
      %3823 = vmatprep.subr.bf16.mxu0 0
      %3824 = vmatpush2.bf16.xpose.msra.mxu0 0
      %3825 = vmatprep.subr.bf16.mxu0 0
      %3826 = vmatpush2.bf16.xpose.msra.mxu0 0
      %3827 = vmatprep.subr.bf16.mxu0 0
      %3828 = vmatpush2.bf16.xpose.msra.mxu0 0
      %3829 = vmatprep.subr.bf16.mxu0 0
      %3830 = vmatpush2.bf16.xpose.msra.mxu0 0
      %3831 = vmatprep.mubr.bf16.mxu0 0
      %3832 = vmatmul.mubr.bf16.gmra.mxu0 %v3791
      %v3833 = vpop.f32.mrf.mxu0
      %v3834 = vadd.f32 0.0, %v3833
      %v3835 = vpop.f32.mrf.mxu0
      %v3836 = vpop.f32.mrf.mxu0
      %v3837 = vpop.f32.mrf.mxu0
      %3838 = vdwg.mxu0
      %3839 = vxpose.xlu0.b32.start [1/16] %v3687, 128
      %3840 = vxpose.xlu0.b32.cont [2/16] 0.0, 128
      %3841 = vxpose.xlu0.b32.cont [3/16] 0.0, 128
      %3842 = vxpose.xlu0.b32.cont [4/16] 0.0, 128
      %3843 = vxpose.xlu0.b32.cont [5/16] 0.0, 128
      %3844 = vxpose.xlu0.b32.cont [6/16] 0.0, 128
      %3845 = vxpose.xlu0.b32.cont [7/16] 0.0, 128
      %3846 = vxpose.xlu0.b32.cont [8/16] 0.0, 128
      %3847 = vxpose.xlu0.b32.cont [9/16] 0.0, 128
      %3848 = vxpose.xlu0.b32.cont [10/16] 0.0, 128
      %3849 = vxpose.xlu0.b32.cont [11/16] 0.0, 128
      %3850 = vxpose.xlu0.b32.cont [12/16] 0.0, 128
      %3851 = vxpose.xlu0.b32.cont [13/16] 0.0, 128
      %3852 = vxpose.xlu0.b32.cont [14/16] 0.0, 128
      %3853 = vxpose.xlu0.b32.cont [15/16] 0.0, 128
      %3854 = vxpose.xlu0.b32.end [16/16] 0.0, 128
      %v3855 = vpop.trf.xlu0
      %v3856 = vpop.trf.xlu0
      %v3857 = vpop.trf.xlu0
      %v3858 = vpop.trf.xlu0
      %v3859 = vpop.trf.xlu0
      %v3860 = vpop.trf.xlu0
      %v3861 = vpop.trf.xlu0
      %v3862 = vpop.trf.xlu0
      %v3863 = vpop.trf.xlu0
      %v3864 = vpop.trf.xlu0
      %v3865 = vpop.trf.xlu0
      %v3866 = vpop.trf.xlu0
      %v3867 = vpop.trf.xlu0
      %v3868 = vpop.trf.xlu0
      %v3869 = vpop.trf.xlu0
      %v3870 = vpop.trf.xlu0
      %3871 = vxpose.xlu0.b32.start [1/16] %v3736, 128
      %3872 = vxpose.xlu0.b32.cont [2/16] 0.0, 128
      %3873 = vxpose.xlu0.b32.cont [3/16] 0.0, 128
      %3874 = vxpose.xlu0.b32.cont [4/16] 0.0, 128
      %3875 = vxpose.xlu0.b32.cont [5/16] 0.0, 128
      %3876 = vxpose.xlu0.b32.cont [6/16] 0.0, 128
      %3877 = vxpose.xlu0.b32.cont [7/16] 0.0, 128
      %3878 = vxpose.xlu0.b32.cont [8/16] 0.0, 128
      %3879 = vxpose.xlu0.b32.cont [9/16] 0.0, 128
      %3880 = vxpose.xlu0.b32.cont [10/16] 0.0, 128
      %3881 = vxpose.xlu0.b32.cont [11/16] 0.0, 128
      %3882 = vxpose.xlu0.b32.cont [12/16] 0.0, 128
      %3883 = vxpose.xlu0.b32.cont [13/16] 0.0, 128
      %3884 = vxpose.xlu0.b32.cont [14/16] 0.0, 128
      %3885 = vxpose.xlu0.b32.cont [15/16] 0.0, 128
      %3886 = vxpose.xlu0.b32.end [16/16] 0.0, 128
      %v3887 = vpop.trf.xlu0
      %v3888 = vpop.trf.xlu0
      %v3889 = vpop.trf.xlu0
      %v3890 = vpop.trf.xlu0
      %v3891 = vpop.trf.xlu0
      %v3892 = vpop.trf.xlu0
      %v3893 = vpop.trf.xlu0
      %v3894 = vpop.trf.xlu0
      %v3895 = vpop.trf.xlu0
      %v3896 = vpop.trf.xlu0
      %v3897 = vpop.trf.xlu0
      %v3898 = vpop.trf.xlu0
      %v3899 = vpop.trf.xlu0
      %v3900 = vpop.trf.xlu0
      %v3901 = vpop.trf.xlu0
      %v3902 = vpop.trf.xlu0
      %3903 = vxpose.xlu0.b32.start [1/16] %v3785, 128
      %3904 = vxpose.xlu0.b32.cont [2/16] 0.0, 128
      %3905 = vxpose.xlu0.b32.cont [3/16] 0.0, 128
      %3906 = vxpose.xlu0.b32.cont [4/16] 0.0, 128
      %3907 = vxpose.xlu0.b32.cont [5/16] 0.0, 128
      %3908 = vxpose.xlu0.b32.cont [6/16] 0.0, 128
      %3909 = vxpose.xlu0.b32.cont [7/16] 0.0, 128
      %3910 = vxpose.xlu0.b32.cont [8/16] 0.0, 128
      %3911 = vxpose.xlu0.b32.cont [9/16] 0.0, 128
      %3912 = vxpose.xlu0.b32.cont [10/16] 0.0, 128
      %3913 = vxpose.xlu0.b32.cont [11/16] 0.0, 128
      %3914 = vxpose.xlu0.b32.cont [12/16] 0.0, 128
      %3915 = vxpose.xlu0.b32.cont [13/16] 0.0, 128
      %3916 = vxpose.xlu0.b32.cont [14/16] 0.0, 128
      %3917 = vxpose.xlu0.b32.cont [15/16] 0.0, 128
      %3918 = vxpose.xlu0.b32.end [16/16] 0.0, 128
      %v3919 = vpop.trf.xlu0
      %v3920 = vpop.trf.xlu0
      %v3921 = vpop.trf.xlu0
      %v3922 = vpop.trf.xlu0
      %v3923 = vpop.trf.xlu0
      %v3924 = vpop.trf.xlu0
      %v3925 = vpop.trf.xlu0
      %v3926 = vpop.trf.xlu0
      %v3927 = vpop.trf.xlu0
      %v3928 = vpop.trf.xlu0
      %v3929 = vpop.trf.xlu0
      %v3930 = vpop.trf.xlu0
      %v3931 = vpop.trf.xlu0
      %v3932 = vpop.trf.xlu0
      %v3933 = vpop.trf.xlu0
      %v3934 = vpop.trf.xlu0
      %3935 = vxpose.xlu0.b32.start [1/16] %v3834, 128
      %3936 = vxpose.xlu0.b32.cont [2/16] 0.0, 128
      %3937 = vxpose.xlu0.b32.cont [3/16] 0.0, 128
      %3938 = vxpose.xlu0.b32.cont [4/16] 0.0, 128
      %3939 = vxpose.xlu0.b32.cont [5/16] 0.0, 128
      %3940 = vxpose.xlu0.b32.cont [6/16] 0.0, 128
      %3941 = vxpose.xlu0.b32.cont [7/16] 0.0, 128
      %3942 = vxpose.xlu0.b32.cont [8/16] 0.0, 128
      %3943 = vxpose.xlu0.b32.cont [9/16] 0.0, 128
      %3944 = vxpose.xlu0.b32.cont [10/16] 0.0, 128
      %3945 = vxpose.xlu0.b32.cont [11/16] 0.0, 128
      %3946 = vxpose.xlu0.b32.cont [12/16] 0.0, 128
      %3947 = vxpose.xlu0.b32.cont [13/16] 0.0, 128
      %3948 = vxpose.xlu0.b32.cont [14/16] 0.0, 128
      %3949 = vxpose.xlu0.b32.cont [15/16] 0.0, 128
      %3950 = vxpose.xlu0.b32.end [16/16] 0.0, 128
      %v3951 = vpop.trf.xlu0
      %v3952 = vpop.trf.xlu0
      %v3953 = vpop.trf.xlu0
      %v3954 = vpop.trf.xlu0
      %v3955 = vpop.trf.xlu0
      %v3956 = vpop.trf.xlu0
      %v3957 = vpop.trf.xlu0
      %v3958 = vpop.trf.xlu0
      %v3959 = vpop.trf.xlu0
      %v3960 = vpop.trf.xlu0
      %v3961 = vpop.trf.xlu0
      %v3962 = vpop.trf.xlu0
      %v3963 = vpop.trf.xlu0
      %v3964 = vpop.trf.xlu0
      %v3965 = vpop.trf.xlu0
      %v3966 = vpop.trf.xlu0
      %v3967 = vcombine.low %v3855, %v3919
      %v3968 = vcombine.high %v3855, %v3919
      %v3970 = vunpack.c.l.s4 1983009808
      %v3971 = vunpack.c.0.s8 %v3970
      %v3972 = vlaneseq
      %v3973 = vshrl.u32 %v3972, 7
      %v3974 = vsub.s32 %v3971, %v3973
      %v3975 = vrot.slane %v3967, %v3974
      %v3977 = vunpack.c.l.s4 1983009808
      %v3978 = vunpack.c.0.s8 %v3977
      %v3979 = vlaneseq
      %v3980 = vshrl.u32 %v3979, 7
      %v3981 = vsub.s32 %v3978, %v3980
      %v3982 = vrot.slane %v3968, %v3981
      %v3983 = vcombine.low %v3887, %v3951
      %v3984 = vcombine.high %v3887, %v3951
      %v3986 = vunpack.c.l.s4 1983009808
      %v3987 = vunpack.c.0.s8 %v3986
      %v3988 = vlaneseq
      %v3989 = vshrl.u32 %v3988, 7
      %v3990 = vsub.s32 %v3987, %v3989
      %v3991 = vrot.slane %v3983, %v3990
      %v3993 = vunpack.c.l.s4 1983009808
      %v3994 = vunpack.c.0.s8 %v3993
      %v3995 = vlaneseq
      %v3996 = vshrl.u32 %v3995, 7
      %v3997 = vsub.s32 %v3994, %v3996
      %v3998 = vrot.slane %v3984, %v3997
      %v3999 = vcombine.low %v3975, %v3991
      %v4000 = vcombine.high %v3975, %v3991
      %v4002 = vunpack.c.l.s4 1934713408
      %v4003 = vunpack.c.0.s8 %v4002
      %v4004 = vlaneseq
      %v4005 = vshrl.u32 %v4004, 7
      %v4006 = vsub.s32 %v4003, %v4005
      %v4007 = vrot.slane %v3999, %v4006
      %v4009 = vunpack.c.l.s4 1934713408
      %v4010 = vunpack.c.0.s8 %v4009
      %v4011 = vlaneseq
      %v4012 = vshrl.u32 %v4011, 7
      %v4013 = vsub.s32 %v4010, %v4012
      %v4014 = vrot.slane %v4000, %v4013
      %v4015 = vcombine.low %v3982, %v3998
      %v4016 = vcombine.high %v3982, %v3998
      %v4018 = vunpack.c.l.s4 1934713408
      %v4019 = vunpack.c.0.s8 %v4018
      %v4020 = vlaneseq
      %v4021 = vshrl.u32 %v4020, 7
      %v4022 = vsub.s32 %v4019, %v4021
      %v4023 = vrot.slane %v4015, %v4022
      %v4025 = vunpack.c.l.s4 1934713408
      %v4026 = vunpack.c.0.s8 %v4025
      %v4027 = vlaneseq
      %v4028 = vshrl.u32 %v4027, 7
      %v4029 = vsub.s32 %v4026, %v4028
      %v4030 = vrot.slane %v4016, %v4029
      %v4031 = vcombine.high %v4007, 0.0
      %v4032 = vcombine.high %v4014, 0.0
      %v4033 = vcombine.high %v4023, 0.0
      %v4034 = vcombine.high %v4030, 0.0
      %v4035 = vcombine.low %v3856, %v3920
      %v4036 = vcombine.high %v3856, %v3920
      %v4038 = vunpack.c.l.s4 1983009808
      %v4039 = vunpack.c.0.s8 %v4038
      %v4040 = vlaneseq
      %v4041 = vshrl.u32 %v4040, 7
      %v4042 = vsub.s32 %v4039, %v4041
      %v4043 = vrot.slane %v4035, %v4042
      %v4045 = vunpack.c.l.s4 1983009808
      %v4046 = vunpack.c.0.s8 %v4045
      %v4047 = vlaneseq
      %v4048 = vshrl.u32 %v4047, 7
      %v4049 = vsub.s32 %v4046, %v4048
      %v4050 = vrot.slane %v4036, %v4049
      %v4051 = vcombine.low %v3888, %v3952
      %v4052 = vcombine.high %v3888, %v3952
      %v4054 = vunpack.c.l.s4 1983009808
      %v4055 = vunpack.c.0.s8 %v4054
      %v4056 = vlaneseq
      %v4057 = vshrl.u32 %v4056, 7
      %v4058 = vsub.s32 %v4055, %v4057
      %v4059 = vrot.slane %v4051, %v4058
      %v4061 = vunpack.c.l.s4 1983009808
      %v4062 = vunpack.c.0.s8 %v4061
      %v4063 = vlaneseq
      %v4064 = vshrl.u32 %v4063, 7
      %v4065 = vsub.s32 %v4062, %v4064
      %v4066 = vrot.slane %v4052, %v4065
      %v4067 = vcombine.low %v4043, %v4059
      %v4068 = vcombine.high %v4043, %v4059
      %v4070 = vunpack.c.l.s4 1934713408
      %v4071 = vunpack.c.0.s8 %v4070
      %v4072 = vlaneseq
      %v4073 = vshrl.u32 %v4072, 7
      %v4074 = vsub.s32 %v4071, %v4073
      %v4075 = vrot.slane %v4067, %v4074
      %v4077 = vunpack.c.l.s4 1934713408
      %v4078 = vunpack.c.0.s8 %v4077
      %v4079 = vlaneseq
      %v4080 = vshrl.u32 %v4079, 7
      %v4081 = vsub.s32 %v4078, %v4080
      %v4082 = vrot.slane %v4068, %v4081
      %v4083 = vcombine.low %v4050, %v4066
      %v4084 = vcombine.high %v4050, %v4066
      %v4086 = vunpack.c.l.s4 1934713408
      %v4087 = vunpack.c.0.s8 %v4086
      %v4088 = vlaneseq
      %v4089 = vshrl.u32 %v4088, 7
      %v4090 = vsub.s32 %v4087, %v4089
      %v4091 = vrot.slane %v4083, %v4090
      %v4093 = vunpack.c.l.s4 1934713408
      %v4094 = vunpack.c.0.s8 %v4093
      %v4095 = vlaneseq
      %v4096 = vshrl.u32 %v4095, 7
      %v4097 = vsub.s32 %v4094, %v4096
      %v4098 = vrot.slane %v4084, %v4097
      %v4099 = vcombine.high %v4075, 0.0
      %v4100 = vcombine.high %v4082, 0.0
      %v4101 = vcombine.high %v4091, 0.0
      %v4102 = vcombine.high %v4098, 0.0
      %v4103 = vcombine.low %v3857, %v3921
      %v4104 = vcombine.high %v3857, %v3921
      %v4106 = vunpack.c.l.s4 1983009808
      %v4107 = vunpack.c.0.s8 %v4106
      %v4108 = vlaneseq
      %v4109 = vshrl.u32 %v4108, 7
      %v4110 = vsub.s32 %v4107, %v4109
      %v4111 = vrot.slane %v4103, %v4110
      %v4113 = vunpack.c.l.s4 1983009808
      %v4114 = vunpack.c.0.s8 %v4113
      %v4115 = vlaneseq
      %v4116 = vshrl.u32 %v4115, 7
      %v4117 = vsub.s32 %v4114, %v4116
      %v4118 = vrot.slane %v4104, %v4117
      %v4119 = vcombine.low %v3889, %v3953
      %v4120 = vcombine.high %v3889, %v3953
      %v4122 = vunpack.c.l.s4 1983009808
      %v4123 = vunpack.c.0.s8 %v4122
      %v4124 = vlaneseq
      %v4125 = vshrl.u32 %v4124, 7
      %v4126 = vsub.s32 %v4123, %v4125
      %v4127 = vrot.slane %v4119, %v4126
      %v4129 = vunpack.c.l.s4 1983009808
      %v4130 = vunpack.c.0.s8 %v4129
      %v4131 = vlaneseq
      %v4132 = vshrl.u32 %v4131, 7
      %v4133 = vsub.s32 %v4130, %v4132
      %v4134 = vrot.slane %v4120, %v4133
      %v4135 = vcombine.low %v4111, %v4127
      %v4136 = vcombine.high %v4111, %v4127
      %v4138 = vunpack.c.l.s4 1934713408
      %v4139 = vunpack.c.0.s8 %v4138
      %v4140 = vlaneseq
      %v4141 = vshrl.u32 %v4140, 7
      %v4142 = vsub.s32 %v4139, %v4141
      %v4143 = vrot.slane %v4135, %v4142
      %v4145 = vunpack.c.l.s4 1934713408
      %v4146 = vunpack.c.0.s8 %v4145
      %v4147 = vlaneseq
      %v4148 = vshrl.u32 %v4147, 7
      %v4149 = vsub.s32 %v4146, %v4148
      %v4150 = vrot.slane %v4136, %v4149
      %v4151 = vcombine.low %v4118, %v4134
      %v4152 = vcombine.high %v4118, %v4134
      %v4154 = vunpack.c.l.s4 1934713408
      %v4155 = vunpack.c.0.s8 %v4154
      %v4156 = vlaneseq
      %v4157 = vshrl.u32 %v4156, 7
      %v4158 = vsub.s32 %v4155, %v4157
      %v4159 = vrot.slane %v4151, %v4158
      %v4161 = vunpack.c.l.s4 1934713408
      %v4162 = vunpack.c.0.s8 %v4161
      %v4163 = vlaneseq
      %v4164 = vshrl.u32 %v4163, 7
      %v4165 = vsub.s32 %v4162, %v4164
      %v4166 = vrot.slane %v4152, %v4165
      %v4167 = vcombine.high %v4143, 0.0
      %v4168 = vcombine.high %v4150, 0.0
      %v4169 = vcombine.high %v4159, 0.0
      %v4170 = vcombine.high %v4166, 0.0
      %v4171 = vcombine.low %v3858, %v3922
      %v4172 = vcombine.high %v3858, %v3922
      %v4174 = vunpack.c.l.s4 1983009808
      %v4175 = vunpack.c.0.s8 %v4174
      %v4176 = vlaneseq
      %v4177 = vshrl.u32 %v4176, 7
      %v4178 = vsub.s32 %v4175, %v4177
      %v4179 = vrot.slane %v4171, %v4178
      %v4181 = vunpack.c.l.s4 1983009808
      %v4182 = vunpack.c.0.s8 %v4181
      %v4183 = vlaneseq
      %v4184 = vshrl.u32 %v4183, 7
      %v4185 = vsub.s32 %v4182, %v4184
      %v4186 = vrot.slane %v4172, %v4185
      %v4187 = vcombine.low %v3890, %v3954
      %v4188 = vcombine.high %v3890, %v3954
      %v4190 = vunpack.c.l.s4 1983009808
      %v4191 = vunpack.c.0.s8 %v4190
      %v4192 = vlaneseq
      %v4193 = vshrl.u32 %v4192, 7
      %v4194 = vsub.s32 %v4191, %v4193
      %v4195 = vrot.slane %v4187, %v4194
      %v4197 = vunpack.c.l.s4 1983009808
      %v4198 = vunpack.c.0.s8 %v4197
      %v4199 = vlaneseq
      %v4200 = vshrl.u32 %v4199, 7
      %v4201 = vsub.s32 %v4198, %v4200
      %v4202 = vrot.slane %v4188, %v4201
      %v4203 = vcombine.low %v4179, %v4195
      %v4204 = vcombine.high %v4179, %v4195
      %v4206 = vunpack.c.l.s4 1934713408
      %v4207 = vunpack.c.0.s8 %v4206
      %v4208 = vlaneseq
      %v4209 = vshrl.u32 %v4208, 7
      %v4210 = vsub.s32 %v4207, %v4209
      %v4211 = vrot.slane %v4203, %v4210
      %v4213 = vunpack.c.l.s4 1934713408
      %v4214 = vunpack.c.0.s8 %v4213
      %v4215 = vlaneseq
      %v4216 = vshrl.u32 %v4215, 7
      %v4217 = vsub.s32 %v4214, %v4216
      %v4218 = vrot.slane %v4204, %v4217
      %v4219 = vcombine.low %v4186, %v4202
      %v4220 = vcombine.high %v4186, %v4202
      %v4222 = vunpack.c.l.s4 1934713408
      %v4223 = vunpack.c.0.s8 %v4222
      %v4224 = vlaneseq
      %v4225 = vshrl.u32 %v4224, 7
      %v4226 = vsub.s32 %v4223, %v4225
      %v4227 = vrot.slane %v4219, %v4226
      %v4229 = vunpack.c.l.s4 1934713408
      %v4230 = vunpack.c.0.s8 %v4229
      %v4231 = vlaneseq
      %v4232 = vshrl.u32 %v4231, 7
      %v4233 = vsub.s32 %v4230, %v4232
      %v4234 = vrot.slane %v4220, %v4233
      %v4235 = vcombine.high %v4211, 0.0
      %v4236 = vcombine.high %v4218, 0.0
      %v4237 = vcombine.high %v4227, 0.0
      %v4238 = vcombine.high %v4234, 0.0
      %v4239 = vcombine.low %v4007, %v4014
      %v4241 = vunpack.c.l.s4 1983009808
      %v4242 = vunpack.c.0.s8 %v4241
      %v4243 = vlaneseq
      %v4244 = vshrl.u32 %v4243, 7
      %v4245 = vsub.s32 %v4242, %v4244
      %v4246 = vrot.slane %v4239, %v4245
      %v4247 = vcombine.low %v4031, %v4032
      %v4249 = vunpack.c.l.s4 1983009808
      %v4250 = vunpack.c.0.s8 %v4249
      %v4251 = vlaneseq
      %v4252 = vshrl.u32 %v4251, 7
      %v4253 = vsub.s32 %v4250, %v4252
      %v4254 = vrot.slane %v4247, %v4253
      %v4255 = vcombine.low %v4023, %v4030
      %v4257 = vunpack.c.l.s4 1983009808
      %v4258 = vunpack.c.0.s8 %v4257
      %v4259 = vlaneseq
      %v4260 = vshrl.u32 %v4259, 7
      %v4261 = vsub.s32 %v4258, %v4260
      %v4262 = vrot.slane %v4255, %v4261
      %v4263 = vcombine.low %v4033, %v4034
      %v4265 = vunpack.c.l.s4 1983009808
      %v4266 = vunpack.c.0.s8 %v4265
      %v4267 = vlaneseq
      %v4268 = vshrl.u32 %v4267, 7
      %v4269 = vsub.s32 %v4266, %v4268
      %v4270 = vrot.slane %v4263, %v4269
      %v4271 = vcombine.low %v4246, %v4254
      %v4272 = vcombine.high %v4246, %v4254
      %v4274 = vunpack.c.l.s4 1934713408
      %v4275 = vunpack.c.0.s8 %v4274
      %v4276 = vlaneseq
      %v4277 = vshrl.u32 %v4276, 7
      %v4278 = vsub.s32 %v4275, %v4277
      %v4279 = vrot.slane %v4271, %v4278
      %v4281 = vunpack.c.l.s4 1934713408
      %v4282 = vunpack.c.0.s8 %v4281
      %v4283 = vlaneseq
      %v4284 = vshrl.u32 %v4283, 7
      %v4285 = vsub.s32 %v4282, %v4284
      %v4286 = vrot.slane %v4272, %v4285
      %v4287 = vcombine.low %v4262, %v4270
      %v4288 = vcombine.high %v4262, %v4270
      %v4290 = vunpack.c.l.s4 1934713408
      %v4291 = vunpack.c.0.s8 %v4290
      %v4292 = vlaneseq
      %v4293 = vshrl.u32 %v4292, 7
      %v4294 = vsub.s32 %v4291, %v4293
      %v4295 = vrot.slane %v4287, %v4294
      %v4297 = vunpack.c.l.s4 1934713408
      %v4298 = vunpack.c.0.s8 %v4297
      %v4299 = vlaneseq
      %v4300 = vshrl.u32 %v4299, 7
      %v4301 = vsub.s32 %v4298, %v4300
      %v4302 = vrot.slane %v4288, %v4301
      %v4303 = vcombine.low %v4279, %v4295
      %v4304 = vcombine.high %v4279, %v4295
      %v4305 = vcombine.low %v4286, %v4302
      %v4306 = vcombine.high %v4286, %v4302
      %v4307 = vcombine.low %v4075, %v4082
      %v4309 = vunpack.c.l.s4 1983009808
      %v4310 = vunpack.c.0.s8 %v4309
      %v4311 = vlaneseq
      %v4312 = vshrl.u32 %v4311, 7
      %v4313 = vsub.s32 %v4310, %v4312
      %v4314 = vrot.slane %v4307, %v4313
      %v4315 = vcombine.low %v4099, %v4100
      %v4317 = vunpack.c.l.s4 1983009808
      %v4318 = vunpack.c.0.s8 %v4317
      %v4319 = vlaneseq
      %v4320 = vshrl.u32 %v4319, 7
      %v4321 = vsub.s32 %v4318, %v4320
      %v4322 = vrot.slane %v4315, %v4321
      %v4323 = vcombine.low %v4091, %v4098
      %v4325 = vunpack.c.l.s4 1983009808
      %v4326 = vunpack.c.0.s8 %v4325
      %v4327 = vlaneseq
      %v4328 = vshrl.u32 %v4327, 7
      %v4329 = vsub.s32 %v4326, %v4328
      %v4330 = vrot.slane %v4323, %v4329
      %v4331 = vcombine.low %v4101, %v4102
      %v4333 = vunpack.c.l.s4 1983009808
      %v4334 = vunpack.c.0.s8 %v4333
      %v4335 = vlaneseq
      %v4336 = vshrl.u32 %v4335, 7
      %v4337 = vsub.s32 %v4334, %v4336
      %v4338 = vrot.slane %v4331, %v4337
      %v4339 = vcombine.low %v4314, %v4322
      %v4340 = vcombine.high %v4314, %v4322
      %v4342 = vunpack.c.l.s4 1934713408
      %v4343 = vunpack.c.0.s8 %v4342
      %v4344 = vlaneseq
      %v4345 = vshrl.u32 %v4344, 7
      %v4346 = vsub.s32 %v4343, %v4345
      %v4347 = vrot.slane %v4339, %v4346
      %v4349 = vunpack.c.l.s4 1934713408
      %v4350 = vunpack.c.0.s8 %v4349
      %v4351 = vlaneseq
      %v4352 = vshrl.u32 %v4351, 7
      %v4353 = vsub.s32 %v4350, %v4352
      %v4354 = vrot.slane %v4340, %v4353
      %v4355 = vcombine.low %v4330, %v4338
      %v4356 = vcombine.high %v4330, %v4338
      %v4358 = vunpack.c.l.s4 1934713408
      %v4359 = vunpack.c.0.s8 %v4358
      %v4360 = vlaneseq
      %v4361 = vshrl.u32 %v4360, 7
      %v4362 = vsub.s32 %v4359, %v4361
      %v4363 = vrot.slane %v4355, %v4362
      %v4365 = vunpack.c.l.s4 1934713408
      %v4366 = vunpack.c.0.s8 %v4365
      %v4367 = vlaneseq
      %v4368 = vshrl.u32 %v4367, 7
      %v4369 = vsub.s32 %v4366, %v4368
      %v4370 = vrot.slane %v4356, %v4369
      %v4371 = vcombine.low %v4347, %v4363
      %v4372 = vcombine.high %v4347, %v4363
      %v4373 = vcombine.low %v4354, %v4370
      %v4374 = vcombine.high %v4354, %v4370
      %v4375 = vcombine.low %v4143, %v4150
      %v4377 = vunpack.c.l.s4 1983009808
      %v4378 = vunpack.c.0.s8 %v4377
      %v4379 = vlaneseq
      %v4380 = vshrl.u32 %v4379, 7
      %v4381 = vsub.s32 %v4378, %v4380
      %v4382 = vrot.slane %v4375, %v4381
      %v4383 = vcombine.low %v4167, %v4168
      %v4385 = vunpack.c.l.s4 1983009808
      %v4386 = vunpack.c.0.s8 %v4385
      %v4387 = vlaneseq
      %v4388 = vshrl.u32 %v4387, 7
      %v4389 = vsub.s32 %v4386, %v4388
      %v4390 = vrot.slane %v4383, %v4389
      %v4391 = vcombine.low %v4159, %v4166
      %v4393 = vunpack.c.l.s4 1983009808
      %v4394 = vunpack.c.0.s8 %v4393
      %v4395 = vlaneseq
      %v4396 = vshrl.u32 %v4395, 7
      %v4397 = vsub.s32 %v4394, %v4396
      %v4398 = vrot.slane %v4391, %v4397
      %v4399 = vcombine.low %v4169, %v4170
      %v4401 = vunpack.c.l.s4 1983009808
      %v4402 = vunpack.c.0.s8 %v4401
      %v4403 = vlaneseq
      %v4404 = vshrl.u32 %v4403, 7
      %v4405 = vsub.s32 %v4402, %v4404
      %v4406 = vrot.slane %v4399, %v4405
      %v4407 = vcombine.low %v4382, %v4390
      %v4408 = vcombine.high %v4382, %v4390
      %v4410 = vunpack.c.l.s4 1934713408
      %v4411 = vunpack.c.0.s8 %v4410
      %v4412 = vlaneseq
      %v4413 = vshrl.u32 %v4412, 7
      %v4414 = vsub.s32 %v4411, %v4413
      %v4415 = vrot.slane %v4407, %v4414
      %v4417 = vunpack.c.l.s4 1934713408
      %v4418 = vunpack.c.0.s8 %v4417
      %v4419 = vlaneseq
      %v4420 = vshrl.u32 %v4419, 7
      %v4421 = vsub.s32 %v4418, %v4420
      %v4422 = vrot.slane %v4408, %v4421
      %v4423 = vcombine.low %v4398, %v4406
      %v4424 = vcombine.high %v4398, %v4406
      %v4426 = vunpack.c.l.s4 1934713408
      %v4427 = vunpack.c.0.s8 %v4426
      %v4428 = vlaneseq
      %v4429 = vshrl.u32 %v4428, 7
      %v4430 = vsub.s32 %v4427, %v4429
      %v4431 = vrot.slane %v4423, %v4430
      %v4433 = vunpack.c.l.s4 1934713408
      %v4434 = vunpack.c.0.s8 %v4433
      %v4435 = vlaneseq
      %v4436 = vshrl.u32 %v4435, 7
      %v4437 = vsub.s32 %v4434, %v4436
      %v4438 = vrot.slane %v4424, %v4437
      %v4439 = vcombine.low %v4415, %v4431
      %v4440 = vcombine.high %v4415, %v4431
      %v4441 = vcombine.low %v4422, %v4438
      %v4442 = vcombine.high %v4422, %v4438
      %v4443 = vcombine.low %v4211, %v4218
      %v4445 = vunpack.c.l.s4 1983009808
      %v4446 = vunpack.c.0.s8 %v4445
      %v4447 = vlaneseq
      %v4448 = vshrl.u32 %v4447, 7
      %v4449 = vsub.s32 %v4446, %v4448
      %v4450 = vrot.slane %v4443, %v4449
      %v4451 = vcombine.low %v4235, %v4236
      %v4453 = vunpack.c.l.s4 1983009808
      %v4454 = vunpack.c.0.s8 %v4453
      %v4455 = vlaneseq
      %v4456 = vshrl.u32 %v4455, 7
      %v4457 = vsub.s32 %v4454, %v4456
      %v4458 = vrot.slane %v4451, %v4457
      %v4459 = vcombine.low %v4227, %v4234
      %v4461 = vunpack.c.l.s4 1983009808
      %v4462 = vunpack.c.0.s8 %v4461
      %v4463 = vlaneseq
      %v4464 = vshrl.u32 %v4463, 7
      %v4465 = vsub.s32 %v4462, %v4464
      %v4466 = vrot.slane %v4459, %v4465
      %v4467 = vcombine.low %v4237, %v4238
      %v4469 = vunpack.c.l.s4 1983009808
      %v4470 = vunpack.c.0.s8 %v4469
      %v4471 = vlaneseq
      %v4472 = vshrl.u32 %v4471, 7
      %v4473 = vsub.s32 %v4470, %v4472
      %v4474 = vrot.slane %v4467, %v4473
      %v4475 = vcombine.low %v4450, %v4458
      %v4476 = vcombine.high %v4450, %v4458
      %v4478 = vunpack.c.l.s4 1934713408
      %v4479 = vunpack.c.0.s8 %v4478
      %v4480 = vlaneseq
      %v4481 = vshrl.u32 %v4480, 7
      %v4482 = vsub.s32 %v4479, %v4481
      %v4483 = vrot.slane %v4475, %v4482
      %v4485 = vunpack.c.l.s4 1934713408
      %v4486 = vunpack.c.0.s8 %v4485
      %v4487 = vlaneseq
      %v4488 = vshrl.u32 %v4487, 7
      %v4489 = vsub.s32 %v4486, %v4488
      %v4490 = vrot.slane %v4476, %v4489
      %v4491 = vcombine.low %v4466, %v4474
      %v4492 = vcombine.high %v4466, %v4474
      %v4494 = vunpack.c.l.s4 1934713408
      %v4495 = vunpack.c.0.s8 %v4494
      %v4496 = vlaneseq
      %v4497 = vshrl.u32 %v4496, 7
      %v4498 = vsub.s32 %v4495, %v4497
      %v4499 = vrot.slane %v4491, %v4498
      %v4501 = vunpack.c.l.s4 1934713408
      %v4502 = vunpack.c.0.s8 %v4501
      %v4503 = vlaneseq
      %v4504 = vshrl.u32 %v4503, 7
      %v4505 = vsub.s32 %v4502, %v4504
      %v4506 = vrot.slane %v4492, %v4505
      %v4507 = vcombine.low %v4483, %v4499
      %v4508 = vcombine.high %v4483, %v4499
      %v4509 = vcombine.low %v4490, %v4506
      %v4510 = vcombine.high %v4490, %v4506
      %4515 = vrot.lane.b32.xlu0 %v4304, 8
      %v4516 = vpop.permute.xlu0 %4515
      %4517 = vrot.lane.b32.xlu0 %v4372, 8
      %v4518 = vpop.permute.xlu0 %4517
      %4519 = vrot.lane.b32.xlu0 %v4440, 8
      %v4520 = vpop.permute.xlu0 %4519
      %4521 = vrot.lane.b32.xlu0 %v4508, 8
      %v4522 = vpop.permute.xlu0 %4521
      %4531 = vrot.lane.b32.xlu0 %v4305, 16
      %v4532 = vpop.permute.xlu0 %4531
      %4533 = vrot.lane.b32.xlu0 %v4373, 16
      %v4534 = vpop.permute.xlu0 %4533
      %4535 = vrot.lane.b32.xlu0 %v4441, 16
      %v4536 = vpop.permute.xlu0 %4535
      %4537 = vrot.lane.b32.xlu0 %v4509, 16
      %v4538 = vpop.permute.xlu0 %4537
      %4547 = vrot.lane.b32.xlu0 %v4306, 24
      %v4548 = vpop.permute.xlu0 %4547
      %4549 = vrot.lane.b32.xlu0 %v4374, 24
      %v4550 = vpop.permute.xlu0 %4549
      %4551 = vrot.lane.b32.xlu0 %v4442, 24
      %v4552 = vpop.permute.xlu0 %4551
      %4553 = vrot.lane.b32.xlu0 %v4510, 24
      %v4554 = vpop.permute.xlu0 %4553
      %v4559 = vsel %vm988, %v4303, %v4516
      %v4560 = vsel %vm988, %v4371, %v4518
      %v4561 = vsel %vm988, %v4439, %v4520
      %v4562 = vsel %vm988, %v4507, %v4522
      %v4563 = vsel %vm2452, %v4559, %v4532
      %v4564 = vsel %vm2452, %v4560, %v4534
      %v4565 = vsel %vm2452, %v4561, %v4536
      %v4566 = vsel %vm2452, %v4562, %v4538
      %v4567 = vsel %vm2457, %v4563, %v4548
      %v4568 = vsel %vm2457, %v4564, %v4550
      %v4569 = vsel %vm2457, %v4565, %v4552
      %v4570 = vsel %vm2457, %v4566, %v4554
      %s4571 = scalar_lea.vmem %s8, 16
      %v4572 = vld [vmem:[%s4571] sm:$0xf]
      %v4573 = vld [vmem:[%s4571 + $0x4] sm:$0xf]
      %v4574 = vld [vmem:[%s4571 + $0x8] sm:$0xf]
      %v4575 = vld [vmem:[%s4571 + $0xc] sm:$0xf]
      %v4576 = vpack.c.bf16 %v4568, %v4567
      %v4577 = vpack.c.bf16 %v4570, %v4569
      %v4582 = vunpack.c.l.b16 %v4572
      %v4583 = vunpack.c.l.b16 %v4573
      %v4584 = vunpack.c.l.b16 %v4574
      %v4585 = vunpack.c.l.b16 %v4575
      %v4586 = vpack.c.b16 %v4583, %v4582
      %v4587 = vpack.c.b16 %v4585, %v4584
      %v4591 = vsel %vm730, %v4576, 0
      %v4594 = vsel %vm730, %v4577, 0
      %4596 = vmatprep.subr.bf16.mxu0 0
      %4597 = vmatpush1.bf16.msra.mxu0 0
      %4598 = vmatprep.subr.bf16.mxu0 0
      %4599 = vmatpush1.bf16.msra.mxu0 0
      %4600 = vmatprep.subr.bf16.mxu0 0
      %4601 = vmatpush1.bf16.msra.mxu0 0
      %4602 = vmatprep.subr.bf16.mxu0 0
      %4603 = vmatpush1.bf16.msra.mxu0 0
      %4604 = vmatprep.subr.bf16.mxu0 0
      %4605 = vmatpush1.bf16.msra.mxu0 0
      %4606 = vmatprep.subr.bf16.mxu0 0
      %4607 = vmatpush1.bf16.msra.mxu0 0
      %4608 = vmatprep.subr.bf16.mxu0 0
      %4609 = vmatpush1.bf16.msra.mxu0 %v4587
      %4610 = vmatprep.subr.bf16.mxu0 0
      %4611 = vmatpush1.bf16.msra.mxu0 %v4586
      %4612 = vmatprep.subr.bf16.mxu0 0
      %4613 = vmatpush2.bf16.msra.mxu0 0
      %4614 = vmatprep.subr.bf16.mxu0 0
      %4615 = vmatpush2.bf16.msra.mxu0 0
      %4616 = vmatprep.subr.bf16.mxu0 0
      %4617 = vmatpush2.bf16.msra.mxu0 0
      %4618 = vmatprep.subr.bf16.mxu0 0
      %4619 = vmatpush2.bf16.msra.mxu0 0
      %4620 = vmatprep.subr.bf16.mxu0 0
      %4621 = vmatpush2.bf16.msra.mxu0 0
      %4622 = vmatprep.subr.bf16.mxu0 0
      %4623 = vmatpush2.bf16.msra.mxu0 0
      %4624 = vmatprep.subr.bf16.mxu0 0
      %4625 = vmatpush2.bf16.msra.mxu0 0
      %4626 = vmatprep.subr.bf16.mxu0 0
      %4627 = vmatpush2.bf16.msra.mxu0 0
      %4628 = vmatprep.mubr.bf16.mxu0 0
      %4629 = vmatmul.mubr.bf16.gmra.mxu0 %v4591
      %v4630 = vpop.f32.mrf.mxu0
      %v4631 = vadd.f32 0.0, %v4630
      %v4632 = vpop.f32.mrf.mxu0
      %v4633 = vpop.f32.mrf.mxu0
      %v4634 = vadd.f32 0.0, %v4633
      %v4635 = vpop.f32.mrf.mxu0
      %4636 = vmatprep.mubr.bf16.mxu0 0
      %4637 = vmatmul.mubr.bf16.gmra.mxu0 %v4594
      %v4638 = vpop.f32.mrf.mxu0
      %v4639 = vadd.f32 0.0, %v4638
      %v4640 = vpop.f32.mrf.mxu0
      %v4641 = vpop.f32.mrf.mxu0
      %v4642 = vadd.f32 0.0, %v4641
      %v4643 = vpop.f32.mrf.mxu0
      %4644 = vdwg.mxu0
      %v4645 = vadd.f32 %v2841, %v4631
      %v4646 = vadd.f32 %v2842, %v4634
      %v4647 = vadd.f32 %v2843, %v4639
      %v4648 = vadd.f32 %v2844, %v4642
      %s4649 = scalar_lea.vmem %s9, 1
      %v4650 = vld [vmem:[%s4649] sm:$0x1]
      %v4652 = vlaneseq
      %v4653 = vshrl.u32 %v4652, 7
      %v4654 = vsub.s32 0, %v4653
      %v4655 = vrot.slane %v4650, %v4654
      %v4657 = vadd.f32 %v4645, %v4655
      %v4658 = vadd.f32 %v4646, %v4655
      %v4659 = vadd.f32 %v4647, %v4655
      %v4660 = vadd.f32 %v4648, %v4655
      %s4661 = scalar_lea.vmem %s10, 1
      %v4662 = vld [vmem:[%s4661] sm:$0x1]
      %s4663 = scalar_lea.vmem %s11, 1
      %v4664 = vld [vmem:[%s4663] sm:$0x1]
      %v4665 = vsel %vm730, %v4657, 0.0
      %4666 = vadd.xlane.f32.xlu0 %v4665
      %v4667 = vpop.xlane.xlu0 %4666
      %v4668 = vsel %vm730, %v4658, 0.0
      %4669 = vadd.xlane.f32.xlu0 %v4668
      %v4670 = vpop.xlane.xlu0 %4669
      %v4671 = vsel %vm730, %v4659, 0.0
      %4672 = vadd.xlane.f32.xlu0 %v4671
      %v4673 = vpop.xlane.xlu0 %4672
      %v4674 = vsel %vm730, %v4660, 0.0
      %4675 = vadd.xlane.f32.xlu0 %v4674
      %v4676 = vpop.xlane.xlu0 %4675
      %v4677 = vmul.f32 %v4667, %v743
      %v4678 = vmul.f32 %v4670, %v743
      %v4679 = vmul.f32 %v4673, %v743
      %v4680 = vmul.f32 %v4676, %v743
      %v4681 = vsub.f32 %v4657, %v4677
      %v4682 = vsub.f32 %v4658, %v4678
      %v4683 = vsub.f32 %v4659, %v4679
      %v4684 = vsub.f32 %v4660, %v4680
      %v4685 = vmul.f32 %v4681, %v4681
      %v4686 = vmul.f32 %v4682, %v4682
      %v4687 = vmul.f32 %v4683, %v4683
      %v4688 = vmul.f32 %v4684, %v4684
      %v4689 = vsel %vm730, %v4685, 0.0
      %4690 = vadd.xlane.f32.xlu0 %v4689
      %v4691 = vpop.xlane.xlu0 %4690
      %v4692 = vsel %vm730, %v4686, 0.0
      %4693 = vadd.xlane.f32.xlu0 %v4692
      %v4694 = vpop.xlane.xlu0 %4693
      %v4695 = vsel %vm730, %v4687, 0.0
      %4696 = vadd.xlane.f32.xlu0 %v4695
      %v4697 = vpop.xlane.xlu0 %4696
      %v4698 = vsel %vm730, %v4688, 0.0
      %4699 = vadd.xlane.f32.xlu0 %v4698
      %v4700 = vpop.xlane.xlu0 %4699
      %v4701 = vmul.f32 %v4691, %v743
      %v4702 = vmul.f32 %v4694, %v743
      %v4703 = vmul.f32 %v4697, %v743
      %v4704 = vmul.f32 %v4700, %v743
      %v4705 = vadd.f32 %v4701, 1e-06
      %v4706 = vadd.f32 %v4702, 1e-06
      %v4707 = vadd.f32 %v4703, 1e-06
      %v4708 = vadd.f32 %v4704, 1e-06
      %v4709 = vrsqrt.pop %v4705
      %v4710 = vrsqrt.pop %v4706
      %v4711 = vrsqrt.pop %v4707
      %v4712 = vrsqrt.pop %v4708
      %v4713 = vmul.f32 %v4681, %v4709
      %v4714 = vmul.f32 %v4682, %v4710
      %v4715 = vmul.f32 %v4683, %v4711
      %v4716 = vmul.f32 %v4684, %v4712
      %v4718 = vlaneseq
      %v4719 = vshrl.u32 %v4718, 7
      %v4720 = vsub.s32 0, %v4719
      %v4721 = vrot.slane %v4662, %v4720
      %v4723 = vmul.f32 %v4713, %v4721
      %v4724 = vmul.f32 %v4714, %v4721
      %v4725 = vmul.f32 %v4715, %v4721
      %v4726 = vmul.f32 %v4716, %v4721
      %v4728 = vlaneseq
      %v4729 = vshrl.u32 %v4728, 7
      %v4730 = vsub.s32 0, %v4729
      %v4731 = vrot.slane %v4664, %v4730
      %v4733 = vadd.f32 %v4723, %v4731
      %v4734 = vadd.f32 %v4724, %v4731
      %v4735 = vadd.f32 %v4725, %v4731
      %v4736 = vadd.f32 %v4726, %v4731
      %s4737 = scalar_lea.vmem %s12, 16
      %v4738 = vld [vmem:[%s4737] sm:$0xf]
      %v4739 = vld [vmem:[%s4737 + $0x4] sm:$0xf]
      %v4740 = vld [vmem:[%s4737 + $0x8] sm:$0xf]
      %v4741 = vld [vmem:[%s4737 + $0xc] sm:$0xf]
      %v4742 = vpack.c.bf16 %v4734, %v4733
      %v4743 = vpack.c.bf16 %v4736, %v4735
      %s4744 = scalar_lea.vmem %s13, 1
      %v4745 = vld [vmem:[%s4744] sm:$0x1]
      %v4747 = vlaneseq
      %v4748 = vshrl.u32 %v4747, 7
      %v4749 = vsub.s32 0, %v4748
      %v4750 = vrot.slane %v4745, %v4749
      %v4756 = vunpack.c.l.b16 %v4738
      %v4757 = vunpack.c.l.b16 %v4739
      %v4758 = vunpack.c.l.b16 %v4740
      %v4759 = vunpack.c.l.b16 %v4741
      %v4760 = vpack.c.b16 %v4757, %v4756
      %v4761 = vpack.c.b16 %v4759, %v4758
      %v4765 = vsel %vm730, %v4742, 0
      %v4768 = vsel %vm730, %v4743, 0
      %4770 = vmatprep.subr.bf16.mxu0 0
      %4771 = vmatpush1.bf16.msra.mxu0 0
      %4772 = vmatprep.subr.bf16.mxu0 0
      %4773 = vmatpush1.bf16.msra.mxu0 0
      %4774 = vmatprep.subr.bf16.mxu0 0
      %4775 = vmatpush1.bf16.msra.mxu0 0
      %4776 = vmatprep.subr.bf16.mxu0 0
      %4777 = vmatpush1.bf16.msra.mxu0 0
      %4778 = vmatprep.subr.bf16.mxu0 0
      %4779 = vmatpush1.bf16.msra.mxu0 0
      %4780 = vmatprep.subr.bf16.mxu0 0
      %4781 = vmatpush1.bf16.msra.mxu0 0
      %4782 = vmatprep.subr.bf16.mxu0 0
      %4783 = vmatpush1.bf16.msra.mxu0 %v4761
      %4784 = vmatprep.subr.bf16.mxu0 0
      %4785 = vmatpush1.bf16.msra.mxu0 %v4760
      %4786 = vmatprep.subr.bf16.mxu0 0
      %4787 = vmatpush2.bf16.msra.mxu0 0
      %4788 = vmatprep.subr.bf16.mxu0 0
      %4789 = vmatpush2.bf16.msra.mxu0 0
      %4790 = vmatprep.subr.bf16.mxu0 0
      %4791 = vmatpush2.bf16.msra.mxu0 0
      %4792 = vmatprep.subr.bf16.mxu0 0
      %4793 = vmatpush2.bf16.msra.mxu0 0
      %4794 = vmatprep.subr.bf16.mxu0 0
      %4795 = vmatpush2.bf16.msra.mxu0 0
      %4796 = vmatprep.subr.bf16.mxu0 0
      %4797 = vmatpush2.bf16.msra.mxu0 0
      %4798 = vmatprep.subr.bf16.mxu0 0
      %4799 = vmatpush2.bf16.msra.mxu0 0
      %4800 = vmatprep.subr.bf16.mxu0 0
      %4801 = vmatpush2.bf16.msra.mxu0 0
      %4802 = vmatprep.mubr.bf16.mxu0 0
      %4803 = vmatmul.mubr.bf16.gmra.mxu0 %v4765
      %v4804 = vpop.f32.mrf.mxu0
      %v4805 = vadd.f32 %v4750, %v4804
      %v4806 = vpop.f32.mrf.mxu0
      %v4807 = vpop.f32.mrf.mxu0
      %v4808 = vadd.f32 %v4750, %v4807
      %v4809 = vpop.f32.mrf.mxu0
      %4810 = vmatprep.mubr.bf16.mxu0 0
      %4811 = vmatmul.mubr.bf16.gmra.mxu0 %v4768
      %v4812 = vpop.f32.mrf.mxu0
      %v4813 = vadd.f32 %v4750, %v4812
      %v4814 = vpop.f32.mrf.mxu0
      %v4815 = vpop.f32.mrf.mxu0
      %v4816 = vadd.f32 %v4750, %v4815
      %v4817 = vpop.f32.mrf.mxu0
      %4818 = vdwg.mxu0
      %v4819 = vmul.f32 %v4805, 0.5
      %v4820 = vmul.f32 %v4808, 0.5
      %v4821 = vmul.f32 %v4813, 0.5
      %v4822 = vmul.f32 %v4816, 0.5
      %v4823 = vmul.f32 %v4805, 0.044715
      %v4824 = vmul.f32 %v4808, 0.044715
      %v4825 = vmul.f32 %v4813, 0.044715
      %v4826 = vmul.f32 %v4816, 0.044715
      %v4827 = vmul.f32 %v4823, %v4805
      %v4828 = vmul.f32 %v4824, %v4808
      %v4829 = vmul.f32 %v4825, %v4813
      %v4830 = vmul.f32 %v4826, %v4816
      %v4831 = vmul.f32 %v4827, %v4805
      %v4832 = vmul.f32 %v4828, %v4808
      %v4833 = vmul.f32 %v4829, %v4813
      %v4834 = vmul.f32 %v4830, %v4816
      %v4835 = vadd.f32 %v4805, %v4831
      %v4836 = vadd.f32 %v4808, %v4832
      %v4837 = vadd.f32 %v4813, %v4833
      %v4838 = vadd.f32 %v4816, %v4834
      %v4839 = vmul.f32 %v4835, 0.7978846
      %v4840 = vmul.f32 %v4836, 0.7978846
      %v4841 = vmul.f32 %v4837, 0.7978846
      %v4842 = vmul.f32 %v4838, 0.7978846
      %v4843 = vtanh.pop %v4839
      %v4844 = vtanh.pop %v4840
      %v4845 = vtanh.pop %v4841
      %v4846 = vtanh.pop %v4842
      %v4847 = vadd.f32 %v4843, 1.0
      %v4848 = vadd.f32 %v4844, 1.0
      %v4849 = vadd.f32 %v4845, 1.0
      %v4850 = vadd.f32 %v4846, 1.0
      %v4851 = vmul.f32 %v4819, %v4847
      %v4852 = vmul.f32 %v4820, %v4848
      %v4853 = vmul.f32 %v4821, %v4849
      %v4854 = vmul.f32 %v4822, %v4850
      %s4855 = scalar_lea.vmem %s14, 32
      %v4856 = vld [vmem:[%s4855] sm:$0xf]
      %v4857 = vld [vmem:[%s4855 + $0x4] sm:$0xf]
      %v4858 = vld [vmem:[%s4855 + $0x8] sm:$0xf]
      %v4859 = vld [vmem:[%s4855 + $0xc] sm:$0xf]
      %v4860 = vld [vmem:[%s4855 + $0x10] sm:$0xf]
      %v4861 = vld [vmem:[%s4855 + $0x14] sm:$0xf]
      %v4862 = vld [vmem:[%s4855 + $0x18] sm:$0xf]
      %v4863 = vld [vmem:[%s4855 + $0x1c] sm:$0xf]
      %v4864 = vpack.c.bf16 %v4852, %v4851
      %v4865 = vpack.c.bf16 %v4854, %v4853
      %v4874 = vunpack.c.l.b16 %v4856
      %v4875 = vunpack.c.l.b16 %v4857
      %v4876 = vunpack.c.l.b16 %v4858
      %v4877 = vunpack.c.l.b16 %v4859
      %v4878 = vunpack.c.l.b16 %v4860
      %v4879 = vunpack.c.l.b16 %v4861
      %v4880 = vunpack.c.l.b16 %v4862
      %v4881 = vunpack.c.l.b16 %v4863
      %v4882 = vpack.c.b16 %v4875, %v4874
      %v4883 = vpack.c.b16 %v4877, %v4876
      %v4884 = vpack.c.b16 %v4879, %v4878
      %v4885 = vpack.c.b16 %v4881, %v4880
      %v4891 = vsel %vm2774, %v4864, 0
      %v4894 = vsel %vm2774, %v4865, 0
      %4896 = vmatprep.subr.bf16.mxu0 0
      %4897 = vmatpush1.bf16.msra.mxu0 0
      %4898 = vmatprep.subr.bf16.mxu0 0
      %4899 = vmatpush1.bf16.msra.mxu0 0
      %4900 = vmatprep.subr.bf16.mxu0 0
      %4901 = vmatpush1.bf16.msra.mxu0 0
      %4902 = vmatprep.subr.bf16.mxu0 0
      %4903 = vmatpush1.bf16.msra.mxu0 0
      %4904 = vmatprep.subr.bf16.mxu0 0
      %4905 = vmatpush1.bf16.msra.mxu0 %v4885
      %4906 = vmatprep.subr.bf16.mxu0 0
      %4907 = vmatpush1.bf16.msra.mxu0 %v4884
      %4908 = vmatprep.subr.bf16.mxu0 0
      %4909 = vmatpush1.bf16.msra.mxu0 %v4883
      %4910 = vmatprep.subr.bf16.mxu0 0
      %4911 = vmatpush1.bf16.msra.mxu0 %v4882
      %4912 = vmatprep.subr.bf16.mxu0 0
      %4913 = vmatpush2.bf16.msra.mxu0 0
      %4914 = vmatprep.subr.bf16.mxu0 0
      %4915 = vmatpush2.bf16.msra.mxu0 0
      %4916 = vmatprep.subr.bf16.mxu0 0
      %4917 = vmatpush2.bf16.msra.mxu0 0
      %4918 = vmatprep.subr.bf16.mxu0 0
      %4919 = vmatpush2.bf16.msra.mxu0 0
      %4920 = vmatprep.subr.bf16.mxu0 0
      %4921 = vmatpush2.bf16.msra.mxu0 0
      %4922 = vmatprep.subr.bf16.mxu0 0
      %4923 = vmatpush2.bf16.msra.mxu0 0
      %4924 = vmatprep.subr.bf16.mxu0 0
      %4925 = vmatpush2.bf16.msra.mxu0 0
      %4926 = vmatprep.subr.bf16.mxu0 0
      %4927 = vmatpush2.bf16.msra.mxu0 0
      %4928 = vmatprep.mubr.bf16.mxu0 0
      %4929 = vmatmul.mubr.bf16.gmra.mxu0 %v4891
      %v4930 = vpop.f32.mrf.mxu0
      %v4931 = vadd.f32 0.0, %v4930
      %v4932 = vpop.f32.mrf.mxu0
      %v4933 = vpop.f32.mrf.mxu0
      %v4934 = vpop.f32.mrf.mxu0
      %4935 = vmatprep.mubr.bf16.mxu0 0
      %4936 = vmatmul.mubr.bf16.gmra.mxu0 %v4894
      %v4937 = vpop.f32.mrf.mxu0
      %v4938 = vpop.f32.mrf.mxu0
      %v4939 = vpop.f32.mrf.mxu0
      %v4940 = vpop.f32.mrf.mxu0
      %4941 = vdwg.mxu0
      %v4942 = vadd.f32 %v4657, %v4931
      %s4943 = scalar_lea.vmem %s15, 1
      %v4944 = vld [vmem:[%s4943] sm:$0x1]
      %v4946 = vlaneseq
      %v4947 = vshrl.u32 %v4946, 7
      %v4948 = vsub.s32 0, %v4947
      %v4949 = vrot.slane %v4944, %v4948
      %v4951 = vadd.f32 %v4942, %v4949
      %v4952 = vld [vmem:[%s16] sm:$0x1]
      %v4953 = vld [vmem:[%s17] sm:$0x1]
      %vm4954 = vcmask 253952
      %v4955 = vsel %vm4954, %v4951, 0.0
      %4956 = vadd.xlane.f32.xlu0 %v4955
      %v4957 = vpop.xlane.xlu0 %4956
      %v4958 = vmul.f32 %v4957, %v743
      %v4959 = vsub.f32 %v4951, %v4958
      %v4960 = vmul.f32 %v4959, %v4959
      %v4961 = vsel %vm4954, %v4960, 0.0
      %4962 = vadd.xlane.f32.xlu0 %v4961
      %v4963 = vpop.xlane.xlu0 %4962
      %v4964 = vmul.f32 %v4963, %v743
      %v4965 = vadd.f32 %v4964, 1e-06
      %v4966 = vrsqrt.pop %v4965
      %v4967 = vmul.f32 %v4959, %v4966
      %v4968 = vmul.f32 %v4967, %v4952
      %v4969 = vadd.f32 %v4968, %v4953
      %v4970 = vld [vmem:[%s18] sm:$0xf]
      %v4971 = vld [vmem:[%s18 + $0x4] sm:$0xf]
      %v4972 = vld [vmem:[%s18 + $0x8] sm:$0xf]
      %v4973 = vld [vmem:[%s18 + $0xc] sm:$0xf]
      %v4974 = vpack.c.bf16 %v4969, %v4969
      %v4975 = vld [vmem:[%s19] sm:$0x1]
      %v4980 = vunpack.c.l.b16 %v4970
      %v4981 = vunpack.c.l.b16 %v4971
      %v4982 = vunpack.c.l.b16 %v4972
      %v4983 = vunpack.c.l.b16 %v4973
      %v4984 = vpack.c.b16 %v4981, %v4980
      %v4985 = vpack.c.b16 %v4983, %v4982
      %v4989 = vsel %vm730, %v4974, 0
      %4991 = vmatprep.subr.bf16.mxu0 0
      %4992 = vmatpush1.bf16.msra.mxu0 0
      %4993 = vmatprep.subr.bf16.mxu0 0
      %4994 = vmatpush1.bf16.msra.mxu0 0
      %4995 = vmatprep.subr.bf16.mxu0 0
      %4996 = vmatpush1.bf16.msra.mxu0 0
      %4997 = vmatprep.subr.bf16.mxu0 0
      %4998 = vmatpush1.bf16.msra.mxu0 0
      %4999 = vmatprep.subr.bf16.mxu0 0
      %5000 = vmatpush1.bf16.msra.mxu0 0
      %5001 = vmatprep.subr.bf16.mxu0 0
      %5002 = vmatpush1.bf16.msra.mxu0 0
      %5003 = vmatprep.subr.bf16.mxu0 0
      %5004 = vmatpush1.bf16.msra.mxu0 %v4985
      %5005 = vmatprep.subr.bf16.mxu0 0
      %5006 = vmatpush1.bf16.msra.mxu0 %v4984
      %5007 = vmatprep.subr.bf16.mxu0 0
      %5008 = vmatpush2.bf16.msra.mxu0 0
      %5009 = vmatprep.subr.bf16.mxu0 0
      %5010 = vmatpush2.bf16.msra.mxu0 0
      %5011 = vmatprep.subr.bf16.mxu0 0
      %5012 = vmatpush2.bf16.msra.mxu0 0
      %5013 = vmatprep.subr.bf16.mxu0 0
      %5014 = vmatpush2.bf16.msra.mxu0 0
      %5015 = vmatprep.subr.bf16.mxu0 0
      %5016 = vmatpush2.bf16.msra.mxu0 0
      %5017 = vmatprep.subr.bf16.mxu0 0
      %5018 = vmatpush2.bf16.msra.mxu0 0
      %5019 = vmatprep.subr.bf16.mxu0 0
      %5020 = vmatpush2.bf16.msra.mxu0 0
      %5021 = vmatprep.subr.bf16.mxu0 0
      %5022 = vmatpush2.bf16.msra.mxu0 0
      %5023 = vmatprep.mubr.bf16.mxu0 0
      %5024 = vmatmul.mubr.bf16.gmra.mxu0 %v4989
      %v5025 = vpop.f32.mrf.mxu0
      %v5026 = vadd.f32 %v4975, %v5025
      %v5027 = vpop.f32.mrf.mxu0
      %v5028 = vpop.f32.mrf.mxu0
      %v5029 = vpop.f32.mrf.mxu0
      %5030 = vdwg.mxu0
      %v5031 = vlaneseq
      %v5032 = vshrl.u32 %v5031, 7
      %v5033 = vsub.s32 0, %v5032
      %v5034 = vrot.slane %v5026, %v5033
      %5035 = vst [vmem:[%s627] sm:$0xff] %v5034
      %p5036 = scmp.lt.s32.totalorder %s31, 1
      %s5037 = scalar_select %p5036, %s31, 1
      %s5038 = smul.addr %s5037, 8
      %s5039 = scalar_lea.vmem %s20, %s5038
      // Predicated region
      $region101: #{vit_forward.1} parent=99 // pred_check
        %p5040 = pneg %p474
      $region102: #{vit_forward.1} parent=99 // pred_check_branch
        %5042 = sbr.rel (%p5040) target = $region104
      $region103: #{vit_forward.1} parent=99 // pred_region
        _
      $region104: #{vit_forward.1} parent=99 // pred_fallthru
        _
    $region100: #{vit_forward.1} parent=5 // pred_fallthru
      _
    %p5043 = scmp.le.s32.totalorder 2, %s26
    // Predicated region
    $region105: #{vit_forward.1} parent=5 // pred_check
      %p5044 = pneg %p5043
    $region106: #{vit_forward.1} parent=5 // pred_check_branch
      %5046 = sbr.rel (%p5044) target = $region108
    $region107: #{vit_forward.1} parent=5 // pred_region
      %s5047 = ssub.s32 %s26, 2
      // Predicated region
      $region109: #{vit_forward.1} parent=107 // pred_check
        %p5048 = pneg %p480
      $region110: #{vit_forward.1} parent=107 // pred_check_branch
        %5050 = sbr.rel (%p5048) target = $region112
      $region111: #{vit_forward.1} parent=107 // pred_region
        %p5051 = scmp.lt.s32.totalorder %s32, 1
        %s5052 = scalar_select %p5051, %s32, 1
        %s5053 = smul.addr %s5052, 8
        %s5054 = scalar_lea.vmem %s20, %s5053
      $region112: #{vit_forward.1} parent=107 // pred_fallthru
        _
    $region108: #{vit_forward.1} parent=5 // pred_fallthru
      _
  $region6: #{vit_forward.1} parent=0 // loop_footer
    %s30 = sadd.s32 1, %s26
  $region7: #{vit_forward.1} parent=0 // loop_footer_branch
    %25 = sbr.rel target = $region3
  $region8: #{vit_forward.1} parent=0 // loop_exit
    _

</llo_original>
